<compile_context>
chip_gen: v6e
topology: v6e:2x2x1
jax: 0.10.0
libtpu: 0.0.40
codegen_flags: <defaults>
</compile_context>

<pallas_src>
import functools

import jax
import jax.numpy as jnp
from jax.experimental import pallas as pl
from jax.experimental.pallas import tpu as pltpu


NEG_SLOPE = 0.01  # nn.LeakyReLU default
TILE_B = 256      # batch tile once batch is large enough to tile


def _leaky(x):
    return jnp.where(x > 0, x, NEG_SLOPE * x)


# ---------------------------------------------------------------------------
# Kernel
# ---------------------------------------------------------------------------
def inverse_model_kernel(
    x_ref,                      # (2, tile_b, dmax) bf16 : [state; next_state]
    w1_ref, b1_ref,             # (2, dmax, 1024) bf16 / (2, 1, 1024) f32
    w2_ref, b2_ref,             # (2, 1024, 512)  bf16 / (2, 1, 512)  f32
    w3_ref, b3_ref,             # (2, 512, 256)   bf16 / (2, 1, 256)  f32
    wc1a_ref, wc1b_ref, bc1_ref,  # (256,256) bf16 x2 / (1,256) f32
    wc2_ref, bc2_ref,           # (256, out) bf16 / (1, out) f32
    out_ref,                    # (tile_b, out) f32
):
    def glayer(h, w_ref, b_ref):
        # One batched matmul for BOTH branches (g = 2) -> hides MXU latency.
        y = jnp.einsum(
            "gbi,gio->gbo",
            h.astype(jnp.bfloat16),
            w_ref[...],
            preferred_element_type=jnp.float32,
        )
        return _leaky(y + b_ref[...])

    h = glayer(x_ref[...], w1_ref, b1_ref)   # (2, tb, 1024)
    h = glayer(h, w2_ref, b2_ref)            # (2, tb, 512)
    h = glayer(h, w3_ref, b3_ref)            # (2, tb, 256)

    # concat([x1, x2], dim=1) @ W_com1 == x1 @ W_com1[:256] + x2 @ W_com1[256:]
    x1 = h[0].astype(jnp.bfloat16)
    x2 = h[1].astype(jnp.bfloat16)
    z = jnp.dot(x1, wc1a_ref[...], preferred_element_type=jnp.float32)
    z = z + jnp.dot(x2, wc1b_ref[...], preferred_element_type=jnp.float32)
    z = _leaky(z + bc1_ref[...])

    logits = (
        jnp.dot(z.astype(jnp.bfloat16), wc2_ref[...],
                preferred_element_type=jnp.float32)
        + bc2_ref[...]
    )

    # numerically stable softmax over features; reciprocal goes to the EUP slot
    m = jnp.max(logits, axis=-1, keepdims=True)
    e = jnp.exp(logits - m)
    denom = jnp.sum(e, axis=-1, keepdims=True)
    out_ref[...] = e * pl.reciprocal(denom, approx=True)


# ---------------------------------------------------------------------------
# Parameter preparation (done ONCE, outside jit)
# ---------------------------------------------------------------------------
def init_linear(key, in_dim, out_dim):
    """Deterministic init ~ PyTorch Linear default (uniform +-1/sqrt(in))."""
    kw, kb = jax.random.split(key)
    bound = 1.0 / jnp.sqrt(jnp.float32(in_dim))
    w = jax.random.uniform(kw, (in_dim, out_dim), jnp.float32, -bound, bound)
    b = jax.random.uniform(kb, (1, out_dim), jnp.float32, -bound, bound)
    return w, b


def prepare_params(params, weight_dtype=jnp.bfloat16):
    """Cast weights to bf16, stack the two branches, pre-split com_fc1."""
    (w11, b11, w12, b12, w13, b13,
     w21, b21, w22, b22, w23, b23,
     wc1, bc1, wc2, bc2) = params

    d1, d2 = w11.shape[0], w21.shape[0]
    dmax = max(d1, d2)

    def pad_rows(w):
        return jnp.pad(w, ((0, dmax - w.shape[0]), (0, 0)))

    W1 = jnp.stack([pad_rows(w11), pad_rows(w21)]).astype(weight_dtype)
    B1 = jnp.stack([b11, b21]).astype(jnp.float32)
    W2 = jnp.stack([w12, w22]).astype(weight_dtype)
    B2 = jnp.stack([b12, b22]).astype(jnp.float32)
    W3 = jnp.stack([w13, w23]).astype(weight_dtype)
    B3 = jnp.stack([b13, b23]).astype(jnp.float32)
    Wc1a = wc1[:256, :].astype(weight_dtype)
    Wc1b = wc1[256:, :].astype(weight_dtype)
    Bc1 = bc1.astype(jnp.float32)
    Wc2 = wc2.astype(weight_dtype)
    Bc2 = bc2.astype(jnp.float32)
    return (W1, B1, W2, B2, W3, B3, Wc1a, Wc1b, Bc1, Wc2, Bc2)


# ---------------------------------------------------------------------------
# Forward wrapper
# ---------------------------------------------------------------------------
def _resident_spec(arr):
    """Full-array block whose index_map is constant -> fetched once, stays in VMEM."""
    if arr.ndim == 3:
        return pl.BlockSpec(arr.shape, lambda i: (0, 0, 0))
    return pl.BlockSpec(arr.shape, lambda i: (0, 0))


@jax.jit
def inverse_model_forward(state, next_state, prepared):
    (W1, B1, W2, B2, W3, B3, Wc1a, Wc1b, Bc1, Wc2, Bc2) = prepared

    B = state.shape[0]
    dmax = W1.shape[1]
    out_dim = Wc2.shape[1]

    # Pad both inputs to the common (zero-padded) in_dim and stack the branches.
    s = jnp.pad(state, ((0, 0), (0, dmax - state.shape[1])))
    ns = jnp.pad(next_state, ((0, 0), (0, dmax - next_state.shape[1])))
    x = jnp.stack([s, ns]).astype(jnp.bfloat16)          # (2, B, dmax)

    # Batch tiling: weights stay resident across tiles; batch axis is parallel.
    if B > TILE_B:
        tile_b = TILE_B
        b_pad = pl.cdiv(B, TILE_B) * TILE_B
        x = jnp.pad(x, ((0, 0), (0, b_pad - B), (0, 0)))
    else:
        tile_b = B
        b_pad = B
    grid = (b_pad // tile_b,)

    weights = (W1, B1, W2, B2, W3, B3, Wc1a, Wc1b, Bc1, Wc2, Bc2)

    in_specs = [pl.BlockSpec((2, tile_b, dmax), lambda i: (0, i, 0))]
    in_specs += [_resident_spec(w) for w in weights]

    out = pl.pallas_call(
        inverse_model_kernel,
        out_shape=jax.ShapeDtypeStruct((b_pad, out_dim), jnp.float32),
        grid_spec=pltpu.PrefetchScalarGridSpec(
            num_scalar_prefetch=0,
            grid=grid,
            in_specs=in_specs,
            out_specs=pl.BlockSpec((tile_b, out_dim), lambda i: (i, 0)),
        ),
        compiler_params=pltpu.CompilerParams(
            dimension_semantics=("parallel",),
            vmem_limit_bytes=32 << 20,
        ),
    )(x, *weights)

    return out[:B]


# ---------------------------------------------------------------------------
# Pure-JAX f32 reference (mirrors the PyTorch module)
# ---------------------------------------------------------------------------
def inverse_model_reference(state, next_state, params):
    (w11, b11, w12, b12, w13, b13,
     w21, b21, w22, b22, w23, b23,
     wc1, bc1, wc2, bc2) = params
    x1 = _leaky(state @ w11 + b11)
    x1 = _leaky(x1 @ w12 + b12)
    x1 = _leaky(x1 @ w13 + b13)
    x2 = _leaky(next_state @ w21 + b21)
    x2 = _leaky(x2 @ w22 + b22)
    x2 = _leaky(x2 @ w23 + b23)
    h = _leaky(jnp.concatenate([x1, x2], axis=1) @ wc1 + bc1)
    logits = h @ wc2 + bc2
    return jax.nn.softmax(logits, axis=1)


if __name__ == "__main__":
    # Small shapes consistent with the module: input_dim = (32, 32), output_dim = 8.
    B, D1, D2, OUT = 2, 32, 32, 8

    key = jax.random.PRNGKey(0)
    keys = jax.random.split(key, 10)

    w11, b11 = init_linear(keys[0], D1, 1024)
    w12, b12 = init_linear(keys[1], 1024, 512)
    w13, b13 = init_linear(keys[2], 512, 256)
    w21, b21 = init_linear(keys[3], D2, 1024)
    w22, b22 = init_linear(keys[4], 1024, 512)
    w23, b23 = init_linear(keys[5], 512, 256)
    wc1, bc1 = init_linear(keys[6], 512, 256)
    wc2, bc2 = init_linear(keys[7], 256, OUT)

    params = (w11, b11, w12, b12, w13, b13,
              w21, b21, w22, b22, w23, b23,
              wc1, bc1, wc2, bc2)

    prepared = prepare_params(params)   # one-time bf16 cast / stack / split

    state = jax.random.normal(keys[8], (B, D1), jnp.float32)
    next_state = jax.random.normal(keys[9], (B, D2), jnp.float32)

    out = inverse_model_forward(state, next_state, prepared)
    out = jax.block_until_ready(out)

    # Sanity: shape, softmax rows sum to 1, close to f32 reference.
    assert out.shape == (B, OUT)
    assert jnp.allclose(jnp.sum(out, axis=1), 1.0, atol=1e-2)
    ref = inverse_model_reference(state, next_state, params)
    assert jnp.allclose(out, ref, atol=5e-2), float(jnp.max(jnp.abs(out - ref)))

    print("KERNEL_OK")
</pallas_src>

<mosaic_0001>
module attributes {stable_mosaic.version = 11 : i64} {
  func.func @inverse_model_kernel(%arg0: i32, %arg1: memref<2x2x32xbf16, #tpu.memory_space<vmem>>, %arg2: memref<2x32x1024xbf16, #tpu.memory_space<vmem>>, %arg3: memref<2x1x1024xf32, #tpu.memory_space<vmem>>, %arg4: memref<2x1024x512xbf16, #tpu.memory_space<vmem>>, %arg5: memref<2x1x512xf32, #tpu.memory_space<vmem>>, %arg6: memref<2x512x256xbf16, #tpu.memory_space<vmem>>, %arg7: memref<2x1x256xf32, #tpu.memory_space<vmem>>, %arg8: memref<256x256xbf16, #tpu.memory_space<vmem>>, %arg9: memref<256x256xbf16, #tpu.memory_space<vmem>>, %arg10: memref<1x256xf32, #tpu.memory_space<vmem>>, %arg11: memref<256x8xbf16, #tpu.memory_space<vmem>>, %arg12: memref<1x8xf32, #tpu.memory_space<vmem>>, %arg13: memref<2x8xf32, #tpu.memory_space<vmem>>) attributes {dimension_semantics = [#tpu.dimension_semantics<parallel>], iteration_bounds = array<i64: 1>, scalar_prefetch = 0 : i64, scratch_operands = 0 : i64, tpu.core_type = #tpu.core_type<tc>, window_params = [{transform_indices = @transform_0, window_bounds = array<i64: 2, 2, 32>}, {pipeline_mode = #tpu.pipeline_mode<synchronous>, transform_indices = @transform_1, window_bounds = array<i64: 2, 32, 1024>}, {pipeline_mode = #tpu.pipeline_mode<synchronous>, transform_indices = @transform_2, window_bounds = array<i64: 2, 1, 1024>}, {pipeline_mode = #tpu.pipeline_mode<synchronous>, transform_indices = @transform_3, window_bounds = array<i64: 2, 1024, 512>}, {pipeline_mode = #tpu.pipeline_mode<synchronous>, transform_indices = @transform_4, window_bounds = array<i64: 2, 1, 512>}, {pipeline_mode = #tpu.pipeline_mode<synchronous>, transform_indices = @transform_5, window_bounds = array<i64: 2, 512, 256>}, {pipeline_mode = #tpu.pipeline_mode<synchronous>, transform_indices = @transform_6, window_bounds = array<i64: 2, 1, 256>}, {pipeline_mode = #tpu.pipeline_mode<synchronous>, transform_indices = @transform_7, window_bounds = array<i64: 256, 256>}, {pipeline_mode = #tpu.pipeline_mode<synchronous>, transform_indices = @transform_8, window_bounds = array<i64: 256, 256>}, {pipeline_mode = #tpu.pipeline_mode<synchronous>, transform_indices = @transform_9, window_bounds = array<i64: 1, 256>}, {pipeline_mode = #tpu.pipeline_mode<synchronous>, transform_indices = @transform_10, window_bounds = array<i64: 256, 8>}, {pipeline_mode = #tpu.pipeline_mode<synchronous>, transform_indices = @transform_11, window_bounds = array<i64: 1, 8>}, {transform_indices = @transform_12, window_bounds = array<i64: 2, 8>}]} {
    %c0 = arith.constant 0 : index
    %c0_0 = arith.constant 0 : index
    %c0_1 = arith.constant 0 : index
    %0 = vector.load %arg1[%c0, %c0_0, %c0_1] : memref<2x2x32xbf16, #tpu.memory_space<vmem>>, vector<2x2x32xbf16>
    %c0_2 = arith.constant 0 : index
    %c0_3 = arith.constant 0 : index
    %c0_4 = arith.constant 0 : index
    %1 = vector.load %arg2[%c0_2, %c0_3, %c0_4] : memref<2x32x1024xbf16, #tpu.memory_space<vmem>>, vector<2x32x1024xbf16>
    "tpu.trace_start"() <{level = 10 : i32, message = "gbi,gio->gbo"}> : () -> ()
    %cst = arith.constant dense<0.000000e+00> : vector<2x2x1024xf32>
    %2 = tpu.matmul %0, %1, %cst {dimension_numbers = #tpu.dot_dimension_numbers<[2], [1], [1], [2], [0, 0, 0, 1, 1, 2], [0], [0]>} : vector<2x2x32xbf16>, vector<2x32x1024xbf16>, vector<2x2x1024xf32> -> vector<2x2x1024xf32>
    "tpu.trace_stop"() : () -> ()
    %c0_5 = arith.constant 0 : index
    %c0_6 = arith.constant 0 : index
    %c0_7 = arith.constant 0 : index
    %3 = vector.load %arg3[%c0_5, %c0_6, %c0_7] : memref<2x1x1024xf32, #tpu.memory_space<vmem>>, vector<2x1x1024xf32>
    %4 = vector.broadcast %3 : vector<2x1x1024xf32> to vector<2x2x1024xf32>
    %5 = arith.addf %2, %4 : vector<2x2x1024xf32>
    %cst_8 = arith.constant 0.000000e+00 : f32
    %6 = vector.broadcast %cst_8 : f32 to vector<2x2x1024xf32>
    %7 = arith.cmpf ogt, %5, %6 : vector<2x2x1024xf32>
    %cst_9 = arith.constant 0.00999999977 : f32
    %8 = vector.broadcast %cst_9 : f32 to vector<2x2x1024xf32>
    %9 = arith.mulf %8, %5 : vector<2x2x1024xf32>
    %10 = arith.select %7, %5, %9 : vector<2x2x1024xi1>, vector<2x2x1024xf32>
    %11 = arith.truncf %10 : vector<2x2x1024xf32> to vector<2x2x1024xbf16>
    %c0_10 = arith.constant 0 : index
    %c0_11 = arith.constant 0 : index
    %c0_12 = arith.constant 0 : index
    %12 = vector.load %arg4[%c0_10, %c0_11, %c0_12] : memref<2x1024x512xbf16, #tpu.memory_space<vmem>>, vector<2x1024x512xbf16>
    "tpu.trace_start"() <{level = 10 : i32, message = "gbi,gio->gbo"}> : () -> ()
    %cst_13 = arith.constant dense<0.000000e+00> : vector<2x2x512xf32>
    %13 = tpu.matmul %11, %12, %cst_13 {dimension_numbers = #tpu.dot_dimension_numbers<[2], [1], [1], [2], [0, 0, 0, 1, 1, 2], [0], [0]>} : vector<2x2x1024xbf16>, vector<2x1024x512xbf16>, vector<2x2x512xf32> -> vector<2x2x512xf32>
    "tpu.trace_stop"() : () -> ()
    %c0_14 = arith.constant 0 : index
    %c0_15 = arith.constant 0 : index
    %c0_16 = arith.constant 0 : index
    %14 = vector.load %arg5[%c0_14, %c0_15, %c0_16] : memref<2x1x512xf32, #tpu.memory_space<vmem>>, vector<2x1x512xf32>
    %15 = vector.broadcast %14 : vector<2x1x512xf32> to vector<2x2x512xf32>
    %16 = arith.addf %13, %15 : vector<2x2x512xf32>
    %cst_17 = arith.constant 0.000000e+00 : f32
    %17 = vector.broadcast %cst_17 : f32 to vector<2x2x512xf32>
    %18 = arith.cmpf ogt, %16, %17 : vector<2x2x512xf32>
    %cst_18 = arith.constant 0.00999999977 : f32
    %19 = vector.broadcast %cst_18 : f32 to vector<2x2x512xf32>
    %20 = arith.mulf %19, %16 : vector<2x2x512xf32>
    %21 = arith.select %18, %16, %20 : vector<2x2x512xi1>, vector<2x2x512xf32>
    %22 = arith.truncf %21 : vector<2x2x512xf32> to vector<2x2x512xbf16>
    %c0_19 = arith.constant 0 : index
    %c0_20 = arith.constant 0 : index
    %c0_21 = arith.constant 0 : index
    %23 = vector.load %arg6[%c0_19, %c0_20, %c0_21] : memref<2x512x256xbf16, #tpu.memory_space<vmem>>, vector<2x512x256xbf16>
    "tpu.trace_start"() <{level = 10 : i32, message = "gbi,gio->gbo"}> : () -> ()
    %cst_22 = arith.constant dense<0.000000e+00> : vector<2x2x256xf32>
    %24 = tpu.matmul %22, %23, %cst_22 {dimension_numbers = #tpu.dot_dimension_numbers<[2], [1], [1], [2], [0, 0, 0, 1, 1, 2], [0], [0]>} : vector<2x2x512xbf16>, vector<2x512x256xbf16>, vector<2x2x256xf32> -> vector<2x2x256xf32>
    "tpu.trace_stop"() : () -> ()
    %c0_23 = arith.constant 0 : index
    %c0_24 = arith.constant 0 : index
    %c0_25 = arith.constant 0 : index
    %25 = vector.load %arg7[%c0_23, %c0_24, %c0_25] : memref<2x1x256xf32, #tpu.memory_space<vmem>>, vector<2x1x256xf32>
    %26 = vector.broadcast %25 : vector<2x1x256xf32> to vector<2x2x256xf32>
    %27 = arith.addf %24, %26 : vector<2x2x256xf32>
    %cst_26 = arith.constant 0.000000e+00 : f32
    %28 = vector.broadcast %cst_26 : f32 to vector<2x2x256xf32>
    %29 = arith.cmpf ogt, %27, %28 : vector<2x2x256xf32>
    %cst_27 = arith.constant 0.00999999977 : f32
    %30 = vector.broadcast %cst_27 : f32 to vector<2x2x256xf32>
    %31 = arith.mulf %30, %27 : vector<2x2x256xf32>
    %32 = arith.select %29, %27, %31 : vector<2x2x256xi1>, vector<2x2x256xf32>
    %33 = vector.extract_strided_slice %32 {offsets = [0, 0, 0], sizes = [1, 2, 256], strides = [1, 1, 1]} : vector<2x2x256xf32> to vector<1x2x256xf32>
    %34 = vector.shape_cast %33 : vector<1x2x256xf32> to vector<2x256xf32>
    %35 = arith.truncf %34 : vector<2x256xf32> to vector<2x256xbf16>
    %36 = vector.extract_strided_slice %32 {offsets = [1, 0, 0], sizes = [1, 2, 256], strides = [1, 1, 1]} : vector<2x2x256xf32> to vector<1x2x256xf32>
    %37 = vector.shape_cast %36 : vector<1x2x256xf32> to vector<2x256xf32>
    %38 = arith.truncf %37 : vector<2x256xf32> to vector<2x256xbf16>
    %c0_28 = arith.constant 0 : index
    %c0_29 = arith.constant 0 : index
    %39 = vector.load %arg8[%c0_28, %c0_29] : memref<256x256xbf16, #tpu.memory_space<vmem>>, vector<256x256xbf16>
    %cst_30 = arith.constant dense<0.000000e+00> : vector<2x256xf32>
    %40 = tpu.matmul %35, %39, %cst_30 {dimension_numbers = #tpu.dot_dimension_numbers<[1], [0], [0], [1], [0, 0, 1, 1], [], []>} : vector<2x256xbf16>, vector<256x256xbf16>, vector<2x256xf32> -> vector<2x256xf32>
    %c0_31 = arith.constant 0 : index
    %c0_32 = arith.constant 0 : index
    %41 = vector.load %arg9[%c0_31, %c0_32] : memref<256x256xbf16, #tpu.memory_space<vmem>>, vector<256x256xbf16>
    %cst_33 = arith.constant dense<0.000000e+00> : vector<2x256xf32>
    %42 = tpu.matmul %38, %41, %cst_33 {dimension_numbers = #tpu.dot_dimension_numbers<[1], [0], [0], [1], [0, 0, 1, 1], [], []>} : vector<2x256xbf16>, vector<256x256xbf16>, vector<2x256xf32> -> vector<2x256xf32>
    %43 = arith.addf %40, %42 : vector<2x256xf32>
    %c0_34 = arith.constant 0 : index
    %c0_35 = arith.constant 0 : index
    %44 = vector.load %arg10[%c0_34, %c0_35] : memref<1x256xf32, #tpu.memory_space<vmem>>, vector<1x256xf32>
    %45 = vector.broadcast %44 : vector<1x256xf32> to vector<2x256xf32>
    %46 = arith.addf %43, %45 : vector<2x256xf32>
    %cst_36 = arith.constant 0.000000e+00 : f32
    %47 = vector.broadcast %cst_36 : f32 to vector<2x256xf32>
    %48 = arith.cmpf ogt, %46, %47 : vector<2x256xf32>
    %cst_37 = arith.constant 0.00999999977 : f32
    %49 = vector.broadcast %cst_37 : f32 to vector<2x256xf32>
    %50 = arith.mulf %49, %46 : vector<2x256xf32>
    %51 = arith.select %48, %46, %50 : vector<2x256xi1>, vector<2x256xf32>
    %52 = arith.truncf %51 : vector<2x256xf32> to vector<2x256xbf16>
    %c0_38 = arith.constant 0 : index
    %c0_39 = arith.constant 0 : index
    %53 = vector.load %arg11[%c0_38, %c0_39] : memref<256x8xbf16, #tpu.memory_space<vmem>>, vector<256x8xbf16>
    %cst_40 = arith.constant dense<0.000000e+00> : vector<2x8xf32>
    %54 = tpu.matmul %52, %53, %cst_40 {dimension_numbers = #tpu.dot_dimension_numbers<[1], [0], [0], [1], [0, 0, 1, 1], [], []>} : vector<2x256xbf16>, vector<256x8xbf16>, vector<2x8xf32> -> vector<2x8xf32>
    %c0_41 = arith.constant 0 : index
    %c0_42 = arith.constant 0 : index
    %55 = vector.load %arg12[%c0_41, %c0_42] : memref<1x8xf32, #tpu.memory_space<vmem>>, vector<1x8xf32>
    %56 = vector.broadcast %55 : vector<1x8xf32> to vector<2x8xf32>
    %57 = arith.addf %54, %56 : vector<2x8xf32>
    %cst_43 = arith.constant dense<0xFF800000> : vector<2xf32>
    %58 = vector.multi_reduction <maximumf>, %57, %cst_43 [1] : vector<2x8xf32> to vector<2xf32>
    %59 = vector.shape_cast %58 : vector<2xf32> to vector<2x1xf32>
    %60 = vector.broadcast %59 : vector<2x1xf32> to vector<2x8xf32>
    %61 = arith.subf %57, %60 : vector<2x8xf32>
    %62 = math.exp %61 : vector<2x8xf32>
    %cst_44 = arith.constant dense<0.000000e+00> : vector<2xf32>
    %63 = vector.multi_reduction <add>, %62, %cst_44 [1] : vector<2x8xf32> to vector<2xf32>
    %64 = vector.shape_cast %63 : vector<2xf32> to vector<2x1xf32>
    %65 = tpu.reciprocal %64 {approx = true} : vector<2x1xf32> -> vector<2x1xf32>
    %66 = vector.broadcast %65 : vector<2x1xf32> to vector<2x8xf32>
    %67 = arith.mulf %62, %66 : vector<2x8xf32>
    %c0_45 = arith.constant 0 : index
    %c0_46 = arith.constant 0 : index
    %68 = vector.load %arg13[%c0_45, %c0_46] : memref<2x8xf32, #tpu.memory_space<vmem>>, vector<2x8xf32>
    tpu.vector_store %arg13[%c0_45, %c0_46], %67 {strides = array<i32>} : memref<2x8xf32, #tpu.memory_space<vmem>>, vector<2x8xf32>,
    return
  }
  func.func @transform_0(%arg0: i32) -> (i32, i32, i32) {
    %c0_i32 = arith.constant 0 : i32
    %c0_i32_0 = arith.constant 0 : i32
    %c0_i32_1 = arith.constant 0 : i32
    return %c0_i32, %arg0, %c0_i32_0 : i32, i32, i32
  }
  func.func @transform_1(%arg0: i32) -> (i32, i32, i32) {
    %c0_i32 = arith.constant 0 : i32
    %c0_i32_0 = arith.constant 0 : i32
    %c0_i32_1 = arith.constant 0 : i32
    %c0_i32_2 = arith.constant 0 : i32
    return %c0_i32, %c0_i32_0, %c0_i32_1 : i32, i32, i32
  }
  func.func @transform_2(%arg0: i32) -> (i32, i32, i32) {
    %c0_i32 = arith.constant 0 : i32
    %c0_i32_0 = arith.constant 0 : i32
    %c0_i32_1 = arith.constant 0 : i32
    %c0_i32_2 = arith.constant 0 : i32
    return %c0_i32, %c0_i32_0, %c0_i32_1 : i32, i32, i32
  }
  func.func @transform_3(%arg0: i32) -> (i32, i32, i32) {
    %c0_i32 = arith.constant 0 : i32
    %c0_i32_0 = arith.constant 0 : i32
    %c0_i32_1 = arith.constant 0 : i32
    %c0_i32_2 = arith.constant 0 : i32
    return %c0_i32, %c0_i32_0, %c0_i32_1 : i32, i32, i32
  }
  func.func @transform_4(%arg0: i32) -> (i32, i32, i32) {
    %c0_i32 = arith.constant 0 : i32
    %c0_i32_0 = arith.constant 0 : i32
    %c0_i32_1 = arith.constant 0 : i32
    %c0_i32_2 = arith.constant 0 : i32
    return %c0_i32, %c0_i32_0, %c0_i32_1 : i32, i32, i32
  }
  func.func @transform_5(%arg0: i32) -> (i32, i32, i32) {
    %c0_i32 = arith.constant 0 : i32
    %c0_i32_0 = arith.constant 0 : i32
    %c0_i32_1 = arith.constant 0 : i32
    %c0_i32_2 = arith.constant 0 : i32
    return %c0_i32, %c0_i32_0, %c0_i32_1 : i32, i32, i32
  }
  func.func @transform_6(%arg0: i32) -> (i32, i32, i32) {
    %c0_i32 = arith.constant 0 : i32
    %c0_i32_0 = arith.constant 0 : i32
    %c0_i32_1 = arith.constant 0 : i32
    %c0_i32_2 = arith.constant 0 : i32
    return %c0_i32, %c0_i32_0, %c0_i32_1 : i32, i32, i32
  }
  func.func @transform_7(%arg0: i32) -> (i32, i32) {
    %c0_i32 = arith.constant 0 : i32
    %c0_i32_0 = arith.constant 0 : i32
    %c0_i32_1 = arith.constant 0 : i32
    return %c0_i32, %c0_i32_0 : i32, i32
  }
  func.func @transform_8(%arg0: i32) -> (i32, i32) {
    %c0_i32 = arith.constant 0 : i32
    %c0_i32_0 = arith.constant 0 : i32
    %c0_i32_1 = arith.constant 0 : i32
    return %c0_i32, %c0_i32_0 : i32, i32
  }
  func.func @transform_9(%arg0: i32) -> (i32, i32) {
    %c0_i32 = arith.constant 0 : i32
    %c0_i32_0 = arith.constant 0 : i32
    %c0_i32_1 = arith.constant 0 : i32
    return %c0_i32, %c0_i32_0 : i32, i32
  }
  func.func @transform_10(%arg0: i32) -> (i32, i32) {
    %c0_i32 = arith.constant 0 : i32
    %c0_i32_0 = arith.constant 0 : i32
    %c0_i32_1 = arith.constant 0 : i32
    return %c0_i32, %c0_i32_0 : i32, i32
  }
  func.func @transform_11(%arg0: i32) -> (i32, i32) {
    %c0_i32 = arith.constant 0 : i32
    %c0_i32_0 = arith.constant 0 : i32
    %c0_i32_1 = arith.constant 0 : i32
    return %c0_i32, %c0_i32_0 : i32, i32
  }
  func.func @transform_12(%arg0: i32) -> (i32, i32) {
    %c0_i32 = arith.constant 0 : i32
    %c0_i32_0 = arith.constant 0 : i32
    return %arg0, %c0_i32 : i32, i32
  }
}

</mosaic_0001>

<llo_original>
// kernel: inverse_model_forward.1
$region0: #{inverse_model_forward.1}
  #allocation0 [shape = 'u32[]', space=smem, size = 0x4, offset = 0x4, fixed_abs, tag = 'smem constant byte address 0x4 - core index']
  #allocation1 [shape = 'u32[144,128]{1,0:T(1,128)}', space=vmem, size = 0x12000, scoped, tag = 'internal scratch']
  %s0 = inlined_call_operand.vmem [shape: bf16[2,2,32], index: 0, kind: input, shape index: {}]
  %s1 = inlined_call_operand.hbm [shape: bf16[2,32,1024], index: 1, kind: input, shape index: {}]
  %s2 = inlined_call_operand.hbm [shape: f32[2,1,1024], index: 2, kind: input, shape index: {}]
  %s3 = inlined_call_operand.hbm [shape: bf16[2,1024,512], index: 3, kind: input, shape index: {}]
  %s4 = inlined_call_operand.hbm [shape: f32[2,1,512], index: 4, kind: input, shape index: {}]
  %s5 = inlined_call_operand.hbm [shape: bf16[2,512,256], index: 5, kind: input, shape index: {}]
  %s6 = inlined_call_operand.hbm [shape: f32[2,1,256], index: 6, kind: input, shape index: {}]
  %s7 = inlined_call_operand.hbm [shape: bf16[256,256], index: 7, kind: input, shape index: {}]
  %s8 = inlined_call_operand.hbm [shape: bf16[256,256], index: 8, kind: input, shape index: {}]
  %s9 = inlined_call_operand.hbm [shape: f32[1,256], index: 9, kind: input, shape index: {}]
  %s10 = inlined_call_operand.vmem [shape: bf16[256,8], index: 10, kind: input, shape index: {}]
  %s11 = inlined_call_operand.hbm [shape: f32[1,8], index: 11, kind: input, shape index: {}]
  %s12 = inlined_call_operand.hbm [shape: f32[2,8], index: 12, kind: output, shape index: {}]
  %s13 = sld [smem:[#allocation0]]
  $region98: #{inverse_model_forward.1} parent=0
    _
  %s15 = ssub.s32 1, %s13
  %s16 = scalar_select 0, %s15, %s13
  $region1: #{inverse_model_forward.1} parent=0
    #allocation2 [shape = 'u8[131072]{0}', space=vmem, size = 0x20000, scoped, tag = 'input window, operand 1, single buffered']
    #allocation3 [shape = 's32[1]{0}', space=sflag, size = 0x4, scoped, tag = 'scoped memory for inverse_model_forward.1']
    #allocation4 [shape = 's32[1]{0}', space=sflag, size = 0x4, scoped, tag = 'scoped memory for inverse_model_forward.1']
    #allocation5 [shape = 'u8[8192]{0}', space=vmem, size = 0x2000, scoped, tag = 'input window, operand 2, single buffered']
    #allocation6 [shape = 's32[1]{0}', space=sflag, size = 0x4, scoped, tag = 'scoped memory for inverse_model_forward.1']
    #allocation7 [shape = 'u8[2097152]{0}', space=vmem, size = 0x200000, scoped, tag = 'input window, operand 3, single buffered']
    #allocation8 [shape = 'u8[4096]{0}', space=vmem, size = 0x1000, scoped, tag = 'input window, operand 4, single buffered']
    #allocation9 [shape = 's32[1]{0}', space=sflag, size = 0x4, scoped, tag = 'scoped memory for inverse_model_forward.1']
    #allocation10 [shape = 'u8[524288]{0}', space=vmem, size = 0x80000, scoped, tag = 'input window, operand 5, single buffered']
    #allocation11 [shape = 'u8[2048]{0}', space=vmem, size = 0x800, scoped, tag = 'input window, operand 6, single buffered']
    #allocation12 [shape = 's32[1]{0}', space=sflag, size = 0x4, scoped, tag = 'scoped memory for inverse_model_forward.1']
    #allocation13 [shape = 'u8[131072]{0}', space=vmem, size = 0x20000, scoped, tag = 'input window, operand 7, single buffered']
    #allocation14 [shape = 'u8[131072]{0}', space=vmem, size = 0x20000, scoped, tag = 'input window, operand 8, single buffered']
    #allocation15 [shape = 's32[1]{0}', space=sflag, size = 0x4, scoped, tag = 'scoped memory for inverse_model_forward.1']
    #allocation16 [shape = 'u8[1024]{0}', space=vmem, size = 0x400, scoped, tag = 'input window, operand 9, single buffered']
    #allocation17 [shape = 'u8[512]{0}', space=vmem, size = 0x400, scoped, tag = 'input window, operand 11, single buffered']
    #allocation18 [shape = 's32[1]{0}', space=sflag, size = 0x4, scoped, tag = 'scoped memory for inverse_model_forward.1']
    #allocation19 [shape = 'u8[1024]{0}', space=vmem, size = 0x400, scoped, tag = 'output window, operand 0, single buffered']
    %17 = vsyncpa [#allocation3], 0
    %18 = vsyncpa [#allocation6], 0
    %19 = vsyncpa [#allocation9], 0
    %20 = vsyncpa [#allocation12], 0
    %21 = vsyncpa [#allocation15], 0
    %22 = vsyncpa [#allocation18], 0
    %23 = vsyncpa [#allocation4], 0
    // Predicated region
    $region2: #{inverse_model_forward.1} parent=1 // pred_check
      _
    $region3: #{inverse_model_forward.1} parent=1 // pred_check_branch
      %25 = sbr.rel (0) target = $region5
    $region4: #{inverse_model_forward.1} parent=1 // pred_region
      _
    $region5: #{inverse_model_forward.1} parent=1 // pred_fallthru
      _
    // Predicated region
    $region6: #{inverse_model_forward.1} parent=1 // pred_check
      _
    $region7: #{inverse_model_forward.1} parent=1 // pred_check_branch
      %27 = sbr.rel (0) target = $region9
    $region8: #{inverse_model_forward.1} parent=1 // pred_region
      %s29 = ssub.s32 4096, 4096
      %30 = vsyncadd [#allocation3], %s29
      %s31 = sshll.u32 [#allocation2], 4
      %s32 = int_to_ptr.vmem [resolvable:$true] %s31
      %37 = dma.hbm_to_vmem [thread:$0]  %s1, 4096, %s32, [#allocation3], 512, 512, 32
    $region9: #{inverse_model_forward.1} parent=1 // pred_fallthru
      _
    // Predicated region
    $region10: #{inverse_model_forward.1} parent=1 // pred_check
      _
    $region11: #{inverse_model_forward.1} parent=1 // pred_check_branch
      %39 = sbr.rel (0) target = $region13
    $region12: #{inverse_model_forward.1} parent=1 // pred_region
      %s41 = ssub.s32 256, 256
      %42 = vsyncadd [#allocation6], %s41
      %s43 = sshll.u32 [#allocation5], 4
      %s44 = int_to_ptr.vmem [resolvable:$true] %s43
      %49 = dma.hbm_to_vmem [thread:$0]  %s2, 256, %s44, [#allocation6], 128, 128, 8
    $region13: #{inverse_model_forward.1} parent=1 // pred_fallthru
      _
    // Predicated region
    $region14: #{inverse_model_forward.1} parent=1 // pred_check
      _
    $region15: #{inverse_model_forward.1} parent=1 // pred_check_branch
      %51 = sbr.rel (0) target = $region17
    $region16: #{inverse_model_forward.1} parent=1 // pred_region
      %s53 = ssub.s32 65536, 65536
      %54 = vsyncadd [#allocation6], %s53
      %s55 = sshll.u32 [#allocation7], 4
      %s56 = int_to_ptr.vmem [resolvable:$true] %s55
      %61 = dma.hbm_to_vmem [thread:$0]  %s3, 65536, %s56, [#allocation6], 256, 256, 16
    $region17: #{inverse_model_forward.1} parent=1 // pred_fallthru
      _
    // Predicated region
    $region18: #{inverse_model_forward.1} parent=1 // pred_check
      _
    $region19: #{inverse_model_forward.1} parent=1 // pred_check_branch
      %63 = sbr.rel (0) target = $region21
    $region20: #{inverse_model_forward.1} parent=1 // pred_region
      %s65 = ssub.s32 128, 128
      %66 = vsyncadd [#allocation9], %s65
      %s67 = sshll.u32 [#allocation8], 4
      %s68 = int_to_ptr.vmem [resolvable:$true] %s67
      %73 = dma.hbm_to_vmem [thread:$0]  %s4, 128, %s68, [#allocation9], 64, 64, 4
    $region21: #{inverse_model_forward.1} parent=1 // pred_fallthru
      _
    // Predicated region
    $region22: #{inverse_model_forward.1} parent=1 // pred_check
      _
    $region23: #{inverse_model_forward.1} parent=1 // pred_check_branch
      %75 = sbr.rel (0) target = $region25
    $region24: #{inverse_model_forward.1} parent=1 // pred_region
      %s77 = ssub.s32 16384, 16384
      %78 = vsyncadd [#allocation9], %s77
      %s79 = sshll.u32 [#allocation10], 4
      %s80 = int_to_ptr.vmem [resolvable:$true] %s79
      %85 = dma.hbm_to_vmem [thread:$0]  %s5, 16384, %s80, [#allocation9], 128, 128, 8
    $region25: #{inverse_model_forward.1} parent=1 // pred_fallthru
      _
    // Predicated region
    $region26: #{inverse_model_forward.1} parent=1 // pred_check
      _
    $region27: #{inverse_model_forward.1} parent=1 // pred_check_branch
      %87 = sbr.rel (0) target = $region29
    $region28: #{inverse_model_forward.1} parent=1 // pred_region
      %s89 = ssub.s32 64, 64
      %90 = vsyncadd [#allocation12], %s89
      %s91 = sshll.u32 [#allocation11], 4
      %s92 = int_to_ptr.vmem [resolvable:$true] %s91
      %97 = dma.hbm_to_vmem [thread:$0]  %s6, 64, %s92, [#allocation12], 32, 32, 2
    $region29: #{inverse_model_forward.1} parent=1 // pred_fallthru
      _
    // Predicated region
    $region30: #{inverse_model_forward.1} parent=1 // pred_check
      _
    $region31: #{inverse_model_forward.1} parent=1 // pred_check_branch
      %99 = sbr.rel (0) target = $region33
    $region32: #{inverse_model_forward.1} parent=1 // pred_region
      %s101 = ssub.s32 4096, 4096
      %102 = vsyncadd [#allocation12], %s101
      %s103 = sshll.u32 [#allocation13], 4
      %s104 = int_to_ptr.vmem [resolvable:$true] %s103
      %109 = dma.hbm_to_vmem [thread:$0]  %s7, 4096, %s104, [#allocation12], 128, 128, 8
    $region33: #{inverse_model_forward.1} parent=1 // pred_fallthru
      _
    // Predicated region
    $region34: #{inverse_model_forward.1} parent=1 // pred_check
      _
    $region35: #{inverse_model_forward.1} parent=1 // pred_check_branch
      %111 = sbr.rel (0) target = $region37
    $region36: #{inverse_model_forward.1} parent=1 // pred_region
      %s113 = ssub.s32 4096, 4096
      %114 = vsyncadd [#allocation15], %s113
      %s115 = sshll.u32 [#allocation14], 4
      %s116 = int_to_ptr.vmem [resolvable:$true] %s115
      %121 = dma.hbm_to_vmem [thread:$0]  %s8, 4096, %s116, [#allocation15], 128, 128, 8
    $region37: #{inverse_model_forward.1} parent=1 // pred_fallthru
      _
    // Predicated region
    $region38: #{inverse_model_forward.1} parent=1 // pred_check
      _
    $region39: #{inverse_model_forward.1} parent=1 // pred_check_branch
      %123 = sbr.rel (0) target = $region41
    $region40: #{inverse_model_forward.1} parent=1 // pred_region
      %s125 = ssub.s32 32, 32
      %126 = vsyncadd [#allocation15], %s125
      %s128 = sshll.u32 [#allocation16], 4
      %s129 = int_to_ptr.vmem [resolvable:$true] %s128
      %131 = dma.hbm_to_vmem [thread:$0]  %s9, 32, %s129, [#allocation15]
    $region41: #{inverse_model_forward.1} parent=1 // pred_fallthru
      _
    // Predicated region
    $region42: #{inverse_model_forward.1} parent=1 // pred_check
      _
    $region43: #{inverse_model_forward.1} parent=1 // pred_check_branch
      %133 = sbr.rel (0) target = $region45
    $region44: #{inverse_model_forward.1} parent=1 // pred_region
      _
    $region45: #{inverse_model_forward.1} parent=1 // pred_fallthru
      _
    // Predicated region
    $region46: #{inverse_model_forward.1} parent=1 // pred_check
      _
    $region47: #{inverse_model_forward.1} parent=1 // pred_check_branch
      %135 = sbr.rel (0) target = $region49
    $region48: #{inverse_model_forward.1} parent=1 // pred_region
      %s137 = ssub.s32 16, 16
      %138 = vsyncadd [#allocation18], %s137
      %s140 = sshll.u32 [#allocation17], 4
      %s141 = int_to_ptr.vmem [resolvable:$true] %s140
      %143 = dma.hbm_to_vmem [thread:$0]  %s11, 16, %s141, [#allocation18]
    $region49: #{inverse_model_forward.1} parent=1 // pred_fallthru
      _
    // Predicated region
    $region50: #{inverse_model_forward.1} parent=1 // pred_check
      _
    $region51: #{inverse_model_forward.1} parent=1 // pred_check_branch
      %145 = sbr.rel (0) target = $region53
    $region52: #{inverse_model_forward.1} parent=1 // pred_region
      %146 = dma.done [#allocation3], 4096
    $region53: #{inverse_model_forward.1} parent=1 // pred_fallthru
      _
    // Predicated region
    $region54: #{inverse_model_forward.1} parent=1 // pred_check
      _
    $region55: #{inverse_model_forward.1} parent=1 // pred_check_branch
      %148 = sbr.rel (0) target = $region57
    $region56: #{inverse_model_forward.1} parent=1 // pred_region
      %149 = dma.done [#allocation6], 256
    $region57: #{inverse_model_forward.1} parent=1 // pred_fallthru
      _
    // Predicated region
    $region58: #{inverse_model_forward.1} parent=1 // pred_check
      _
    $region59: #{inverse_model_forward.1} parent=1 // pred_check_branch
      %151 = sbr.rel (0) target = $region61
    $region60: #{inverse_model_forward.1} parent=1 // pred_region
      %152 = dma.done [#allocation6], 65536
    $region61: #{inverse_model_forward.1} parent=1 // pred_fallthru
      _
    // Predicated region
    $region62: #{inverse_model_forward.1} parent=1 // pred_check
      _
    $region63: #{inverse_model_forward.1} parent=1 // pred_check_branch
      %154 = sbr.rel (0) target = $region65
    $region64: #{inverse_model_forward.1} parent=1 // pred_region
      %155 = dma.done [#allocation9], 128
    $region65: #{inverse_model_forward.1} parent=1 // pred_fallthru
      _
    // Predicated region
    $region66: #{inverse_model_forward.1} parent=1 // pred_check
      _
    $region67: #{inverse_model_forward.1} parent=1 // pred_check_branch
      %157 = sbr.rel (0) target = $region69
    $region68: #{inverse_model_forward.1} parent=1 // pred_region
      %158 = dma.done [#allocation9], 16384
    $region69: #{inverse_model_forward.1} parent=1 // pred_fallthru
      _
    // Predicated region
    $region70: #{inverse_model_forward.1} parent=1 // pred_check
      _
    $region71: #{inverse_model_forward.1} parent=1 // pred_check_branch
      %160 = sbr.rel (0) target = $region73
    $region72: #{inverse_model_forward.1} parent=1 // pred_region
      %161 = dma.done [#allocation12], 64
    $region73: #{inverse_model_forward.1} parent=1 // pred_fallthru
      _
    // Predicated region
    $region74: #{inverse_model_forward.1} parent=1 // pred_check
      _
    $region75: #{inverse_model_forward.1} parent=1 // pred_check_branch
      %163 = sbr.rel (0) target = $region77
    $region76: #{inverse_model_forward.1} parent=1 // pred_region
      %164 = dma.done [#allocation12], 4096
    $region77: #{inverse_model_forward.1} parent=1 // pred_fallthru
      _
    // Predicated region
    $region78: #{inverse_model_forward.1} parent=1 // pred_check
      _
    $region79: #{inverse_model_forward.1} parent=1 // pred_check_branch
      %166 = sbr.rel (0) target = $region81
    $region80: #{inverse_model_forward.1} parent=1 // pred_region
      %167 = dma.done [#allocation15], 4096
    $region81: #{inverse_model_forward.1} parent=1 // pred_fallthru
      _
    // Predicated region
    $region82: #{inverse_model_forward.1} parent=1 // pred_check
      _
    $region83: #{inverse_model_forward.1} parent=1 // pred_check_branch
      %169 = sbr.rel (0) target = $region85
    $region84: #{inverse_model_forward.1} parent=1 // pred_region
      %170 = dma.done [#allocation15], 32
    $region85: #{inverse_model_forward.1} parent=1 // pred_fallthru
      _
    // Predicated region
    $region86: #{inverse_model_forward.1} parent=1 // pred_check
      _
    $region87: #{inverse_model_forward.1} parent=1 // pred_check_branch
      %172 = sbr.rel (0) target = $region89
    $region88: #{inverse_model_forward.1} parent=1 // pred_region
      %173 = dma.done [#allocation18], 16
    $region89: #{inverse_model_forward.1} parent=1 // pred_fallthru
      _
    %v175 = vld [vmem:[%s0] sm:$0x1]
    %v176 = vld [vmem:[%s0 + $0x1] sm:$0x1]
    %v177 = vld [vmem:[#allocation2] sm:$0xff]
    %v178 = vld [vmem:[#allocation2 + $0x8] sm:$0xff]
    %v179 = vld [vmem:[#allocation2 + $0x10] sm:$0xff]
    %v180 = vld [vmem:[#allocation2 + $0x18] sm:$0xff]
    %v181 = vld [vmem:[#allocation2 + $0x20] sm:$0xff]
    %v182 = vld [vmem:[#allocation2 + $0x28] sm:$0xff]
    %v183 = vld [vmem:[#allocation2 + $0x30] sm:$0xff]
    %v184 = vld [vmem:[#allocation2 + $0x38] sm:$0xff]
    %v185 = vld [vmem:[#allocation2 + $0x40] sm:$0xff]
    %v186 = vld [vmem:[#allocation2 + $0x48] sm:$0xff]
    %v187 = vld [vmem:[#allocation2 + $0x50] sm:$0xff]
    %v188 = vld [vmem:[#allocation2 + $0x58] sm:$0xff]
    %v189 = vld [vmem:[#allocation2 + $0x60] sm:$0xff]
    %v190 = vld [vmem:[#allocation2 + $0x68] sm:$0xff]
    %v191 = vld [vmem:[#allocation2 + $0x70] sm:$0xff]
    %v192 = vld [vmem:[#allocation2 + $0x78] sm:$0xff]
    %v193 = vld [vmem:[#allocation2 + $0x80] sm:$0xff]
    %v194 = vld [vmem:[#allocation2 + $0x88] sm:$0xff]
    %v195 = vld [vmem:[#allocation2 + $0x90] sm:$0xff]
    %v196 = vld [vmem:[#allocation2 + $0x98] sm:$0xff]
    %v197 = vld [vmem:[#allocation2 + $0xa0] sm:$0xff]
    %v198 = vld [vmem:[#allocation2 + $0xa8] sm:$0xff]
    %v199 = vld [vmem:[#allocation2 + $0xb0] sm:$0xff]
    %v200 = vld [vmem:[#allocation2 + $0xb8] sm:$0xff]
    %v201 = vld [vmem:[#allocation2 + $0xc0] sm:$0xff]
    %v202 = vld [vmem:[#allocation2 + $0xc8] sm:$0xff]
    %v203 = vld [vmem:[#allocation2 + $0xd0] sm:$0xff]
    %v204 = vld [vmem:[#allocation2 + $0xd8] sm:$0xff]
    %v205 = vld [vmem:[#allocation2 + $0xe0] sm:$0xff]
    %v206 = vld [vmem:[#allocation2 + $0xe8] sm:$0xff]
    %v207 = vld [vmem:[#allocation2 + $0xf0] sm:$0xff]
    %v208 = vld [vmem:[#allocation2 + $0xf8] sm:$0xff]
    %v209 = vld [vmem:[#allocation5] sm:$0xff]
    %v210 = vld [vmem:[#allocation5 + $0x8] sm:$0xff]
    %v213 = vlaneseq
    %v214 = vshrl.u32 %v213, 7
    %v215 = vsub.s32 0, %v214
    %v216 = vrot.slane %v209, %v215
    %v217 = vlaneseq
    %v218 = vshrl.u32 %v217, 7
    %v219 = vsub.s32 1, %v218
    %v220 = vrot.slane %v209, %v219
    %v221 = vlaneseq
    %v222 = vshrl.u32 %v221, 7
    %v223 = vsub.s32 2, %v222
    %v224 = vrot.slane %v209, %v223
    %v225 = vlaneseq
    %v226 = vshrl.u32 %v225, 7
    %v227 = vsub.s32 3, %v226
    %v228 = vrot.slane %v209, %v227
    %v229 = vlaneseq
    %v230 = vshrl.u32 %v229, 7
    %v231 = vsub.s32 4, %v230
    %v232 = vrot.slane %v209, %v231
    %v233 = vlaneseq
    %v234 = vshrl.u32 %v233, 7
    %v235 = vsub.s32 5, %v234
    %v236 = vrot.slane %v209, %v235
    %v237 = vlaneseq
    %v238 = vshrl.u32 %v237, 7
    %v239 = vsub.s32 6, %v238
    %v240 = vrot.slane %v209, %v239
    %v241 = vlaneseq
    %v242 = vshrl.u32 %v241, 7
    %v243 = vsub.s32 7, %v242
    %v244 = vrot.slane %v209, %v243
    %v245 = vlaneseq
    %v246 = vshrl.u32 %v245, 7
    %v247 = vsub.s32 0, %v246
    %v248 = vrot.slane %v210, %v247
    %v249 = vlaneseq
    %v250 = vshrl.u32 %v249, 7
    %v251 = vsub.s32 1, %v250
    %v252 = vrot.slane %v210, %v251
    %v253 = vlaneseq
    %v254 = vshrl.u32 %v253, 7
    %v255 = vsub.s32 2, %v254
    %v256 = vrot.slane %v210, %v255
    %v257 = vlaneseq
    %v258 = vshrl.u32 %v257, 7
    %v259 = vsub.s32 3, %v258
    %v260 = vrot.slane %v210, %v259
    %v261 = vlaneseq
    %v262 = vshrl.u32 %v261, 7
    %v263 = vsub.s32 4, %v262
    %v264 = vrot.slane %v210, %v263
    %v265 = vlaneseq
    %v266 = vshrl.u32 %v265, 7
    %v267 = vsub.s32 5, %v266
    %v268 = vrot.slane %v210, %v267
    %v269 = vlaneseq
    %v270 = vshrl.u32 %v269, 7
    %v271 = vsub.s32 6, %v270
    %v272 = vrot.slane %v210, %v271
    %v273 = vlaneseq
    %v274 = vshrl.u32 %v273, 7
    %v275 = vsub.s32 7, %v274
    %v276 = vrot.slane %v210, %v275
    %v309 = vunpack.c.l.b16 %v177
    %v310 = vunpack.c.h.b16 %v177
    %v311 = vunpack.c.l.b16 %v178
    %v312 = vunpack.c.h.b16 %v178
    %v313 = vunpack.c.l.b16 %v179
    %v314 = vunpack.c.h.b16 %v179
    %v315 = vunpack.c.l.b16 %v180
    %v316 = vunpack.c.h.b16 %v180
    %v317 = vunpack.c.l.b16 %v181
    %v318 = vunpack.c.h.b16 %v181
    %v319 = vunpack.c.l.b16 %v182
    %v320 = vunpack.c.h.b16 %v182
    %v321 = vunpack.c.l.b16 %v183
    %v322 = vunpack.c.h.b16 %v183
    %v323 = vunpack.c.l.b16 %v184
    %v324 = vunpack.c.h.b16 %v184
    %v325 = vunpack.c.l.b16 %v185
    %v326 = vunpack.c.h.b16 %v185
    %v327 = vunpack.c.l.b16 %v186
    %v328 = vunpack.c.h.b16 %v186
    %v329 = vunpack.c.l.b16 %v187
    %v330 = vunpack.c.h.b16 %v187
    %v331 = vunpack.c.l.b16 %v188
    %v332 = vunpack.c.h.b16 %v188
    %v333 = vunpack.c.l.b16 %v189
    %v334 = vunpack.c.h.b16 %v189
    %v335 = vunpack.c.l.b16 %v190
    %v336 = vunpack.c.h.b16 %v190
    %v337 = vunpack.c.l.b16 %v191
    %v338 = vunpack.c.h.b16 %v191
    %v339 = vunpack.c.l.b16 %v192
    %v340 = vunpack.c.h.b16 %v192
    %v341 = vpack.c.b16 %v317, %v309
    %v342 = vpack.c.b16 %v318, %v310
    %v343 = vpack.c.b16 %v319, %v311
    %v344 = vpack.c.b16 %v320, %v312
    %v345 = vpack.c.b16 %v321, %v313
    %v346 = vpack.c.b16 %v322, %v314
    %v347 = vpack.c.b16 %v323, %v315
    %v348 = vpack.c.b16 %v324, %v316
    %v349 = vpack.c.b16 %v333, %v325
    %v350 = vpack.c.b16 %v334, %v326
    %v351 = vpack.c.b16 %v335, %v327
    %v352 = vpack.c.b16 %v336, %v328
    %v353 = vpack.c.b16 %v337, %v329
    %v354 = vpack.c.b16 %v338, %v330
    %v355 = vpack.c.b16 %v339, %v331
    %v356 = vpack.c.b16 %v340, %v332
    %vm373 = vcmask 261120
    %v375 = vsel %vm373, %v175, 0
    %377 = vmatprep.subr.bf16.mxu0 0
    %378 = vmatpush1.bf16.msra.mxu0 0
    %379 = vmatprep.subr.bf16.mxu0 0
    %380 = vmatpush1.bf16.msra.mxu0 0
    %381 = vmatprep.subr.bf16.mxu0 0
    %382 = vmatpush1.bf16.msra.mxu0 0
    %383 = vmatprep.subr.bf16.mxu0 0
    %384 = vmatpush1.bf16.msra.mxu0 0
    %385 = vmatprep.subr.bf16.mxu0 0
    %386 = vmatpush1.bf16.msra.mxu0 0
    %387 = vmatprep.subr.bf16.mxu0 0
    %388 = vmatpush1.bf16.msra.mxu0 0
    %389 = vmatprep.subr.bf16.mxu0 %v350
    %390 = vmatpush1.bf16.msra.mxu0 %v349
    %391 = vmatprep.subr.bf16.mxu0 %v342
    %392 = vmatpush1.bf16.msra.mxu0 %v341
    %393 = vmatprep.subr.bf16.mxu0 0
    %394 = vmatpush2.bf16.msra.mxu0 0
    %395 = vmatprep.subr.bf16.mxu0 0
    %396 = vmatpush2.bf16.msra.mxu0 0
    %397 = vmatprep.subr.bf16.mxu0 0
    %398 = vmatpush2.bf16.msra.mxu0 0
    %399 = vmatprep.subr.bf16.mxu0 0
    %400 = vmatpush2.bf16.msra.mxu0 0
    %401 = vmatprep.subr.bf16.mxu0 0
    %402 = vmatpush2.bf16.msra.mxu0 0
    %403 = vmatprep.subr.bf16.mxu0 0
    %404 = vmatpush2.bf16.msra.mxu0 0
    %405 = vmatprep.subr.bf16.mxu0 0
    %406 = vmatpush2.bf16.msra.mxu0 0
    %407 = vmatprep.subr.bf16.mxu0 0
    %408 = vmatpush2.bf16.msra.mxu0 0
    %409 = vmatprep.mubr.bf16.mxu0 0
    %410 = vmatmul.mubr.bf16.gmra.mxu0 %v375
    %v411 = vpop.f32.mrf.mxu0
    %v412 = vadd.f32 %v216, %v411
    %v413 = vpop.f32.mrf.mxu0
    %v414 = vadd.f32 %v220, %v413
    %v415 = vpop.f32.mrf.mxu0
    %v416 = vpop.f32.mrf.mxu0
    %417 = vdwg.mxu0
    %418 = vmatprep.subr.bf16.mxu0 0
    %419 = vmatpush1.bf16.msra.mxu0 0
    %420 = vmatprep.subr.bf16.mxu0 0
    %421 = vmatpush1.bf16.msra.mxu0 0
    %422 = vmatprep.subr.bf16.mxu0 0
    %423 = vmatpush1.bf16.msra.mxu0 0
    %424 = vmatprep.subr.bf16.mxu0 0
    %425 = vmatpush1.bf16.msra.mxu0 0
    %426 = vmatprep.subr.bf16.mxu0 0
    %427 = vmatpush1.bf16.msra.mxu0 0
    %428 = vmatprep.subr.bf16.mxu0 0
    %429 = vmatpush1.bf16.msra.mxu0 0
    %430 = vmatprep.subr.bf16.mxu0 %v352
    %431 = vmatpush1.bf16.msra.mxu0 %v351
    %432 = vmatprep.subr.bf16.mxu0 %v344
    %433 = vmatpush1.bf16.msra.mxu0 %v343
    %434 = vmatprep.subr.bf16.mxu0 0
    %435 = vmatpush2.bf16.msra.mxu0 0
    %436 = vmatprep.subr.bf16.mxu0 0
    %437 = vmatpush2.bf16.msra.mxu0 0
    %438 = vmatprep.subr.bf16.mxu0 0
    %439 = vmatpush2.bf16.msra.mxu0 0
    %440 = vmatprep.subr.bf16.mxu0 0
    %441 = vmatpush2.bf16.msra.mxu0 0
    %442 = vmatprep.subr.bf16.mxu0 0
    %443 = vmatpush2.bf16.msra.mxu0 0
    %444 = vmatprep.subr.bf16.mxu0 0
    %445 = vmatpush2.bf16.msra.mxu0 0
    %446 = vmatprep.subr.bf16.mxu0 0
    %447 = vmatpush2.bf16.msra.mxu0 0
    %448 = vmatprep.subr.bf16.mxu0 0
    %449 = vmatpush2.bf16.msra.mxu0 0
    %450 = vmatprep.mubr.bf16.mxu0 0
    %451 = vmatmul.mubr.bf16.gmra.mxu0 %v375
    %v452 = vpop.f32.mrf.mxu0
    %v453 = vadd.f32 %v224, %v452
    %v454 = vpop.f32.mrf.mxu0
    %v455 = vadd.f32 %v228, %v454
    %v456 = vpop.f32.mrf.mxu0
    %v457 = vpop.f32.mrf.mxu0
    %458 = vdwg.mxu0
    %459 = vmatprep.subr.bf16.mxu0 0
    %460 = vmatpush1.bf16.msra.mxu0 0
    %461 = vmatprep.subr.bf16.mxu0 0
    %462 = vmatpush1.bf16.msra.mxu0 0
    %463 = vmatprep.subr.bf16.mxu0 0
    %464 = vmatpush1.bf16.msra.mxu0 0
    %465 = vmatprep.subr.bf16.mxu0 0
    %466 = vmatpush1.bf16.msra.mxu0 0
    %467 = vmatprep.subr.bf16.mxu0 0
    %468 = vmatpush1.bf16.msra.mxu0 0
    %469 = vmatprep.subr.bf16.mxu0 0
    %470 = vmatpush1.bf16.msra.mxu0 0
    %471 = vmatprep.subr.bf16.mxu0 %v354
    %472 = vmatpush1.bf16.msra.mxu0 %v353
    %473 = vmatprep.subr.bf16.mxu0 %v346
    %474 = vmatpush1.bf16.msra.mxu0 %v345
    %475 = vmatprep.subr.bf16.mxu0 0
    %476 = vmatpush2.bf16.msra.mxu0 0
    %477 = vmatprep.subr.bf16.mxu0 0
    %478 = vmatpush2.bf16.msra.mxu0 0
    %479 = vmatprep.subr.bf16.mxu0 0
    %480 = vmatpush2.bf16.msra.mxu0 0
    %481 = vmatprep.subr.bf16.mxu0 0
    %482 = vmatpush2.bf16.msra.mxu0 0
    %483 = vmatprep.subr.bf16.mxu0 0
    %484 = vmatpush2.bf16.msra.mxu0 0
    %485 = vmatprep.subr.bf16.mxu0 0
    %486 = vmatpush2.bf16.msra.mxu0 0
    %487 = vmatprep.subr.bf16.mxu0 0
    %488 = vmatpush2.bf16.msra.mxu0 0
    %489 = vmatprep.subr.bf16.mxu0 0
    %490 = vmatpush2.bf16.msra.mxu0 0
    %491 = vmatprep.mubr.bf16.mxu0 0
    %492 = vmatmul.mubr.bf16.gmra.mxu0 %v375
    %v493 = vpop.f32.mrf.mxu0
    %v494 = vadd.f32 %v232, %v493
    %v495 = vpop.f32.mrf.mxu0
    %v496 = vadd.f32 %v236, %v495
    %v497 = vpop.f32.mrf.mxu0
    %v498 = vpop.f32.mrf.mxu0
    %499 = vdwg.mxu0
    %500 = vmatprep.subr.bf16.mxu0 0
    %501 = vmatpush1.bf16.msra.mxu0 0
    %502 = vmatprep.subr.bf16.mxu0 0
    %503 = vmatpush1.bf16.msra.mxu0 0
    %504 = vmatprep.subr.bf16.mxu0 0
    %505 = vmatpush1.bf16.msra.mxu0 0
    %506 = vmatprep.subr.bf16.mxu0 0
    %507 = vmatpush1.bf16.msra.mxu0 0
    %508 = vmatprep.subr.bf16.mxu0 0
    %509 = vmatpush1.bf16.msra.mxu0 0
    %510 = vmatprep.subr.bf16.mxu0 0
    %511 = vmatpush1.bf16.msra.mxu0 0
    %512 = vmatprep.subr.bf16.mxu0 %v356
    %513 = vmatpush1.bf16.msra.mxu0 %v355
    %514 = vmatprep.subr.bf16.mxu0 %v348
    %515 = vmatpush1.bf16.msra.mxu0 %v347
    %516 = vmatprep.subr.bf16.mxu0 0
    %517 = vmatpush2.bf16.msra.mxu0 0
    %518 = vmatprep.subr.bf16.mxu0 0
    %519 = vmatpush2.bf16.msra.mxu0 0
    %520 = vmatprep.subr.bf16.mxu0 0
    %521 = vmatpush2.bf16.msra.mxu0 0
    %522 = vmatprep.subr.bf16.mxu0 0
    %523 = vmatpush2.bf16.msra.mxu0 0
    %524 = vmatprep.subr.bf16.mxu0 0
    %525 = vmatpush2.bf16.msra.mxu0 0
    %526 = vmatprep.subr.bf16.mxu0 0
    %527 = vmatpush2.bf16.msra.mxu0 0
    %528 = vmatprep.subr.bf16.mxu0 0
    %529 = vmatpush2.bf16.msra.mxu0 0
    %530 = vmatprep.subr.bf16.mxu0 0
    %531 = vmatpush2.bf16.msra.mxu0 0
    %532 = vmatprep.mubr.bf16.mxu0 0
    %533 = vmatmul.mubr.bf16.gmra.mxu0 %v375
    %v534 = vpop.f32.mrf.mxu0
    %v535 = vadd.f32 %v240, %v534
    %v536 = vpop.f32.mrf.mxu0
    %v537 = vadd.f32 %v244, %v536
    %v538 = vpop.f32.mrf.mxu0
    %v539 = vpop.f32.mrf.mxu0
    %540 = vdwg.mxu0
    %v557 = vunpack.c.l.b16 %v193
    %v558 = vunpack.c.h.b16 %v193
    %v559 = vunpack.c.l.b16 %v194
    %v560 = vunpack.c.h.b16 %v194
    %v561 = vunpack.c.l.b16 %v195
    %v562 = vunpack.c.h.b16 %v195
    %v563 = vunpack.c.l.b16 %v196
    %v564 = vunpack.c.h.b16 %v196
    %v565 = vunpack.c.l.b16 %v197
    %v566 = vunpack.c.h.b16 %v197
    %v567 = vunpack.c.l.b16 %v198
    %v568 = vunpack.c.h.b16 %v198
    %v569 = vunpack.c.l.b16 %v199
    %v570 = vunpack.c.h.b16 %v199
    %v571 = vunpack.c.l.b16 %v200
    %v572 = vunpack.c.h.b16 %v200
    %v573 = vunpack.c.l.b16 %v201
    %v574 = vunpack.c.h.b16 %v201
    %v575 = vunpack.c.l.b16 %v202
    %v576 = vunpack.c.h.b16 %v202
    %v577 = vunpack.c.l.b16 %v203
    %v578 = vunpack.c.h.b16 %v203
    %v579 = vunpack.c.l.b16 %v204
    %v580 = vunpack.c.h.b16 %v204
    %v581 = vunpack.c.l.b16 %v205
    %v582 = vunpack.c.h.b16 %v205
    %v583 = vunpack.c.l.b16 %v206
    %v584 = vunpack.c.h.b16 %v206
    %v585 = vunpack.c.l.b16 %v207
    %v586 = vunpack.c.h.b16 %v207
    %v587 = vunpack.c.l.b16 %v208
    %v588 = vunpack.c.h.b16 %v208
    %v589 = vpack.c.b16 %v565, %v557
    %v590 = vpack.c.b16 %v566, %v558
    %v591 = vpack.c.b16 %v567, %v559
    %v592 = vpack.c.b16 %v568, %v560
    %v593 = vpack.c.b16 %v569, %v561
    %v594 = vpack.c.b16 %v570, %v562
    %v595 = vpack.c.b16 %v571, %v563
    %v596 = vpack.c.b16 %v572, %v564
    %v597 = vpack.c.b16 %v581, %v573
    %v598 = vpack.c.b16 %v582, %v574
    %v599 = vpack.c.b16 %v583, %v575
    %v600 = vpack.c.b16 %v584, %v576
    %v601 = vpack.c.b16 %v585, %v577
    %v602 = vpack.c.b16 %v586, %v578
    %v603 = vpack.c.b16 %v587, %v579
    %v604 = vpack.c.b16 %v588, %v580
    %v622 = vsel %vm373, %v176, 0
    %624 = vmatprep.subr.bf16.mxu0 0
    %625 = vmatpush1.bf16.msra.mxu0 0
    %626 = vmatprep.subr.bf16.mxu0 0
    %627 = vmatpush1.bf16.msra.mxu0 0
    %628 = vmatprep.subr.bf16.mxu0 0
    %629 = vmatpush1.bf16.msra.mxu0 0
    %630 = vmatprep.subr.bf16.mxu0 0
    %631 = vmatpush1.bf16.msra.mxu0 0
    %632 = vmatprep.subr.bf16.mxu0 0
    %633 = vmatpush1.bf16.msra.mxu0 0
    %634 = vmatprep.subr.bf16.mxu0 0
    %635 = vmatpush1.bf16.msra.mxu0 0
    %636 = vmatprep.subr.bf16.mxu0 %v598
    %637 = vmatpush1.bf16.msra.mxu0 %v597
    %638 = vmatprep.subr.bf16.mxu0 %v590
    %639 = vmatpush1.bf16.msra.mxu0 %v589
    %640 = vmatprep.subr.bf16.mxu0 0
    %641 = vmatpush2.bf16.msra.mxu0 0
    %642 = vmatprep.subr.bf16.mxu0 0
    %643 = vmatpush2.bf16.msra.mxu0 0
    %644 = vmatprep.subr.bf16.mxu0 0
    %645 = vmatpush2.bf16.msra.mxu0 0
    %646 = vmatprep.subr.bf16.mxu0 0
    %647 = vmatpush2.bf16.msra.mxu0 0
    %648 = vmatprep.subr.bf16.mxu0 0
    %649 = vmatpush2.bf16.msra.mxu0 0
    %650 = vmatprep.subr.bf16.mxu0 0
    %651 = vmatpush2.bf16.msra.mxu0 0
    %652 = vmatprep.subr.bf16.mxu0 0
    %653 = vmatpush2.bf16.msra.mxu0 0
    %654 = vmatprep.subr.bf16.mxu0 0
    %655 = vmatpush2.bf16.msra.mxu0 0
    %656 = vmatprep.mubr.bf16.mxu0 0
    %657 = vmatmul.mubr.bf16.gmra.mxu0 %v622
    %v658 = vpop.f32.mrf.mxu0
    %v659 = vadd.f32 %v248, %v658
    %v660 = vpop.f32.mrf.mxu0
    %v661 = vadd.f32 %v252, %v660
    %v662 = vpop.f32.mrf.mxu0
    %v663 = vpop.f32.mrf.mxu0
    %664 = vdwg.mxu0
    %665 = vmatprep.subr.bf16.mxu0 0
    %666 = vmatpush1.bf16.msra.mxu0 0
    %667 = vmatprep.subr.bf16.mxu0 0
    %668 = vmatpush1.bf16.msra.mxu0 0
    %669 = vmatprep.subr.bf16.mxu0 0
    %670 = vmatpush1.bf16.msra.mxu0 0
    %671 = vmatprep.subr.bf16.mxu0 0
    %672 = vmatpush1.bf16.msra.mxu0 0
    %673 = vmatprep.subr.bf16.mxu0 0
    %674 = vmatpush1.bf16.msra.mxu0 0
    %675 = vmatprep.subr.bf16.mxu0 0
    %676 = vmatpush1.bf16.msra.mxu0 0
    %677 = vmatprep.subr.bf16.mxu0 %v600
    %678 = vmatpush1.bf16.msra.mxu0 %v599
    %679 = vmatprep.subr.bf16.mxu0 %v592
    %680 = vmatpush1.bf16.msra.mxu0 %v591
    %681 = vmatprep.subr.bf16.mxu0 0
    %682 = vmatpush2.bf16.msra.mxu0 0
    %683 = vmatprep.subr.bf16.mxu0 0
    %684 = vmatpush2.bf16.msra.mxu0 0
    %685 = vmatprep.subr.bf16.mxu0 0
    %686 = vmatpush2.bf16.msra.mxu0 0
    %687 = vmatprep.subr.bf16.mxu0 0
    %688 = vmatpush2.bf16.msra.mxu0 0
    %689 = vmatprep.subr.bf16.mxu0 0
    %690 = vmatpush2.bf16.msra.mxu0 0
    %691 = vmatprep.subr.bf16.mxu0 0
    %692 = vmatpush2.bf16.msra.mxu0 0
    %693 = vmatprep.subr.bf16.mxu0 0
    %694 = vmatpush2.bf16.msra.mxu0 0
    %695 = vmatprep.subr.bf16.mxu0 0
    %696 = vmatpush2.bf16.msra.mxu0 0
    %697 = vmatprep.mubr.bf16.mxu0 0
    %698 = vmatmul.mubr.bf16.gmra.mxu0 %v622
    %v699 = vpop.f32.mrf.mxu0
    %v700 = vadd.f32 %v256, %v699
    %v701 = vpop.f32.mrf.mxu0
    %v702 = vadd.f32 %v260, %v701
    %v703 = vpop.f32.mrf.mxu0
    %v704 = vpop.f32.mrf.mxu0
    %705 = vdwg.mxu0
    %706 = vmatprep.subr.bf16.mxu0 0
    %707 = vmatpush1.bf16.msra.mxu0 0
    %708 = vmatprep.subr.bf16.mxu0 0
    %709 = vmatpush1.bf16.msra.mxu0 0
    %710 = vmatprep.subr.bf16.mxu0 0
    %711 = vmatpush1.bf16.msra.mxu0 0
    %712 = vmatprep.subr.bf16.mxu0 0
    %713 = vmatpush1.bf16.msra.mxu0 0
    %714 = vmatprep.subr.bf16.mxu0 0
    %715 = vmatpush1.bf16.msra.mxu0 0
    %716 = vmatprep.subr.bf16.mxu0 0
    %717 = vmatpush1.bf16.msra.mxu0 0
    %718 = vmatprep.subr.bf16.mxu0 %v602
    %719 = vmatpush1.bf16.msra.mxu0 %v601
    %720 = vmatprep.subr.bf16.mxu0 %v594
    %721 = vmatpush1.bf16.msra.mxu0 %v593
    %722 = vmatprep.subr.bf16.mxu0 0
    %723 = vmatpush2.bf16.msra.mxu0 0
    %724 = vmatprep.subr.bf16.mxu0 0
    %725 = vmatpush2.bf16.msra.mxu0 0
    %726 = vmatprep.subr.bf16.mxu0 0
    %727 = vmatpush2.bf16.msra.mxu0 0
    %728 = vmatprep.subr.bf16.mxu0 0
    %729 = vmatpush2.bf16.msra.mxu0 0
    %730 = vmatprep.subr.bf16.mxu0 0
    %731 = vmatpush2.bf16.msra.mxu0 0
    %732 = vmatprep.subr.bf16.mxu0 0
    %733 = vmatpush2.bf16.msra.mxu0 0
    %734 = vmatprep.subr.bf16.mxu0 0
    %735 = vmatpush2.bf16.msra.mxu0 0
    %736 = vmatprep.subr.bf16.mxu0 0
    %737 = vmatpush2.bf16.msra.mxu0 0
    %738 = vmatprep.mubr.bf16.mxu0 0
    %739 = vmatmul.mubr.bf16.gmra.mxu0 %v622
    %v740 = vpop.f32.mrf.mxu0
    %v741 = vadd.f32 %v264, %v740
    %v742 = vpop.f32.mrf.mxu0
    %v743 = vadd.f32 %v268, %v742
    %v744 = vpop.f32.mrf.mxu0
    %v745 = vpop.f32.mrf.mxu0
    %746 = vdwg.mxu0
    %747 = vmatprep.subr.bf16.mxu0 0
    %748 = vmatpush1.bf16.msra.mxu0 0
    %749 = vmatprep.subr.bf16.mxu0 0
    %750 = vmatpush1.bf16.msra.mxu0 0
    %751 = vmatprep.subr.bf16.mxu0 0
    %752 = vmatpush1.bf16.msra.mxu0 0
    %753 = vmatprep.subr.bf16.mxu0 0
    %754 = vmatpush1.bf16.msra.mxu0 0
    %755 = vmatprep.subr.bf16.mxu0 0
    %756 = vmatpush1.bf16.msra.mxu0 0
    %757 = vmatprep.subr.bf16.mxu0 0
    %758 = vmatpush1.bf16.msra.mxu0 0
    %759 = vmatprep.subr.bf16.mxu0 %v604
    %760 = vmatpush1.bf16.msra.mxu0 %v603
    %761 = vmatprep.subr.bf16.mxu0 %v596
    %762 = vmatpush1.bf16.msra.mxu0 %v595
    %763 = vmatprep.subr.bf16.mxu0 0
    %764 = vmatpush2.bf16.msra.mxu0 0
    %765 = vmatprep.subr.bf16.mxu0 0
    %766 = vmatpush2.bf16.msra.mxu0 0
    %767 = vmatprep.subr.bf16.mxu0 0
    %768 = vmatpush2.bf16.msra.mxu0 0
    %769 = vmatprep.subr.bf16.mxu0 0
    %770 = vmatpush2.bf16.msra.mxu0 0
    %771 = vmatprep.subr.bf16.mxu0 0
    %772 = vmatpush2.bf16.msra.mxu0 0
    %773 = vmatprep.subr.bf16.mxu0 0
    %774 = vmatpush2.bf16.msra.mxu0 0
    %775 = vmatprep.subr.bf16.mxu0 0
    %776 = vmatpush2.bf16.msra.mxu0 0
    %777 = vmatprep.subr.bf16.mxu0 0
    %778 = vmatpush2.bf16.msra.mxu0 0
    %779 = vmatprep.mubr.bf16.mxu0 0
    %780 = vmatmul.mubr.bf16.gmra.mxu0 %v622
    %v781 = vpop.f32.mrf.mxu0
    %v782 = vadd.f32 %v272, %v781
    %v783 = vpop.f32.mrf.mxu0
    %v784 = vadd.f32 %v276, %v783
    %v785 = vpop.f32.mrf.mxu0
    %v786 = vpop.f32.mrf.mxu0
    %787 = vdwg.mxu0
    %vm788 = vcmp.gt.f32.partialorder %v412, 0.0
    %vm789 = vcmp.gt.f32.partialorder %v414, 0.0
    %vm790 = vcmp.gt.f32.partialorder %v453, 0.0
    %vm791 = vcmp.gt.f32.partialorder %v455, 0.0
    %vm792 = vcmp.gt.f32.partialorder %v494, 0.0
    %vm793 = vcmp.gt.f32.partialorder %v496, 0.0
    %vm794 = vcmp.gt.f32.partialorder %v535, 0.0
    %vm795 = vcmp.gt.f32.partialorder %v537, 0.0
    %vm796 = vcmp.gt.f32.partialorder %v659, 0.0
    %vm797 = vcmp.gt.f32.partialorder %v661, 0.0
    %vm798 = vcmp.gt.f32.partialorder %v700, 0.0
    %vm799 = vcmp.gt.f32.partialorder %v702, 0.0
    %vm800 = vcmp.gt.f32.partialorder %v741, 0.0
    %vm801 = vcmp.gt.f32.partialorder %v743, 0.0
    %vm802 = vcmp.gt.f32.partialorder %v782, 0.0
    %vm803 = vcmp.gt.f32.partialorder %v784, 0.0
    %v804 = vmul.f32 %v412, 0.01
    %v805 = vmul.f32 %v414, 0.01
    %v806 = vmul.f32 %v453, 0.01
    %v807 = vmul.f32 %v455, 0.01
    %v808 = vmul.f32 %v494, 0.01
    %v809 = vmul.f32 %v496, 0.01
    %v810 = vmul.f32 %v535, 0.01
    %v811 = vmul.f32 %v537, 0.01
    %v812 = vmul.f32 %v659, 0.01
    %v813 = vmul.f32 %v661, 0.01
    %v814 = vmul.f32 %v700, 0.01
    %v815 = vmul.f32 %v702, 0.01
    %v816 = vmul.f32 %v741, 0.01
    %v817 = vmul.f32 %v743, 0.01
    %v818 = vmul.f32 %v782, 0.01
    %v819 = vmul.f32 %v784, 0.01
    %v820 = vsel %vm788, %v412, %v804
    %v821 = vsel %vm789, %v414, %v805
    %v822 = vsel %vm790, %v453, %v806
    %v823 = vsel %vm791, %v455, %v807
    %v824 = vsel %vm792, %v494, %v808
    %v825 = vsel %vm793, %v496, %v809
    %v826 = vsel %vm794, %v535, %v810
    %v827 = vsel %vm795, %v537, %v811
    %v828 = vsel %vm796, %v659, %v812
    %v829 = vsel %vm797, %v661, %v813
    %v830 = vsel %vm798, %v700, %v814
    %v831 = vsel %vm799, %v702, %v815
    %v832 = vsel %vm800, %v741, %v816
    %v833 = vsel %vm801, %v743, %v817
    %v834 = vsel %vm802, %v782, %v818
    %v835 = vsel %vm803, %v784, %v819
    %v836 = vpack.c.bf16 %v820, %v820
    %v837 = vpack.c.bf16 %v821, %v821
    %v838 = vpack.c.bf16 %v822, %v822
    %v839 = vpack.c.bf16 %v823, %v823
    %v840 = vpack.c.bf16 %v824, %v824
    %v841 = vpack.c.bf16 %v825, %v825
    %v842 = vpack.c.bf16 %v826, %v826
    %v843 = vpack.c.bf16 %v827, %v827
    %v844 = vpack.c.bf16 %v828, %v828
    %v845 = vpack.c.bf16 %v829, %v829
    %v846 = vpack.c.bf16 %v830, %v830
    %v847 = vpack.c.bf16 %v831, %v831
    %v848 = vpack.c.bf16 %v832, %v832
    %v849 = vpack.c.bf16 %v833, %v833
    %v850 = vpack.c.bf16 %v834, %v834
    %v851 = vpack.c.bf16 %v835, %v835
    %v852 = vld [vmem:[#allocation7] sm:$0xff]
    %v853 = vld [vmem:[#allocation7 + $0x8] sm:$0xff]
    %v854 = vld [vmem:[#allocation7 + $0x10] sm:$0xff]
    %v855 = vld [vmem:[#allocation7 + $0x18] sm:$0xff]
    %v856 = vld [vmem:[#allocation7 + $0x20] sm:$0xff]
    %v857 = vld [vmem:[#allocation7 + $0x28] sm:$0xff]
    %v858 = vld [vmem:[#allocation7 + $0x30] sm:$0xff]
    %v859 = vld [vmem:[#allocation7 + $0x38] sm:$0xff]
    %v860 = vld [vmem:[#allocation7 + $0x40] sm:$0xff]
    %v861 = vld [vmem:[#allocation7 + $0x48] sm:$0xff]
    %v862 = vld [vmem:[#allocation7 + $0x50] sm:$0xff]
    %v863 = vld [vmem:[#allocation7 + $0x58] sm:$0xff]
    %v864 = vld [vmem:[#allocation7 + $0x60] sm:$0xff]
    %v865 = vld [vmem:[#allocation7 + $0x68] sm:$0xff]
    %v866 = vld [vmem:[#allocation7 + $0x70] sm:$0xff]
    %v867 = vld [vmem:[#allocation7 + $0x78] sm:$0xff]
    %v868 = vld [vmem:[#allocation7 + $0x80] sm:$0xff]
    %v869 = vld [vmem:[#allocation7 + $0x88] sm:$0xff]
    %v870 = vld [vmem:[#allocation7 + $0x90] sm:$0xff]
    %v871 = vld [vmem:[#allocation7 + $0x98] sm:$0xff]
    %v872 = vld [vmem:[#allocation7 + $0xa0] sm:$0xff]
    %v873 = vld [vmem:[#allocation7 + $0xa8] sm:$0xff]
    %v874 = vld [vmem:[#allocation7 + $0xb0] sm:$0xff]
    %v875 = vld [vmem:[#allocation7 + $0xb8] sm:$0xff]
    %v876 = vld [vmem:[#allocation7 + $0xc0] sm:$0xff]
    %v877 = vld [vmem:[#allocation7 + $0xc8] sm:$0xff]
    %v878 = vld [vmem:[#allocation7 + $0xd0] sm:$0xff]
    %v879 = vld [vmem:[#allocation7 + $0xd8] sm:$0xff]
    %v880 = vld [vmem:[#allocation7 + $0xe0] sm:$0xff]
    %v881 = vld [vmem:[#allocation7 + $0xe8] sm:$0xff]
    %v882 = vld [vmem:[#allocation7 + $0xf0] sm:$0xff]
    %v883 = vld [vmem:[#allocation7 + $0xf8] sm:$0xff]
    %v884 = vld [vmem:[#allocation7 + $0x100] sm:$0xff]
    %v885 = vld [vmem:[#allocation7 + $0x108] sm:$0xff]
    %v886 = vld [vmem:[#allocation7 + $0x110] sm:$0xff]
    %v887 = vld [vmem:[#allocation7 + $0x118] sm:$0xff]
    %v888 = vld [vmem:[#allocation7 + $0x120] sm:$0xff]
    %v889 = vld [vmem:[#allocation7 + $0x128] sm:$0xff]
    %v890 = vld [vmem:[#allocation7 + $0x130] sm:$0xff]
    %v891 = vld [vmem:[#allocation7 + $0x138] sm:$0xff]
    %v892 = vld [vmem:[#allocation7 + $0x140] sm:$0xff]
    %v893 = vld [vmem:[#allocation7 + $0x148] sm:$0xff]
    %v894 = vld [vmem:[#allocation7 + $0x150] sm:$0xff]
    %v895 = vld [vmem:[#allocation7 + $0x158] sm:$0xff]
    %v896 = vld [vmem:[#allocation7 + $0x160] sm:$0xff]
    %v897 = vld [vmem:[#allocation7 + $0x168] sm:$0xff]
    %v898 = vld [vmem:[#allocation7 + $0x170] sm:$0xff]
    %v899 = vld [vmem:[#allocation7 + $0x178] sm:$0xff]
    %v900 = vld [vmem:[#allocation7 + $0x180] sm:$0xff]
    %v901 = vld [vmem:[#allocation7 + $0x188] sm:$0xff]
    %v902 = vld [vmem:[#allocation7 + $0x190] sm:$0xff]
    %v903 = vld [vmem:[#allocation7 + $0x198] sm:$0xff]
    %v904 = vld [vmem:[#allocation7 + $0x1a0] sm:$0xff]
    %v905 = vld [vmem:[#allocation7 + $0x1a8] sm:$0xff]
    %v906 = vld [vmem:[#allocation7 + $0x1b0] sm:$0xff]
    %v907 = vld [vmem:[#allocation7 + $0x1b8] sm:$0xff]
    %v908 = vld [vmem:[#allocation7 + $0x1c0] sm:$0xff]
    %v909 = vld [vmem:[#allocation7 + $0x1c8] sm:$0xff]
    %v910 = vld [vmem:[#allocation7 + $0x1d0] sm:$0xff]
    %v911 = vld [vmem:[#allocation7 + $0x1d8] sm:$0xff]
    %v912 = vld [vmem:[#allocation7 + $0x1e0] sm:$0xff]
    %v913 = vld [vmem:[#allocation7 + $0x1e8] sm:$0xff]
    %v914 = vld [vmem:[#allocation7 + $0x1f0] sm:$0xff]
    %v915 = vld [vmem:[#allocation7 + $0x1f8] sm:$0xff]
    %v916 = vld [vmem:[#allocation7 + $0x200] sm:$0xff]
    %v917 = vld [vmem:[#allocation7 + $0x208] sm:$0xff]
    %v918 = vld [vmem:[#allocation7 + $0x210] sm:$0xff]
    %v919 = vld [vmem:[#allocation7 + $0x218] sm:$0xff]
    %v920 = vld [vmem:[#allocation7 + $0x220] sm:$0xff]
    %v921 = vld [vmem:[#allocation7 + $0x228] sm:$0xff]
    %v922 = vld [vmem:[#allocation7 + $0x230] sm:$0xff]
    %v923 = vld [vmem:[#allocation7 + $0x238] sm:$0xff]
    %v924 = vld [vmem:[#allocation7 + $0x240] sm:$0xff]
    %v925 = vld [vmem:[#allocation7 + $0x248] sm:$0xff]
    %v926 = vld [vmem:[#allocation7 + $0x250] sm:$0xff]
    %v927 = vld [vmem:[#allocation7 + $0x258] sm:$0xff]
    %v928 = vld [vmem:[#allocation7 + $0x260] sm:$0xff]
    %v929 = vld [vmem:[#allocation7 + $0x268] sm:$0xff]
    %v930 = vld [vmem:[#allocation7 + $0x270] sm:$0xff]
    %v931 = vld [vmem:[#allocation7 + $0x278] sm:$0xff]
    %v932 = vld [vmem:[#allocation7 + $0x280] sm:$0xff]
    %v933 = vld [vmem:[#allocation7 + $0x288] sm:$0xff]
    %v934 = vld [vmem:[#allocation7 + $0x290] sm:$0xff]
    %v935 = vld [vmem:[#allocation7 + $0x298] sm:$0xff]
    %v936 = vld [vmem:[#allocation7 + $0x2a0] sm:$0xff]
    %v937 = vld [vmem:[#allocation7 + $0x2a8] sm:$0xff]
    %v938 = vld [vmem:[#allocation7 + $0x2b0] sm:$0xff]
    %v939 = vld [vmem:[#allocation7 + $0x2b8] sm:$0xff]
    %v940 = vld [vmem:[#allocation7 + $0x2c0] sm:$0xff]
    %v941 = vld [vmem:[#allocation7 + $0x2c8] sm:$0xff]
    %v942 = vld [vmem:[#allocation7 + $0x2d0] sm:$0xff]
    %v943 = vld [vmem:[#allocation7 + $0x2d8] sm:$0xff]
    %v944 = vld [vmem:[#allocation7 + $0x2e0] sm:$0xff]
    %v945 = vld [vmem:[#allocation7 + $0x2e8] sm:$0xff]
    %v946 = vld [vmem:[#allocation7 + $0x2f0] sm:$0xff]
    %v947 = vld [vmem:[#allocation7 + $0x2f8] sm:$0xff]
    %v948 = vld [vmem:[#allocation7 + $0x300] sm:$0xff]
    %v949 = vld [vmem:[#allocation7 + $0x308] sm:$0xff]
    %v950 = vld [vmem:[#allocation7 + $0x310] sm:$0xff]
    %v951 = vld [vmem:[#allocation7 + $0x318] sm:$0xff]
    %v952 = vld [vmem:[#allocation7 + $0x320] sm:$0xff]
    %v953 = vld [vmem:[#allocation7 + $0x328] sm:$0xff]
    %v954 = vld [vmem:[#allocation7 + $0x330] sm:$0xff]
    %v955 = vld [vmem:[#allocation7 + $0x338] sm:$0xff]
    %v956 = vld [vmem:[#allocation7 + $0x340] sm:$0xff]
    %v957 = vld [vmem:[#allocation7 + $0x348] sm:$0xff]
    %v958 = vld [vmem:[#allocation7 + $0x350] sm:$0xff]
    %v959 = vld [vmem:[#allocation7 + $0x358] sm:$0xff]
    %v960 = vld [vmem:[#allocation7 + $0x360] sm:$0xff]
    %v961 = vld [vmem:[#allocation7 + $0x368] sm:$0xff]
    %v962 = vld [vmem:[#allocation7 + $0x370] sm:$0xff]
    %v963 = vld [vmem:[#allocation7 + $0x378] sm:$0xff]
    %v964 = vld [vmem:[#allocation7 + $0x380] sm:$0xff]
    %v965 = vld [vmem:[#allocation7 + $0x388] sm:$0xff]
    %v966 = vld [vmem:[#allocation7 + $0x390] sm:$0xff]
    %v967 = vld [vmem:[#allocation7 + $0x398] sm:$0xff]
    %v968 = vld [vmem:[#allocation7 + $0x3a0] sm:$0xff]
    %v969 = vld [vmem:[#allocation7 + $0x3a8] sm:$0xff]
    %v970 = vld [vmem:[#allocation7 + $0x3b0] sm:$0xff]
    %v971 = vld [vmem:[#allocation7 + $0x3b8] sm:$0xff]
    %v972 = vld [vmem:[#allocation7 + $0x3c0] sm:$0xff]
    %v973 = vld [vmem:[#allocation7 + $0x3c8] sm:$0xff]
    %v974 = vld [vmem:[#allocation7 + $0x3d0] sm:$0xff]
    %v975 = vld [vmem:[#allocation7 + $0x3d8] sm:$0xff]
    %v976 = vld [vmem:[#allocation7 + $0x3e0] sm:$0xff]
    %v977 = vld [vmem:[#allocation7 + $0x3e8] sm:$0xff]
    %v978 = vld [vmem:[#allocation7 + $0x3f0] sm:$0xff]
    %v979 = vld [vmem:[#allocation7 + $0x3f8] sm:$0xff]
    %v980 = vld [vmem:[#allocation7 + $0x400] sm:$0xff]
    %v981 = vld [vmem:[#allocation7 + $0x408] sm:$0xff]
    %v982 = vld [vmem:[#allocation7 + $0x410] sm:$0xff]
    %v983 = vld [vmem:[#allocation7 + $0x418] sm:$0xff]
    %v984 = vld [vmem:[#allocation7 + $0x420] sm:$0xff]
    %v985 = vld [vmem:[#allocation7 + $0x428] sm:$0xff]
    %v986 = vld [vmem:[#allocation7 + $0x430] sm:$0xff]
    %v987 = vld [vmem:[#allocation7 + $0x438] sm:$0xff]
    %v988 = vld [vmem:[#allocation7 + $0x440] sm:$0xff]
    %v989 = vld [vmem:[#allocation7 + $0x448] sm:$0xff]
    %v990 = vld [vmem:[#allocation7 + $0x450] sm:$0xff]
    %v991 = vld [vmem:[#allocation7 + $0x458] sm:$0xff]
    %v992 = vld [vmem:[#allocation7 + $0x460] sm:$0xff]
    %v993 = vld [vmem:[#allocation7 + $0x468] sm:$0xff]
    %v994 = vld [vmem:[#allocation7 + $0x470] sm:$0xff]
    %v995 = vld [vmem:[#allocation7 + $0x478] sm:$0xff]
    %v996 = vld [vmem:[#allocation7 + $0x480] sm:$0xff]
    %v997 = vld [vmem:[#allocation7 + $0x488] sm:$0xff]
    %v998 = vld [vmem:[#allocation7 + $0x490] sm:$0xff]
    %v999 = vld [vmem:[#allocation7 + $0x498] sm:$0xff]
    %v1000 = vld [vmem:[#allocation7 + $0x4a0] sm:$0xff]
    %v1001 = vld [vmem:[#allocation7 + $0x4a8] sm:$0xff]
    %v1002 = vld [vmem:[#allocation7 + $0x4b0] sm:$0xff]
    %v1003 = vld [vmem:[#allocation7 + $0x4b8] sm:$0xff]
    %v1004 = vld [vmem:[#allocation7 + $0x4c0] sm:$0xff]
    %v1005 = vld [vmem:[#allocation7 + $0x4c8] sm:$0xff]
    %v1006 = vld [vmem:[#allocation7 + $0x4d0] sm:$0xff]
    %v1007 = vld [vmem:[#allocation7 + $0x4d8] sm:$0xff]
    %v1008 = vld [vmem:[#allocation7 + $0x4e0] sm:$0xff]
    %v1009 = vld [vmem:[#allocation7 + $0x4e8] sm:$0xff]
    %v1010 = vld [vmem:[#allocation7 + $0x4f0] sm:$0xff]
    %v1011 = vld [vmem:[#allocation7 + $0x4f8] sm:$0xff]
    %v1012 = vld [vmem:[#allocation7 + $0x500] sm:$0xff]
    %v1013 = vld [vmem:[#allocation7 + $0x508] sm:$0xff]
    %v1014 = vld [vmem:[#allocation7 + $0x510] sm:$0xff]
    %v1015 = vld [vmem:[#allocation7 + $0x518] sm:$0xff]
    %v1016 = vld [vmem:[#allocation7 + $0x520] sm:$0xff]
    %v1017 = vld [vmem:[#allocation7 + $0x528] sm:$0xff]
    %v1018 = vld [vmem:[#allocation7 + $0x530] sm:$0xff]
    %v1019 = vld [vmem:[#allocation7 + $0x538] sm:$0xff]
    %v1020 = vld [vmem:[#allocation7 + $0x540] sm:$0xff]
    %v1021 = vld [vmem:[#allocation7 + $0x548] sm:$0xff]
    %v1022 = vld [vmem:[#allocation7 + $0x550] sm:$0xff]
    %v1023 = vld [vmem:[#allocation7 + $0x558] sm:$0xff]
    %v1024 = vld [vmem:[#allocation7 + $0x560] sm:$0xff]
    %v1025 = vld [vmem:[#allocation7 + $0x568] sm:$0xff]
    %v1026 = vld [vmem:[#allocation7 + $0x570] sm:$0xff]
    %v1027 = vld [vmem:[#allocation7 + $0x578] sm:$0xff]
    %v1028 = vld [vmem:[#allocation7 + $0x580] sm:$0xff]
    %v1029 = vld [vmem:[#allocation7 + $0x588] sm:$0xff]
    %v1030 = vld [vmem:[#allocation7 + $0x590] sm:$0xff]
    %v1031 = vld [vmem:[#allocation7 + $0x598] sm:$0xff]
    %v1032 = vld [vmem:[#allocation7 + $0x5a0] sm:$0xff]
    %v1033 = vld [vmem:[#allocation7 + $0x5a8] sm:$0xff]
    %v1034 = vld [vmem:[#allocation7 + $0x5b0] sm:$0xff]
    %v1035 = vld [vmem:[#allocation7 + $0x5b8] sm:$0xff]
    %v1036 = vld [vmem:[#allocation7 + $0x5c0] sm:$0xff]
    %v1037 = vld [vmem:[#allocation7 + $0x5c8] sm:$0xff]
    %v1038 = vld [vmem:[#allocation7 + $0x5d0] sm:$0xff]
    %v1039 = vld [vmem:[#allocation7 + $0x5d8] sm:$0xff]
    %v1040 = vld [vmem:[#allocation7 + $0x5e0] sm:$0xff]
    %v1041 = vld [vmem:[#allocation7 + $0x5e8] sm:$0xff]
    %v1042 = vld [vmem:[#allocation7 + $0x5f0] sm:$0xff]
    %v1043 = vld [vmem:[#allocation7 + $0x5f8] sm:$0xff]
    %v1044 = vld [vmem:[#allocation7 + $0x600] sm:$0xff]
    %v1045 = vld [vmem:[#allocation7 + $0x608] sm:$0xff]
    %v1046 = vld [vmem:[#allocation7 + $0x610] sm:$0xff]
    %v1047 = vld [vmem:[#allocation7 + $0x618] sm:$0xff]
    %v1048 = vld [vmem:[#allocation7 + $0x620] sm:$0xff]
    %v1049 = vld [vmem:[#allocation7 + $0x628] sm:$0xff]
    %v1050 = vld [vmem:[#allocation7 + $0x630] sm:$0xff]
    %v1051 = vld [vmem:[#allocation7 + $0x638] sm:$0xff]
    %v1052 = vld [vmem:[#allocation7 + $0x640] sm:$0xff]
    %v1053 = vld [vmem:[#allocation7 + $0x648] sm:$0xff]
    %v1054 = vld [vmem:[#allocation7 + $0x650] sm:$0xff]
    %v1055 = vld [vmem:[#allocation7 + $0x658] sm:$0xff]
    %v1056 = vld [vmem:[#allocation7 + $0x660] sm:$0xff]
    %v1057 = vld [vmem:[#allocation7 + $0x668] sm:$0xff]
    %v1058 = vld [vmem:[#allocation7 + $0x670] sm:$0xff]
    %v1059 = vld [vmem:[#allocation7 + $0x678] sm:$0xff]
    %v1060 = vld [vmem:[#allocation7 + $0x680] sm:$0xff]
    %v1061 = vld [vmem:[#allocation7 + $0x688] sm:$0xff]
    %v1062 = vld [vmem:[#allocation7 + $0x690] sm:$0xff]
    %v1063 = vld [vmem:[#allocation7 + $0x698] sm:$0xff]
    %v1064 = vld [vmem:[#allocation7 + $0x6a0] sm:$0xff]
    %v1065 = vld [vmem:[#allocation7 + $0x6a8] sm:$0xff]
    %v1066 = vld [vmem:[#allocation7 + $0x6b0] sm:$0xff]
    %v1067 = vld [vmem:[#allocation7 + $0x6b8] sm:$0xff]
    %v1068 = vld [vmem:[#allocation7 + $0x6c0] sm:$0xff]
    %v1069 = vld [vmem:[#allocation7 + $0x6c8] sm:$0xff]
    %v1070 = vld [vmem:[#allocation7 + $0x6d0] sm:$0xff]
    %v1071 = vld [vmem:[#allocation7 + $0x6d8] sm:$0xff]
    %v1072 = vld [vmem:[#allocation7 + $0x6e0] sm:$0xff]
    %v1073 = vld [vmem:[#allocation7 + $0x6e8] sm:$0xff]
    %v1074 = vld [vmem:[#allocation7 + $0x6f0] sm:$0xff]
    %v1075 = vld [vmem:[#allocation7 + $0x6f8] sm:$0xff]
    %v1076 = vld [vmem:[#allocation7 + $0x700] sm:$0xff]
    %v1077 = vld [vmem:[#allocation7 + $0x708] sm:$0xff]
    %v1078 = vld [vmem:[#allocation7 + $0x710] sm:$0xff]
    %v1079 = vld [vmem:[#allocation7 + $0x718] sm:$0xff]
    %v1080 = vld [vmem:[#allocation7 + $0x720] sm:$0xff]
    %v1081 = vld [vmem:[#allocation7 + $0x728] sm:$0xff]
    %v1082 = vld [vmem:[#allocation7 + $0x730] sm:$0xff]
    %v1083 = vld [vmem:[#allocation7 + $0x738] sm:$0xff]
    %v1084 = vld [vmem:[#allocation7 + $0x740] sm:$0xff]
    %v1085 = vld [vmem:[#allocation7 + $0x748] sm:$0xff]
    %v1086 = vld [vmem:[#allocation7 + $0x750] sm:$0xff]
    %v1087 = vld [vmem:[#allocation7 + $0x758] sm:$0xff]
    %v1088 = vld [vmem:[#allocation7 + $0x760] sm:$0xff]
    %v1089 = vld [vmem:[#allocation7 + $0x768] sm:$0xff]
    %v1090 = vld [vmem:[#allocation7 + $0x770] sm:$0xff]
    %v1091 = vld [vmem:[#allocation7 + $0x778] sm:$0xff]
    %v1092 = vld [vmem:[#allocation7 + $0x780] sm:$0xff]
    %v1093 = vld [vmem:[#allocation7 + $0x788] sm:$0xff]
    %v1094 = vld [vmem:[#allocation7 + $0x790] sm:$0xff]
    %v1095 = vld [vmem:[#allocation7 + $0x798] sm:$0xff]
    %v1096 = vld [vmem:[#allocation7 + $0x7a0] sm:$0xff]
    %v1097 = vld [vmem:[#allocation7 + $0x7a8] sm:$0xff]
    %v1098 = vld [vmem:[#allocation7 + $0x7b0] sm:$0xff]
    %v1099 = vld [vmem:[#allocation7 + $0x7b8] sm:$0xff]
    %v1100 = vld [vmem:[#allocation7 + $0x7c0] sm:$0xff]
    %v1101 = vld [vmem:[#allocation7 + $0x7c8] sm:$0xff]
    %v1102 = vld [vmem:[#allocation7 + $0x7d0] sm:$0xff]
    %v1103 = vld [vmem:[#allocation7 + $0x7d8] sm:$0xff]
    %v1104 = vld [vmem:[#allocation7 + $0x7e0] sm:$0xff]
    %v1105 = vld [vmem:[#allocation7 + $0x7e8] sm:$0xff]
    %v1106 = vld [vmem:[#allocation7 + $0x7f0] sm:$0xff]
    %v1107 = vld [vmem:[#allocation7 + $0x7f8] sm:$0xff]
    %v1108 = vld [vmem:[#allocation7 + $0x800] sm:$0xff]
    %v1109 = vld [vmem:[#allocation7 + $0x808] sm:$0xff]
    %v1110 = vld [vmem:[#allocation7 + $0x810] sm:$0xff]
    %v1111 = vld [vmem:[#allocation7 + $0x818] sm:$0xff]
    %v1112 = vld [vmem:[#allocation7 + $0x820] sm:$0xff]
    %v1113 = vld [vmem:[#allocation7 + $0x828] sm:$0xff]
    %v1114 = vld [vmem:[#allocation7 + $0x830] sm:$0xff]
    %v1115 = vld [vmem:[#allocation7 + $0x838] sm:$0xff]
    %v1116 = vld [vmem:[#allocation7 + $0x840] sm:$0xff]
    %v1117 = vld [vmem:[#allocation7 + $0x848] sm:$0xff]
    %v1118 = vld [vmem:[#allocation7 + $0x850] sm:$0xff]
    %v1119 = vld [vmem:[#allocation7 + $0x858] sm:$0xff]
    %v1120 = vld [vmem:[#allocation7 + $0x860] sm:$0xff]
    %v1121 = vld [vmem:[#allocation7 + $0x868] sm:$0xff]
    %v1122 = vld [vmem:[#allocation7 + $0x870] sm:$0xff]
    %v1123 = vld [vmem:[#allocation7 + $0x878] sm:$0xff]
    %v1124 = vld [vmem:[#allocation7 + $0x880] sm:$0xff]
    %v1125 = vld [vmem:[#allocation7 + $0x888] sm:$0xff]
    %v1126 = vld [vmem:[#allocation7 + $0x890] sm:$0xff]
    %v1127 = vld [vmem:[#allocation7 + $0x898] sm:$0xff]
    %v1128 = vld [vmem:[#allocation7 + $0x8a0] sm:$0xff]
    %v1129 = vld [vmem:[#allocation7 + $0x8a8] sm:$0xff]
    %v1130 = vld [vmem:[#allocation7 + $0x8b0] sm:$0xff]
    %v1131 = vld [vmem:[#allocation7 + $0x8b8] sm:$0xff]
    %v1132 = vld [vmem:[#allocation7 + $0x8c0] sm:$0xff]
    %v1133 = vld [vmem:[#allocation7 + $0x8c8] sm:$0xff]
    %v1134 = vld [vmem:[#allocation7 + $0x8d0] sm:$0xff]
    %v1135 = vld [vmem:[#allocation7 + $0x8d8] sm:$0xff]
    %v1136 = vld [vmem:[#allocation7 + $0x8e0] sm:$0xff]
    %v1137 = vld [vmem:[#allocation7 + $0x8e8] sm:$0xff]
    %v1138 = vld [vmem:[#allocation7 + $0x8f0] sm:$0xff]
    %v1139 = vld [vmem:[#allocation7 + $0x8f8] sm:$0xff]
    %v1140 = vld [vmem:[#allocation7 + $0x900] sm:$0xff]
    %v1141 = vld [vmem:[#allocation7 + $0x908] sm:$0xff]
    %v1142 = vld [vmem:[#allocation7 + $0x910] sm:$0xff]
    %v1143 = vld [vmem:[#allocation7 + $0x918] sm:$0xff]
    %v1144 = vld [vmem:[#allocation7 + $0x920] sm:$0xff]
    %v1145 = vld [vmem:[#allocation7 + $0x928] sm:$0xff]
    %v1146 = vld [vmem:[#allocation7 + $0x930] sm:$0xff]
    %v1147 = vld [vmem:[#allocation7 + $0x938] sm:$0xff]
    %v1148 = vld [vmem:[#allocation7 + $0x940] sm:$0xff]
    %v1149 = vld [vmem:[#allocation7 + $0x948] sm:$0xff]
    %v1150 = vld [vmem:[#allocation7 + $0x950] sm:$0xff]
    %v1151 = vld [vmem:[#allocation7 + $0x958] sm:$0xff]
    %v1152 = vld [vmem:[#allocation7 + $0x960] sm:$0xff]
    %v1153 = vld [vmem:[#allocation7 + $0x968] sm:$0xff]
    %v1154 = vld [vmem:[#allocation7 + $0x970] sm:$0xff]
    %v1155 = vld [vmem:[#allocation7 + $0x978] sm:$0xff]
    %v1156 = vld [vmem:[#allocation7 + $0x980] sm:$0xff]
    %v1157 = vld [vmem:[#allocation7 + $0x988] sm:$0xff]
    %v1158 = vld [vmem:[#allocation7 + $0x990] sm:$0xff]
    %v1159 = vld [vmem:[#allocation7 + $0x998] sm:$0xff]
    %v1160 = vld [vmem:[#allocation7 + $0x9a0] sm:$0xff]
    %v1161 = vld [vmem:[#allocation7 + $0x9a8] sm:$0xff]
    %v1162 = vld [vmem:[#allocation7 + $0x9b0] sm:$0xff]
    %v1163 = vld [vmem:[#allocation7 + $0x9b8] sm:$0xff]
    %v1164 = vld [vmem:[#allocation7 + $0x9c0] sm:$0xff]
    %v1165 = vld [vmem:[#allocation7 + $0x9c8] sm:$0xff]
    %v1166 = vld [vmem:[#allocation7 + $0x9d0] sm:$0xff]
    %v1167 = vld [vmem:[#allocation7 + $0x9d8] sm:$0xff]
    %v1168 = vld [vmem:[#allocation7 + $0x9e0] sm:$0xff]
    %v1169 = vld [vmem:[#allocation7 + $0x9e8] sm:$0xff]
    %v1170 = vld [vmem:[#allocation7 + $0x9f0] sm:$0xff]
    %v1171 = vld [vmem:[#allocation7 + $0x9f8] sm:$0xff]
    %v1172 = vld [vmem:[#allocation7 + $0xa00] sm:$0xff]
    %v1173 = vld [vmem:[#allocation7 + $0xa08] sm:$0xff]
    %v1174 = vld [vmem:[#allocation7 + $0xa10] sm:$0xff]
    %v1175 = vld [vmem:[#allocation7 + $0xa18] sm:$0xff]
    %v1176 = vld [vmem:[#allocation7 + $0xa20] sm:$0xff]
    %v1177 = vld [vmem:[#allocation7 + $0xa28] sm:$0xff]
    %v1178 = vld [vmem:[#allocation7 + $0xa30] sm:$0xff]
    %v1179 = vld [vmem:[#allocation7 + $0xa38] sm:$0xff]
    %v1180 = vld [vmem:[#allocation7 + $0xa40] sm:$0xff]
    %v1181 = vld [vmem:[#allocation7 + $0xa48] sm:$0xff]
    %v1182 = vld [vmem:[#allocation7 + $0xa50] sm:$0xff]
    %v1183 = vld [vmem:[#allocation7 + $0xa58] sm:$0xff]
    %v1184 = vld [vmem:[#allocation7 + $0xa60] sm:$0xff]
    %v1185 = vld [vmem:[#allocation7 + $0xa68] sm:$0xff]
    %v1186 = vld [vmem:[#allocation7 + $0xa70] sm:$0xff]
    %v1187 = vld [vmem:[#allocation7 + $0xa78] sm:$0xff]
    %v1188 = vld [vmem:[#allocation7 + $0xa80] sm:$0xff]
    %v1189 = vld [vmem:[#allocation7 + $0xa88] sm:$0xff]
    %v1190 = vld [vmem:[#allocation7 + $0xa90] sm:$0xff]
    %v1191 = vld [vmem:[#allocation7 + $0xa98] sm:$0xff]
    %v1192 = vld [vmem:[#allocation7 + $0xaa0] sm:$0xff]
    %v1193 = vld [vmem:[#allocation7 + $0xaa8] sm:$0xff]
    %v1194 = vld [vmem:[#allocation7 + $0xab0] sm:$0xff]
    %v1195 = vld [vmem:[#allocation7 + $0xab8] sm:$0xff]
    %v1196 = vld [vmem:[#allocation7 + $0xac0] sm:$0xff]
    %v1197 = vld [vmem:[#allocation7 + $0xac8] sm:$0xff]
    %v1198 = vld [vmem:[#allocation7 + $0xad0] sm:$0xff]
    %v1199 = vld [vmem:[#allocation7 + $0xad8] sm:$0xff]
    %v1200 = vld [vmem:[#allocation7 + $0xae0] sm:$0xff]
    %v1201 = vld [vmem:[#allocation7 + $0xae8] sm:$0xff]
    %v1202 = vld [vmem:[#allocation7 + $0xaf0] sm:$0xff]
    %v1203 = vld [vmem:[#allocation7 + $0xaf8] sm:$0xff]
    %v1204 = vld [vmem:[#allocation7 + $0xb00] sm:$0xff]
    %v1205 = vld [vmem:[#allocation7 + $0xb08] sm:$0xff]
    %v1206 = vld [vmem:[#allocation7 + $0xb10] sm:$0xff]
    %v1207 = vld [vmem:[#allocation7 + $0xb18] sm:$0xff]
    %v1208 = vld [vmem:[#allocation7 + $0xb20] sm:$0xff]
    %v1209 = vld [vmem:[#allocation7 + $0xb28] sm:$0xff]
    %v1210 = vld [vmem:[#allocation7 + $0xb30] sm:$0xff]
    %v1211 = vld [vmem:[#allocation7 + $0xb38] sm:$0xff]
    %v1212 = vld [vmem:[#allocation7 + $0xb40] sm:$0xff]
    %v1213 = vld [vmem:[#allocation7 + $0xb48] sm:$0xff]
    %v1214 = vld [vmem:[#allocation7 + $0xb50] sm:$0xff]
    %v1215 = vld [vmem:[#allocation7 + $0xb58] sm:$0xff]
    %v1216 = vld [vmem:[#allocation7 + $0xb60] sm:$0xff]
    %v1217 = vld [vmem:[#allocation7 + $0xb68] sm:$0xff]
    %v1218 = vld [vmem:[#allocation7 + $0xb70] sm:$0xff]
    %v1219 = vld [vmem:[#allocation7 + $0xb78] sm:$0xff]
    %v1220 = vld [vmem:[#allocation7 + $0xb80] sm:$0xff]
    %v1221 = vld [vmem:[#allocation7 + $0xb88] sm:$0xff]
    %v1222 = vld [vmem:[#allocation7 + $0xb90] sm:$0xff]
    %v1223 = vld [vmem:[#allocation7 + $0xb98] sm:$0xff]
    %v1224 = vld [vmem:[#allocation7 + $0xba0] sm:$0xff]
    %v1225 = vld [vmem:[#allocation7 + $0xba8] sm:$0xff]
    %v1226 = vld [vmem:[#allocation7 + $0xbb0] sm:$0xff]
    %v1227 = vld [vmem:[#allocation7 + $0xbb8] sm:$0xff]
    %v1228 = vld [vmem:[#allocation7 + $0xbc0] sm:$0xff]
    %v1229 = vld [vmem:[#allocation7 + $0xbc8] sm:$0xff]
    %v1230 = vld [vmem:[#allocation7 + $0xbd0] sm:$0xff]
    %v1231 = vld [vmem:[#allocation7 + $0xbd8] sm:$0xff]
    %v1232 = vld [vmem:[#allocation7 + $0xbe0] sm:$0xff]
    %v1233 = vld [vmem:[#allocation7 + $0xbe8] sm:$0xff]
    %v1234 = vld [vmem:[#allocation7 + $0xbf0] sm:$0xff]
    %v1235 = vld [vmem:[#allocation7 + $0xbf8] sm:$0xff]
    %v1236 = vld [vmem:[#allocation7 + $0xc00] sm:$0xff]
    %v1237 = vld [vmem:[#allocation7 + $0xc08] sm:$0xff]
    %v1238 = vld [vmem:[#allocation7 + $0xc10] sm:$0xff]
    %v1239 = vld [vmem:[#allocation7 + $0xc18] sm:$0xff]
    %v1240 = vld [vmem:[#allocation7 + $0xc20] sm:$0xff]
    %v1241 = vld [vmem:[#allocation7 + $0xc28] sm:$0xff]
    %v1242 = vld [vmem:[#allocation7 + $0xc30] sm:$0xff]
    %v1243 = vld [vmem:[#allocation7 + $0xc38] sm:$0xff]
    %v1244 = vld [vmem:[#allocation7 + $0xc40] sm:$0xff]
    %v1245 = vld [vmem:[#allocation7 + $0xc48] sm:$0xff]
    %v1246 = vld [vmem:[#allocation7 + $0xc50] sm:$0xff]
    %v1247 = vld [vmem:[#allocation7 + $0xc58] sm:$0xff]
    %v1248 = vld [vmem:[#allocation7 + $0xc60] sm:$0xff]
    %v1249 = vld [vmem:[#allocation7 + $0xc68] sm:$0xff]
    %v1250 = vld [vmem:[#allocation7 + $0xc70] sm:$0xff]
    %v1251 = vld [vmem:[#allocation7 + $0xc78] sm:$0xff]
    %v1252 = vld [vmem:[#allocation7 + $0xc80] sm:$0xff]
    %v1253 = vld [vmem:[#allocation7 + $0xc88] sm:$0xff]
    %v1254 = vld [vmem:[#allocation7 + $0xc90] sm:$0xff]
    %v1255 = vld [vmem:[#allocation7 + $0xc98] sm:$0xff]
    %v1256 = vld [vmem:[#allocation7 + $0xca0] sm:$0xff]
    %v1257 = vld [vmem:[#allocation7 + $0xca8] sm:$0xff]
    %v1258 = vld [vmem:[#allocation7 + $0xcb0] sm:$0xff]
    %v1259 = vld [vmem:[#allocation7 + $0xcb8] sm:$0xff]
    %v1260 = vld [vmem:[#allocation7 + $0xcc0] sm:$0xff]
    %v1261 = vld [vmem:[#allocation7 + $0xcc8] sm:$0xff]
    %v1262 = vld [vmem:[#allocation7 + $0xcd0] sm:$0xff]
    %v1263 = vld [vmem:[#allocation7 + $0xcd8] sm:$0xff]
    %v1264 = vld [vmem:[#allocation7 + $0xce0] sm:$0xff]
    %v1265 = vld [vmem:[#allocation7 + $0xce8] sm:$0xff]
    %v1266 = vld [vmem:[#allocation7 + $0xcf0] sm:$0xff]
    %v1267 = vld [vmem:[#allocation7 + $0xcf8] sm:$0xff]
    %v1268 = vld [vmem:[#allocation7 + $0xd00] sm:$0xff]
    %v1269 = vld [vmem:[#allocation7 + $0xd08] sm:$0xff]
    %v1270 = vld [vmem:[#allocation7 + $0xd10] sm:$0xff]
    %v1271 = vld [vmem:[#allocation7 + $0xd18] sm:$0xff]
    %v1272 = vld [vmem:[#allocation7 + $0xd20] sm:$0xff]
    %v1273 = vld [vmem:[#allocation7 + $0xd28] sm:$0xff]
    %v1274 = vld [vmem:[#allocation7 + $0xd30] sm:$0xff]
    %v1275 = vld [vmem:[#allocation7 + $0xd38] sm:$0xff]
    %v1276 = vld [vmem:[#allocation7 + $0xd40] sm:$0xff]
    %v1277 = vld [vmem:[#allocation7 + $0xd48] sm:$0xff]
    %v1278 = vld [vmem:[#allocation7 + $0xd50] sm:$0xff]
    %v1279 = vld [vmem:[#allocation7 + $0xd58] sm:$0xff]
    %v1280 = vld [vmem:[#allocation7 + $0xd60] sm:$0xff]
    %v1281 = vld [vmem:[#allocation7 + $0xd68] sm:$0xff]
    %v1282 = vld [vmem:[#allocation7 + $0xd70] sm:$0xff]
    %v1283 = vld [vmem:[#allocation7 + $0xd78] sm:$0xff]
    %v1284 = vld [vmem:[#allocation7 + $0xd80] sm:$0xff]
    %v1285 = vld [vmem:[#allocation7 + $0xd88] sm:$0xff]
    %v1286 = vld [vmem:[#allocation7 + $0xd90] sm:$0xff]
    %v1287 = vld [vmem:[#allocation7 + $0xd98] sm:$0xff]
    %v1288 = vld [vmem:[#allocation7 + $0xda0] sm:$0xff]
    %v1289 = vld [vmem:[#allocation7 + $0xda8] sm:$0xff]
    %v1290 = vld [vmem:[#allocation7 + $0xdb0] sm:$0xff]
    %v1291 = vld [vmem:[#allocation7 + $0xdb8] sm:$0xff]
    %v1292 = vld [vmem:[#allocation7 + $0xdc0] sm:$0xff]
    %v1293 = vld [vmem:[#allocation7 + $0xdc8] sm:$0xff]
    %v1294 = vld [vmem:[#allocation7 + $0xdd0] sm:$0xff]
    %v1295 = vld [vmem:[#allocation7 + $0xdd8] sm:$0xff]
    %v1296 = vld [vmem:[#allocation7 + $0xde0] sm:$0xff]
    %v1297 = vld [vmem:[#allocation7 + $0xde8] sm:$0xff]
    %v1298 = vld [vmem:[#allocation7 + $0xdf0] sm:$0xff]
    %v1299 = vld [vmem:[#allocation7 + $0xdf8] sm:$0xff]
    %v1300 = vld [vmem:[#allocation7 + $0xe00] sm:$0xff]
    %v1301 = vld [vmem:[#allocation7 + $0xe08] sm:$0xff]
    %v1302 = vld [vmem:[#allocation7 + $0xe10] sm:$0xff]
    %v1303 = vld [vmem:[#allocation7 + $0xe18] sm:$0xff]
    %v1304 = vld [vmem:[#allocation7 + $0xe20] sm:$0xff]
    %v1305 = vld [vmem:[#allocation7 + $0xe28] sm:$0xff]
    %v1306 = vld [vmem:[#allocation7 + $0xe30] sm:$0xff]
    %v1307 = vld [vmem:[#allocation7 + $0xe38] sm:$0xff]
    %v1308 = vld [vmem:[#allocation7 + $0xe40] sm:$0xff]
    %v1309 = vld [vmem:[#allocation7 + $0xe48] sm:$0xff]
    %v1310 = vld [vmem:[#allocation7 + $0xe50] sm:$0xff]
    %v1311 = vld [vmem:[#allocation7 + $0xe58] sm:$0xff]
    %v1312 = vld [vmem:[#allocation7 + $0xe60] sm:$0xff]
    %v1313 = vld [vmem:[#allocation7 + $0xe68] sm:$0xff]
    %v1314 = vld [vmem:[#allocation7 + $0xe70] sm:$0xff]
    %v1315 = vld [vmem:[#allocation7 + $0xe78] sm:$0xff]
    %v1316 = vld [vmem:[#allocation7 + $0xe80] sm:$0xff]
    %v1317 = vld [vmem:[#allocation7 + $0xe88] sm:$0xff]
    %v1318 = vld [vmem:[#allocation7 + $0xe90] sm:$0xff]
    %v1319 = vld [vmem:[#allocation7 + $0xe98] sm:$0xff]
    %v1320 = vld [vmem:[#allocation7 + $0xea0] sm:$0xff]
    %v1321 = vld [vmem:[#allocation7 + $0xea8] sm:$0xff]
    %v1322 = vld [vmem:[#allocation7 + $0xeb0] sm:$0xff]
    %v1323 = vld [vmem:[#allocation7 + $0xeb8] sm:$0xff]
    %v1324 = vld [vmem:[#allocation7 + $0xec0] sm:$0xff]
    %v1325 = vld [vmem:[#allocation7 + $0xec8] sm:$0xff]
    %v1326 = vld [vmem:[#allocation7 + $0xed0] sm:$0xff]
    %v1327 = vld [vmem:[#allocation7 + $0xed8] sm:$0xff]
    %v1328 = vld [vmem:[#allocation7 + $0xee0] sm:$0xff]
    %v1329 = vld [vmem:[#allocation7 + $0xee8] sm:$0xff]
    %v1330 = vld [vmem:[#allocation7 + $0xef0] sm:$0xff]
    %v1331 = vld [vmem:[#allocation7 + $0xef8] sm:$0xff]
    %v1332 = vld [vmem:[#allocation7 + $0xf00] sm:$0xff]
    %v1333 = vld [vmem:[#allocation7 + $0xf08] sm:$0xff]
    %v1334 = vld [vmem:[#allocation7 + $0xf10] sm:$0xff]
    %v1335 = vld [vmem:[#allocation7 + $0xf18] sm:$0xff]
    %v1336 = vld [vmem:[#allocation7 + $0xf20] sm:$0xff]
    %v1337 = vld [vmem:[#allocation7 + $0xf28] sm:$0xff]
    %v1338 = vld [vmem:[#allocation7 + $0xf30] sm:$0xff]
    %v1339 = vld [vmem:[#allocation7 + $0xf38] sm:$0xff]
    %v1340 = vld [vmem:[#allocation7 + $0xf40] sm:$0xff]
    %v1341 = vld [vmem:[#allocation7 + $0xf48] sm:$0xff]
    %v1342 = vld [vmem:[#allocation7 + $0xf50] sm:$0xff]
    %v1343 = vld [vmem:[#allocation7 + $0xf58] sm:$0xff]
    %v1344 = vld [vmem:[#allocation7 + $0xf60] sm:$0xff]
    %v1345 = vld [vmem:[#allocation7 + $0xf68] sm:$0xff]
    %v1346 = vld [vmem:[#allocation7 + $0xf70] sm:$0xff]
    %v1347 = vld [vmem:[#allocation7 + $0xf78] sm:$0xff]
    %v1348 = vld [vmem:[#allocation7 + $0xf80] sm:$0xff]
    %v1349 = vld [vmem:[#allocation7 + $0xf88] sm:$0xff]
    %v1350 = vld [vmem:[#allocation7 + $0xf90] sm:$0xff]
    %v1351 = vld [vmem:[#allocation7 + $0xf98] sm:$0xff]
    %v1352 = vld [vmem:[#allocation7 + $0xfa0] sm:$0xff]
    %v1353 = vld [vmem:[#allocation7 + $0xfa8] sm:$0xff]
    %v1354 = vld [vmem:[#allocation7 + $0xfb0] sm:$0xff]
    %v1355 = vld [vmem:[#allocation7 + $0xfb8] sm:$0xff]
    %v1356 = vld [vmem:[#allocation7 + $0xfc0] sm:$0xff]
    %v1357 = vld [vmem:[#allocation7 + $0xfc8] sm:$0xff]
    %v1358 = vld [vmem:[#allocation7 + $0xfd0] sm:$0xff]
    %v1359 = vld [vmem:[#allocation7 + $0xfd8] sm:$0xff]
    %v1360 = vld [vmem:[#allocation7 + $0xfe0] sm:$0xff]
    %v1361 = vld [vmem:[#allocation7 + $0xfe8] sm:$0xff]
    %v1362 = vld [vmem:[#allocation7 + $0xff0] sm:$0xff]
    %v1363 = vld [vmem:[#allocation7 + $0xff8] sm:$0xff]
    %v1364 = vld [vmem:[#allocation8] sm:$0xf]
    %v1365 = vld [vmem:[#allocation8 + $0x4] sm:$0xf]
    %v1368 = vlaneseq
    %v1369 = vshrl.u32 %v1368, 7
    %v1370 = vsub.s32 0, %v1369
    %v1371 = vrot.slane %v1364, %v1370
    %v1372 = vlaneseq
    %v1373 = vshrl.u32 %v1372, 7
    %v1374 = vsub.s32 1, %v1373
    %v1375 = vrot.slane %v1364, %v1374
    %v1376 = vlaneseq
    %v1377 = vshrl.u32 %v1376, 7
    %v1378 = vsub.s32 2, %v1377
    %v1379 = vrot.slane %v1364, %v1378
    %v1380 = vlaneseq
    %v1381 = vshrl.u32 %v1380, 7
    %v1382 = vsub.s32 3, %v1381
    %v1383 = vrot.slane %v1364, %v1382
    %v1384 = vlaneseq
    %v1385 = vshrl.u32 %v1384, 7
    %v1386 = vsub.s32 0, %v1385
    %v1387 = vrot.slane %v1365, %v1386
    %v1388 = vlaneseq
    %v1389 = vshrl.u32 %v1388, 7
    %v1390 = vsub.s32 1, %v1389
    %v1391 = vrot.slane %v1365, %v1390
    %v1392 = vlaneseq
    %v1393 = vshrl.u32 %v1392, 7
    %v1394 = vsub.s32 2, %v1393
    %v1395 = vrot.slane %v1365, %v1394
    %v1396 = vlaneseq
    %v1397 = vshrl.u32 %v1396, 7
    %v1398 = vsub.s32 3, %v1397
    %v1399 = vrot.slane %v1365, %v1398
    %v1664 = vunpack.c.l.b16 %v852
    %v1665 = vunpack.c.h.b16 %v852
    %v1666 = vunpack.c.l.b16 %v853
    %v1667 = vunpack.c.h.b16 %v853
    %v1668 = vunpack.c.l.b16 %v854
    %v1669 = vunpack.c.h.b16 %v854
    %v1670 = vunpack.c.l.b16 %v855
    %v1671 = vunpack.c.h.b16 %v855
    %v1672 = vunpack.c.l.b16 %v856
    %v1673 = vunpack.c.h.b16 %v856
    %v1674 = vunpack.c.l.b16 %v857
    %v1675 = vunpack.c.h.b16 %v857
    %v1676 = vunpack.c.l.b16 %v858
    %v1677 = vunpack.c.h.b16 %v858
    %v1678 = vunpack.c.l.b16 %v859
    %v1679 = vunpack.c.h.b16 %v859
    %v1680 = vunpack.c.l.b16 %v860
    %v1681 = vunpack.c.h.b16 %v860
    %v1682 = vunpack.c.l.b16 %v861
    %v1683 = vunpack.c.h.b16 %v861
    %v1684 = vunpack.c.l.b16 %v862
    %v1685 = vunpack.c.h.b16 %v862
    %v1686 = vunpack.c.l.b16 %v863
    %v1687 = vunpack.c.h.b16 %v863
    %v1688 = vunpack.c.l.b16 %v864
    %v1689 = vunpack.c.h.b16 %v864
    %v1690 = vunpack.c.l.b16 %v865
    %v1691 = vunpack.c.h.b16 %v865
    %v1692 = vunpack.c.l.b16 %v866
    %v1693 = vunpack.c.h.b16 %v866
    %v1694 = vunpack.c.l.b16 %v867
    %v1695 = vunpack.c.h.b16 %v867
    %v1696 = vunpack.c.l.b16 %v868
    %v1697 = vunpack.c.h.b16 %v868
    %v1698 = vunpack.c.l.b16 %v869
    %v1699 = vunpack.c.h.b16 %v869
    %v1700 = vunpack.c.l.b16 %v870
    %v1701 = vunpack.c.h.b16 %v870
    %v1702 = vunpack.c.l.b16 %v871
    %v1703 = vunpack.c.h.b16 %v871
    %v1704 = vunpack.c.l.b16 %v872
    %v1705 = vunpack.c.h.b16 %v872
    %v1706 = vunpack.c.l.b16 %v873
    %v1707 = vunpack.c.h.b16 %v873
    %v1708 = vunpack.c.l.b16 %v874
    %v1709 = vunpack.c.h.b16 %v874
    %v1710 = vunpack.c.l.b16 %v875
    %v1711 = vunpack.c.h.b16 %v875
    %v1712 = vunpack.c.l.b16 %v876
    %v1713 = vunpack.c.h.b16 %v876
    %v1714 = vunpack.c.l.b16 %v877
    %v1715 = vunpack.c.h.b16 %v877
    %v1716 = vunpack.c.l.b16 %v878
    %v1717 = vunpack.c.h.b16 %v878
    %v1718 = vunpack.c.l.b16 %v879
    %v1719 = vunpack.c.h.b16 %v879
    %v1720 = vunpack.c.l.b16 %v880
    %v1721 = vunpack.c.h.b16 %v880
    %v1722 = vunpack.c.l.b16 %v881
    %v1723 = vunpack.c.h.b16 %v881
    %v1724 = vunpack.c.l.b16 %v882
    %v1725 = vunpack.c.h.b16 %v882
    %v1726 = vunpack.c.l.b16 %v883
    %v1727 = vunpack.c.h.b16 %v883
    %v1728 = vunpack.c.l.b16 %v884
    %v1729 = vunpack.c.h.b16 %v884
    %v1730 = vunpack.c.l.b16 %v885
    %v1731 = vunpack.c.h.b16 %v885
    %v1732 = vunpack.c.l.b16 %v886
    %v1733 = vunpack.c.h.b16 %v886
    %v1734 = vunpack.c.l.b16 %v887
    %v1735 = vunpack.c.h.b16 %v887
    %v1736 = vunpack.c.l.b16 %v888
    %v1737 = vunpack.c.h.b16 %v888
    %v1738 = vunpack.c.l.b16 %v889
    %v1739 = vunpack.c.h.b16 %v889
    %v1740 = vunpack.c.l.b16 %v890
    %v1741 = vunpack.c.h.b16 %v890
    %v1742 = vunpack.c.l.b16 %v891
    %v1743 = vunpack.c.h.b16 %v891
    %v1744 = vunpack.c.l.b16 %v892
    %v1745 = vunpack.c.h.b16 %v892
    %v1746 = vunpack.c.l.b16 %v893
    %v1747 = vunpack.c.h.b16 %v893
    %v1748 = vunpack.c.l.b16 %v894
    %v1749 = vunpack.c.h.b16 %v894
    %v1750 = vunpack.c.l.b16 %v895
    %v1751 = vunpack.c.h.b16 %v895
    %v1752 = vunpack.c.l.b16 %v896
    %v1753 = vunpack.c.h.b16 %v896
    %v1754 = vunpack.c.l.b16 %v897
    %v1755 = vunpack.c.h.b16 %v897
    %v1756 = vunpack.c.l.b16 %v898
    %v1757 = vunpack.c.h.b16 %v898
    %v1758 = vunpack.c.l.b16 %v899
    %v1759 = vunpack.c.h.b16 %v899
    %v1760 = vunpack.c.l.b16 %v900
    %v1761 = vunpack.c.h.b16 %v900
    %v1762 = vunpack.c.l.b16 %v901
    %v1763 = vunpack.c.h.b16 %v901
    %v1764 = vunpack.c.l.b16 %v902
    %v1765 = vunpack.c.h.b16 %v902
    %v1766 = vunpack.c.l.b16 %v903
    %v1767 = vunpack.c.h.b16 %v903
    %v1768 = vunpack.c.l.b16 %v904
    %v1769 = vunpack.c.h.b16 %v904
    %v1770 = vunpack.c.l.b16 %v905
    %v1771 = vunpack.c.h.b16 %v905
    %v1772 = vunpack.c.l.b16 %v906
    %v1773 = vunpack.c.h.b16 %v906
    %v1774 = vunpack.c.l.b16 %v907
    %v1775 = vunpack.c.h.b16 %v907
    %v1776 = vunpack.c.l.b16 %v908
    %v1777 = vunpack.c.h.b16 %v908
    %v1778 = vunpack.c.l.b16 %v909
    %v1779 = vunpack.c.h.b16 %v909
    %v1780 = vunpack.c.l.b16 %v910
    %v1781 = vunpack.c.h.b16 %v910
    %v1782 = vunpack.c.l.b16 %v911
    %v1783 = vunpack.c.h.b16 %v911
    %v1784 = vunpack.c.l.b16 %v912
    %v1785 = vunpack.c.h.b16 %v912
    %v1786 = vunpack.c.l.b16 %v913
    %v1787 = vunpack.c.h.b16 %v913
    %v1788 = vunpack.c.l.b16 %v914
    %v1789 = vunpack.c.h.b16 %v914
    %v1790 = vunpack.c.l.b16 %v915
    %v1791 = vunpack.c.h.b16 %v915
    %v1792 = vunpack.c.l.b16 %v916
    %v1793 = vunpack.c.h.b16 %v916
    %v1794 = vunpack.c.l.b16 %v917
    %v1795 = vunpack.c.h.b16 %v917
    %v1796 = vunpack.c.l.b16 %v918
    %v1797 = vunpack.c.h.b16 %v918
    %v1798 = vunpack.c.l.b16 %v919
    %v1799 = vunpack.c.h.b16 %v919
    %v1800 = vunpack.c.l.b16 %v920
    %v1801 = vunpack.c.h.b16 %v920
    %v1802 = vunpack.c.l.b16 %v921
    %v1803 = vunpack.c.h.b16 %v921
    %v1804 = vunpack.c.l.b16 %v922
    %v1805 = vunpack.c.h.b16 %v922
    %v1806 = vunpack.c.l.b16 %v923
    %v1807 = vunpack.c.h.b16 %v923
    %v1808 = vunpack.c.l.b16 %v924
    %v1809 = vunpack.c.h.b16 %v924
    %v1810 = vunpack.c.l.b16 %v925
    %v1811 = vunpack.c.h.b16 %v925
    %v1812 = vunpack.c.l.b16 %v926
    %v1813 = vunpack.c.h.b16 %v926
    %v1814 = vunpack.c.l.b16 %v927
    %v1815 = vunpack.c.h.b16 %v927
    %v1816 = vunpack.c.l.b16 %v928
    %v1817 = vunpack.c.h.b16 %v928
    %v1818 = vunpack.c.l.b16 %v929
    %v1819 = vunpack.c.h.b16 %v929
    %v1820 = vunpack.c.l.b16 %v930
    %v1821 = vunpack.c.h.b16 %v930
    %v1822 = vunpack.c.l.b16 %v931
    %v1823 = vunpack.c.h.b16 %v931
    %v1824 = vunpack.c.l.b16 %v932
    %v1825 = vunpack.c.h.b16 %v932
    %v1826 = vunpack.c.l.b16 %v933
    %v1827 = vunpack.c.h.b16 %v933
    %v1828 = vunpack.c.l.b16 %v934
    %v1829 = vunpack.c.h.b16 %v934
    %v1830 = vunpack.c.l.b16 %v935
    %v1831 = vunpack.c.h.b16 %v935
    %v1832 = vunpack.c.l.b16 %v936
    %v1833 = vunpack.c.h.b16 %v936
    %v1834 = vunpack.c.l.b16 %v937
    %v1835 = vunpack.c.h.b16 %v937
    %v1836 = vunpack.c.l.b16 %v938
    %v1837 = vunpack.c.h.b16 %v938
    %v1838 = vunpack.c.l.b16 %v939
    %v1839 = vunpack.c.h.b16 %v939
    %v1840 = vunpack.c.l.b16 %v940
    %v1841 = vunpack.c.h.b16 %v940
    %v1842 = vunpack.c.l.b16 %v941
    %v1843 = vunpack.c.h.b16 %v941
    %v1844 = vunpack.c.l.b16 %v942
    %v1845 = vunpack.c.h.b16 %v942
    %v1846 = vunpack.c.l.b16 %v943
    %v1847 = vunpack.c.h.b16 %v943
    %v1848 = vunpack.c.l.b16 %v944
    %v1849 = vunpack.c.h.b16 %v944
    %v1850 = vunpack.c.l.b16 %v945
    %v1851 = vunpack.c.h.b16 %v945
    %v1852 = vunpack.c.l.b16 %v946
    %v1853 = vunpack.c.h.b16 %v946
    %v1854 = vunpack.c.l.b16 %v947
    %v1855 = vunpack.c.h.b16 %v947
    %v1856 = vunpack.c.l.b16 %v948
    %v1857 = vunpack.c.h.b16 %v948
    %v1858 = vunpack.c.l.b16 %v949
    %v1859 = vunpack.c.h.b16 %v949
    %v1860 = vunpack.c.l.b16 %v950
    %v1861 = vunpack.c.h.b16 %v950
    %v1862 = vunpack.c.l.b16 %v951
    %v1863 = vunpack.c.h.b16 %v951
    %v1864 = vunpack.c.l.b16 %v952
    %v1865 = vunpack.c.h.b16 %v952
    %v1866 = vunpack.c.l.b16 %v953
    %v1867 = vunpack.c.h.b16 %v953
    %v1868 = vunpack.c.l.b16 %v954
    %v1869 = vunpack.c.h.b16 %v954
    %v1870 = vunpack.c.l.b16 %v955
    %v1871 = vunpack.c.h.b16 %v955
    %v1872 = vunpack.c.l.b16 %v956
    %v1873 = vunpack.c.h.b16 %v956
    %v1874 = vunpack.c.l.b16 %v957
    %v1875 = vunpack.c.h.b16 %v957
    %v1876 = vunpack.c.l.b16 %v958
    %v1877 = vunpack.c.h.b16 %v958
    %v1878 = vunpack.c.l.b16 %v959
    %v1879 = vunpack.c.h.b16 %v959
    %v1880 = vunpack.c.l.b16 %v960
    %v1881 = vunpack.c.h.b16 %v960
    %v1882 = vunpack.c.l.b16 %v961
    %v1883 = vunpack.c.h.b16 %v961
    %v1884 = vunpack.c.l.b16 %v962
    %v1885 = vunpack.c.h.b16 %v962
    %v1886 = vunpack.c.l.b16 %v963
    %v1887 = vunpack.c.h.b16 %v963
    %v1888 = vunpack.c.l.b16 %v964
    %v1889 = vunpack.c.h.b16 %v964
    %v1890 = vunpack.c.l.b16 %v965
    %v1891 = vunpack.c.h.b16 %v965
    %v1892 = vunpack.c.l.b16 %v966
    %v1893 = vunpack.c.h.b16 %v966
    %v1894 = vunpack.c.l.b16 %v967
    %v1895 = vunpack.c.h.b16 %v967
    %v1896 = vunpack.c.l.b16 %v968
    %v1897 = vunpack.c.h.b16 %v968
    %v1898 = vunpack.c.l.b16 %v969
    %v1899 = vunpack.c.h.b16 %v969
    %v1900 = vunpack.c.l.b16 %v970
    %v1901 = vunpack.c.h.b16 %v970
    %v1902 = vunpack.c.l.b16 %v971
    %v1903 = vunpack.c.h.b16 %v971
    %v1904 = vunpack.c.l.b16 %v972
    %v1905 = vunpack.c.h.b16 %v972
    %v1906 = vunpack.c.l.b16 %v973
    %v1907 = vunpack.c.h.b16 %v973
    %v1908 = vunpack.c.l.b16 %v974
    %v1909 = vunpack.c.h.b16 %v974
    %v1910 = vunpack.c.l.b16 %v975
    %v1911 = vunpack.c.h.b16 %v975
    %v1912 = vunpack.c.l.b16 %v976
    %v1913 = vunpack.c.h.b16 %v976
    %v1914 = vunpack.c.l.b16 %v977
    %v1915 = vunpack.c.h.b16 %v977
    %v1916 = vunpack.c.l.b16 %v978
    %v1917 = vunpack.c.h.b16 %v978
    %v1918 = vunpack.c.l.b16 %v979
    %v1919 = vunpack.c.h.b16 %v979
    %v1920 = vunpack.c.l.b16 %v980
    %v1921 = vunpack.c.h.b16 %v980
    %v1922 = vunpack.c.l.b16 %v981
    %v1923 = vunpack.c.h.b16 %v981
    %v1924 = vunpack.c.l.b16 %v982
    %v1925 = vunpack.c.h.b16 %v982
    %v1926 = vunpack.c.l.b16 %v983
    %v1927 = vunpack.c.h.b16 %v983
    %v1928 = vunpack.c.l.b16 %v984
    %v1929 = vunpack.c.h.b16 %v984
    %v1930 = vunpack.c.l.b16 %v985
    %v1931 = vunpack.c.h.b16 %v985
    %v1932 = vunpack.c.l.b16 %v986
    %v1933 = vunpack.c.h.b16 %v986
    %v1934 = vunpack.c.l.b16 %v987
    %v1935 = vunpack.c.h.b16 %v987
    %v1936 = vunpack.c.l.b16 %v988
    %v1937 = vunpack.c.h.b16 %v988
    %v1938 = vunpack.c.l.b16 %v989
    %v1939 = vunpack.c.h.b16 %v989
    %v1940 = vunpack.c.l.b16 %v990
    %v1941 = vunpack.c.h.b16 %v990
    %v1942 = vunpack.c.l.b16 %v991
    %v1943 = vunpack.c.h.b16 %v991
    %v1944 = vunpack.c.l.b16 %v992
    %v1945 = vunpack.c.h.b16 %v992
    %v1946 = vunpack.c.l.b16 %v993
    %v1947 = vunpack.c.h.b16 %v993
    %v1948 = vunpack.c.l.b16 %v994
    %v1949 = vunpack.c.h.b16 %v994
    %v1950 = vunpack.c.l.b16 %v995
    %v1951 = vunpack.c.h.b16 %v995
    %v1952 = vunpack.c.l.b16 %v996
    %v1953 = vunpack.c.h.b16 %v996
    %v1954 = vunpack.c.l.b16 %v997
    %v1955 = vunpack.c.h.b16 %v997
    %v1956 = vunpack.c.l.b16 %v998
    %v1957 = vunpack.c.h.b16 %v998
    %v1958 = vunpack.c.l.b16 %v999
    %v1959 = vunpack.c.h.b16 %v999
    %v1960 = vunpack.c.l.b16 %v1000
    %v1961 = vunpack.c.h.b16 %v1000
    %v1962 = vunpack.c.l.b16 %v1001
    %v1963 = vunpack.c.h.b16 %v1001
    %v1964 = vunpack.c.l.b16 %v1002
    %v1965 = vunpack.c.h.b16 %v1002
    %v1966 = vunpack.c.l.b16 %v1003
    %v1967 = vunpack.c.h.b16 %v1003
    %v1968 = vunpack.c.l.b16 %v1004
    %v1969 = vunpack.c.h.b16 %v1004
    %v1970 = vunpack.c.l.b16 %v1005
    %v1971 = vunpack.c.h.b16 %v1005
    %v1972 = vunpack.c.l.b16 %v1006
    %v1973 = vunpack.c.h.b16 %v1006
    %v1974 = vunpack.c.l.b16 %v1007
    %v1975 = vunpack.c.h.b16 %v1007
    %v1976 = vunpack.c.l.b16 %v1008
    %v1977 = vunpack.c.h.b16 %v1008
    %v1978 = vunpack.c.l.b16 %v1009
    %v1979 = vunpack.c.h.b16 %v1009
    %v1980 = vunpack.c.l.b16 %v1010
    %v1981 = vunpack.c.h.b16 %v1010
    %v1982 = vunpack.c.l.b16 %v1011
    %v1983 = vunpack.c.h.b16 %v1011
    %v1984 = vunpack.c.l.b16 %v1012
    %v1985 = vunpack.c.h.b16 %v1012
    %v1986 = vunpack.c.l.b16 %v1013
    %v1987 = vunpack.c.h.b16 %v1013
    %v1988 = vunpack.c.l.b16 %v1014
    %v1989 = vunpack.c.h.b16 %v1014
    %v1990 = vunpack.c.l.b16 %v1015
    %v1991 = vunpack.c.h.b16 %v1015
    %v1992 = vunpack.c.l.b16 %v1016
    %v1993 = vunpack.c.h.b16 %v1016
    %v1994 = vunpack.c.l.b16 %v1017
    %v1995 = vunpack.c.h.b16 %v1017
    %v1996 = vunpack.c.l.b16 %v1018
    %v1997 = vunpack.c.h.b16 %v1018
    %v1998 = vunpack.c.l.b16 %v1019
    %v1999 = vunpack.c.h.b16 %v1019
    %v2000 = vunpack.c.l.b16 %v1020
    %v2001 = vunpack.c.h.b16 %v1020
    %v2002 = vunpack.c.l.b16 %v1021
    %v2003 = vunpack.c.h.b16 %v1021
    %v2004 = vunpack.c.l.b16 %v1022
    %v2005 = vunpack.c.h.b16 %v1022
    %v2006 = vunpack.c.l.b16 %v1023
    %v2007 = vunpack.c.h.b16 %v1023
    %v2008 = vunpack.c.l.b16 %v1024
    %v2009 = vunpack.c.h.b16 %v1024
    %v2010 = vunpack.c.l.b16 %v1025
    %v2011 = vunpack.c.h.b16 %v1025
    %v2012 = vunpack.c.l.b16 %v1026
    %v2013 = vunpack.c.h.b16 %v1026
    %v2014 = vunpack.c.l.b16 %v1027
    %v2015 = vunpack.c.h.b16 %v1027
    %v2016 = vunpack.c.l.b16 %v1028
    %v2017 = vunpack.c.h.b16 %v1028
    %v2018 = vunpack.c.l.b16 %v1029
    %v2019 = vunpack.c.h.b16 %v1029
    %v2020 = vunpack.c.l.b16 %v1030
    %v2021 = vunpack.c.h.b16 %v1030
    %v2022 = vunpack.c.l.b16 %v1031
    %v2023 = vunpack.c.h.b16 %v1031
    %v2024 = vunpack.c.l.b16 %v1032
    %v2025 = vunpack.c.h.b16 %v1032
    %v2026 = vunpack.c.l.b16 %v1033
    %v2027 = vunpack.c.h.b16 %v1033
    %v2028 = vunpack.c.l.b16 %v1034
    %v2029 = vunpack.c.h.b16 %v1034
    %v2030 = vunpack.c.l.b16 %v1035
    %v2031 = vunpack.c.h.b16 %v1035
    %v2032 = vunpack.c.l.b16 %v1036
    %v2033 = vunpack.c.h.b16 %v1036
    %v2034 = vunpack.c.l.b16 %v1037
    %v2035 = vunpack.c.h.b16 %v1037
    %v2036 = vunpack.c.l.b16 %v1038
    %v2037 = vunpack.c.h.b16 %v1038
    %v2038 = vunpack.c.l.b16 %v1039
    %v2039 = vunpack.c.h.b16 %v1039
    %v2040 = vunpack.c.l.b16 %v1040
    %v2041 = vunpack.c.h.b16 %v1040
    %v2042 = vunpack.c.l.b16 %v1041
    %v2043 = vunpack.c.h.b16 %v1041
    %v2044 = vunpack.c.l.b16 %v1042
    %v2045 = vunpack.c.h.b16 %v1042
    %v2046 = vunpack.c.l.b16 %v1043
    %v2047 = vunpack.c.h.b16 %v1043
    %v2048 = vunpack.c.l.b16 %v1044
    %v2049 = vunpack.c.h.b16 %v1044
    %v2050 = vunpack.c.l.b16 %v1045
    %v2051 = vunpack.c.h.b16 %v1045
    %v2052 = vunpack.c.l.b16 %v1046
    %v2053 = vunpack.c.h.b16 %v1046
    %v2054 = vunpack.c.l.b16 %v1047
    %v2055 = vunpack.c.h.b16 %v1047
    %v2056 = vunpack.c.l.b16 %v1048
    %v2057 = vunpack.c.h.b16 %v1048
    %v2058 = vunpack.c.l.b16 %v1049
    %v2059 = vunpack.c.h.b16 %v1049
    %v2060 = vunpack.c.l.b16 %v1050
    %v2061 = vunpack.c.h.b16 %v1050
    %v2062 = vunpack.c.l.b16 %v1051
    %v2063 = vunpack.c.h.b16 %v1051
    %v2064 = vunpack.c.l.b16 %v1052
    %v2065 = vunpack.c.h.b16 %v1052
    %v2066 = vunpack.c.l.b16 %v1053
    %v2067 = vunpack.c.h.b16 %v1053
    %v2068 = vunpack.c.l.b16 %v1054
    %v2069 = vunpack.c.h.b16 %v1054
    %v2070 = vunpack.c.l.b16 %v1055
    %v2071 = vunpack.c.h.b16 %v1055
    %v2072 = vunpack.c.l.b16 %v1056
    %v2073 = vunpack.c.h.b16 %v1056
    %v2074 = vunpack.c.l.b16 %v1057
    %v2075 = vunpack.c.h.b16 %v1057
    %v2076 = vunpack.c.l.b16 %v1058
    %v2077 = vunpack.c.h.b16 %v1058
    %v2078 = vunpack.c.l.b16 %v1059
    %v2079 = vunpack.c.h.b16 %v1059
    %v2080 = vunpack.c.l.b16 %v1060
    %v2081 = vunpack.c.h.b16 %v1060
    %v2082 = vunpack.c.l.b16 %v1061
    %v2083 = vunpack.c.h.b16 %v1061
    %v2084 = vunpack.c.l.b16 %v1062
    %v2085 = vunpack.c.h.b16 %v1062
    %v2086 = vunpack.c.l.b16 %v1063
    %v2087 = vunpack.c.h.b16 %v1063
    %v2088 = vunpack.c.l.b16 %v1064
    %v2089 = vunpack.c.h.b16 %v1064
    %v2090 = vunpack.c.l.b16 %v1065
    %v2091 = vunpack.c.h.b16 %v1065
    %v2092 = vunpack.c.l.b16 %v1066
    %v2093 = vunpack.c.h.b16 %v1066
    %v2094 = vunpack.c.l.b16 %v1067
    %v2095 = vunpack.c.h.b16 %v1067
    %v2096 = vunpack.c.l.b16 %v1068
    %v2097 = vunpack.c.h.b16 %v1068
    %v2098 = vunpack.c.l.b16 %v1069
    %v2099 = vunpack.c.h.b16 %v1069
    %v2100 = vunpack.c.l.b16 %v1070
    %v2101 = vunpack.c.h.b16 %v1070
    %v2102 = vunpack.c.l.b16 %v1071
    %v2103 = vunpack.c.h.b16 %v1071
    %v2104 = vunpack.c.l.b16 %v1072
    %v2105 = vunpack.c.h.b16 %v1072
    %v2106 = vunpack.c.l.b16 %v1073
    %v2107 = vunpack.c.h.b16 %v1073
    %v2108 = vunpack.c.l.b16 %v1074
    %v2109 = vunpack.c.h.b16 %v1074
    %v2110 = vunpack.c.l.b16 %v1075
    %v2111 = vunpack.c.h.b16 %v1075
    %v2112 = vunpack.c.l.b16 %v1076
    %v2113 = vunpack.c.h.b16 %v1076
    %v2114 = vunpack.c.l.b16 %v1077
    %v2115 = vunpack.c.h.b16 %v1077
    %v2116 = vunpack.c.l.b16 %v1078
    %v2117 = vunpack.c.h.b16 %v1078
    %v2118 = vunpack.c.l.b16 %v1079
    %v2119 = vunpack.c.h.b16 %v1079
    %v2120 = vunpack.c.l.b16 %v1080
    %v2121 = vunpack.c.h.b16 %v1080
    %v2122 = vunpack.c.l.b16 %v1081
    %v2123 = vunpack.c.h.b16 %v1081
    %v2124 = vunpack.c.l.b16 %v1082
    %v2125 = vunpack.c.h.b16 %v1082
    %v2126 = vunpack.c.l.b16 %v1083
    %v2127 = vunpack.c.h.b16 %v1083
    %v2128 = vunpack.c.l.b16 %v1084
    %v2129 = vunpack.c.h.b16 %v1084
    %v2130 = vunpack.c.l.b16 %v1085
    %v2131 = vunpack.c.h.b16 %v1085
    %v2132 = vunpack.c.l.b16 %v1086
    %v2133 = vunpack.c.h.b16 %v1086
    %v2134 = vunpack.c.l.b16 %v1087
    %v2135 = vunpack.c.h.b16 %v1087
    %v2136 = vunpack.c.l.b16 %v1088
    %v2137 = vunpack.c.h.b16 %v1088
    %v2138 = vunpack.c.l.b16 %v1089
    %v2139 = vunpack.c.h.b16 %v1089
    %v2140 = vunpack.c.l.b16 %v1090
    %v2141 = vunpack.c.h.b16 %v1090
    %v2142 = vunpack.c.l.b16 %v1091
    %v2143 = vunpack.c.h.b16 %v1091
    %v2144 = vunpack.c.l.b16 %v1092
    %v2145 = vunpack.c.h.b16 %v1092
    %v2146 = vunpack.c.l.b16 %v1093
    %v2147 = vunpack.c.h.b16 %v1093
    %v2148 = vunpack.c.l.b16 %v1094
    %v2149 = vunpack.c.h.b16 %v1094
    %v2150 = vunpack.c.l.b16 %v1095
    %v2151 = vunpack.c.h.b16 %v1095
    %v2152 = vunpack.c.l.b16 %v1096
    %v2153 = vunpack.c.h.b16 %v1096
    %v2154 = vunpack.c.l.b16 %v1097
    %v2155 = vunpack.c.h.b16 %v1097
    %v2156 = vunpack.c.l.b16 %v1098
    %v2157 = vunpack.c.h.b16 %v1098
    %v2158 = vunpack.c.l.b16 %v1099
    %v2159 = vunpack.c.h.b16 %v1099
    %v2160 = vunpack.c.l.b16 %v1100
    %v2161 = vunpack.c.h.b16 %v1100
    %v2162 = vunpack.c.l.b16 %v1101
    %v2163 = vunpack.c.h.b16 %v1101
    %v2164 = vunpack.c.l.b16 %v1102
    %v2165 = vunpack.c.h.b16 %v1102
    %v2166 = vunpack.c.l.b16 %v1103
    %v2167 = vunpack.c.h.b16 %v1103
    %v2168 = vunpack.c.l.b16 %v1104
    %v2169 = vunpack.c.h.b16 %v1104
    %v2170 = vunpack.c.l.b16 %v1105
    %v2171 = vunpack.c.h.b16 %v1105
    %v2172 = vunpack.c.l.b16 %v1106
    %v2173 = vunpack.c.h.b16 %v1106
    %v2174 = vunpack.c.l.b16 %v1107
    %v2175 = vunpack.c.h.b16 %v1107
    %v2176 = vpack.c.b16 %v1668, %v1664
    %v2177 = vpack.c.b16 %v1669, %v1665
    %v2178 = vpack.c.b16 %v1670, %v1666
    %v2179 = vpack.c.b16 %v1671, %v1667
    %v2180 = vpack.c.b16 %v1676, %v1672
    %v2181 = vpack.c.b16 %v1677, %v1673
    %v2182 = vpack.c.b16 %v1678, %v1674
    %v2183 = vpack.c.b16 %v1679, %v1675
    %v2184 = vpack.c.b16 %v1684, %v1680
    %v2185 = vpack.c.b16 %v1685, %v1681
    %v2186 = vpack.c.b16 %v1686, %v1682
    %v2187 = vpack.c.b16 %v1687, %v1683
    %v2188 = vpack.c.b16 %v1692, %v1688
    %v2189 = vpack.c.b16 %v1693, %v1689
    %v2190 = vpack.c.b16 %v1694, %v1690
    %v2191 = vpack.c.b16 %v1695, %v1691
    %v2192 = vpack.c.b16 %v1700, %v1696
    %v2193 = vpack.c.b16 %v1701, %v1697
    %v2194 = vpack.c.b16 %v1702, %v1698
    %v2195 = vpack.c.b16 %v1703, %v1699
    %v2196 = vpack.c.b16 %v1708, %v1704
    %v2197 = vpack.c.b16 %v1709, %v1705
    %v2198 = vpack.c.b16 %v1710, %v1706
    %v2199 = vpack.c.b16 %v1711, %v1707
    %v2200 = vpack.c.b16 %v1716, %v1712
    %v2201 = vpack.c.b16 %v1717, %v1713
    %v2202 = vpack.c.b16 %v1718, %v1714
    %v2203 = vpack.c.b16 %v1719, %v1715
    %v2204 = vpack.c.b16 %v1724, %v1720
    %v2205 = vpack.c.b16 %v1725, %v1721
    %v2206 = vpack.c.b16 %v1726, %v1722
    %v2207 = vpack.c.b16 %v1727, %v1723
    %v2208 = vpack.c.b16 %v1732, %v1728
    %v2209 = vpack.c.b16 %v1733, %v1729
    %v2210 = vpack.c.b16 %v1734, %v1730
    %v2211 = vpack.c.b16 %v1735, %v1731
    %v2212 = vpack.c.b16 %v1740, %v1736
    %v2213 = vpack.c.b16 %v1741, %v1737
    %v2214 = vpack.c.b16 %v1742, %v1738
    %v2215 = vpack.c.b16 %v1743, %v1739
    %v2216 = vpack.c.b16 %v1748, %v1744
    %v2217 = vpack.c.b16 %v1749, %v1745
    %v2218 = vpack.c.b16 %v1750, %v1746
    %v2219 = vpack.c.b16 %v1751, %v1747
    %v2220 = vpack.c.b16 %v1756, %v1752
    %v2221 = vpack.c.b16 %v1757, %v1753
    %v2222 = vpack.c.b16 %v1758, %v1754
    %v2223 = vpack.c.b16 %v1759, %v1755
    %v2224 = vpack.c.b16 %v1764, %v1760
    %v2225 = vpack.c.b16 %v1765, %v1761
    %v2226 = vpack.c.b16 %v1766, %v1762
    %v2227 = vpack.c.b16 %v1767, %v1763
    %v2228 = vpack.c.b16 %v1772, %v1768
    %v2229 = vpack.c.b16 %v1773, %v1769
    %v2230 = vpack.c.b16 %v1774, %v1770
    %v2231 = vpack.c.b16 %v1775, %v1771
    %v2232 = vpack.c.b16 %v1780, %v1776
    %v2233 = vpack.c.b16 %v1781, %v1777
    %v2234 = vpack.c.b16 %v1782, %v1778
    %v2235 = vpack.c.b16 %v1783, %v1779
    %v2236 = vpack.c.b16 %v1788, %v1784
    %v2237 = vpack.c.b16 %v1789, %v1785
    %v2238 = vpack.c.b16 %v1790, %v1786
    %v2239 = vpack.c.b16 %v1791, %v1787
    %v2240 = vpack.c.b16 %v1796, %v1792
    %v2241 = vpack.c.b16 %v1797, %v1793
    %v2242 = vpack.c.b16 %v1798, %v1794
    %v2243 = vpack.c.b16 %v1799, %v1795
    %v2244 = vpack.c.b16 %v1804, %v1800
    %v2245 = vpack.c.b16 %v1805, %v1801
    %v2246 = vpack.c.b16 %v1806, %v1802
    %v2247 = vpack.c.b16 %v1807, %v1803
    %v2248 = vpack.c.b16 %v1812, %v1808
    %v2249 = vpack.c.b16 %v1813, %v1809
    %v2250 = vpack.c.b16 %v1814, %v1810
    %v2251 = vpack.c.b16 %v1815, %v1811
    %v2252 = vpack.c.b16 %v1820, %v1816
    %v2253 = vpack.c.b16 %v1821, %v1817
    %v2254 = vpack.c.b16 %v1822, %v1818
    %v2255 = vpack.c.b16 %v1823, %v1819
    %v2256 = vpack.c.b16 %v1828, %v1824
    %v2257 = vpack.c.b16 %v1829, %v1825
    %v2258 = vpack.c.b16 %v1830, %v1826
    %v2259 = vpack.c.b16 %v1831, %v1827
    %v2260 = vpack.c.b16 %v1836, %v1832
    %v2261 = vpack.c.b16 %v1837, %v1833
    %v2262 = vpack.c.b16 %v1838, %v1834
    %v2263 = vpack.c.b16 %v1839, %v1835
    %v2264 = vpack.c.b16 %v1844, %v1840
    %v2265 = vpack.c.b16 %v1845, %v1841
    %v2266 = vpack.c.b16 %v1846, %v1842
    %v2267 = vpack.c.b16 %v1847, %v1843
    %v2268 = vpack.c.b16 %v1852, %v1848
    %v2269 = vpack.c.b16 %v1853, %v1849
    %v2270 = vpack.c.b16 %v1854, %v1850
    %v2271 = vpack.c.b16 %v1855, %v1851
    %v2272 = vpack.c.b16 %v1860, %v1856
    %v2273 = vpack.c.b16 %v1861, %v1857
    %v2274 = vpack.c.b16 %v1862, %v1858
    %v2275 = vpack.c.b16 %v1863, %v1859
    %v2276 = vpack.c.b16 %v1868, %v1864
    %v2277 = vpack.c.b16 %v1869, %v1865
    %v2278 = vpack.c.b16 %v1870, %v1866
    %v2279 = vpack.c.b16 %v1871, %v1867
    %v2280 = vpack.c.b16 %v1876, %v1872
    %v2281 = vpack.c.b16 %v1877, %v1873
    %v2282 = vpack.c.b16 %v1878, %v1874
    %v2283 = vpack.c.b16 %v1879, %v1875
    %v2284 = vpack.c.b16 %v1884, %v1880
    %v2285 = vpack.c.b16 %v1885, %v1881
    %v2286 = vpack.c.b16 %v1886, %v1882
    %v2287 = vpack.c.b16 %v1887, %v1883
    %v2288 = vpack.c.b16 %v1892, %v1888
    %v2289 = vpack.c.b16 %v1893, %v1889
    %v2290 = vpack.c.b16 %v1894, %v1890
    %v2291 = vpack.c.b16 %v1895, %v1891
    %v2292 = vpack.c.b16 %v1900, %v1896
    %v2293 = vpack.c.b16 %v1901, %v1897
    %v2294 = vpack.c.b16 %v1902, %v1898
    %v2295 = vpack.c.b16 %v1903, %v1899
    %v2296 = vpack.c.b16 %v1908, %v1904
    %v2297 = vpack.c.b16 %v1909, %v1905
    %v2298 = vpack.c.b16 %v1910, %v1906
    %v2299 = vpack.c.b16 %v1911, %v1907
    %v2300 = vpack.c.b16 %v1916, %v1912
    %v2301 = vpack.c.b16 %v1917, %v1913
    %v2302 = vpack.c.b16 %v1918, %v1914
    %v2303 = vpack.c.b16 %v1919, %v1915
    %v2304 = vpack.c.b16 %v1924, %v1920
    %v2305 = vpack.c.b16 %v1925, %v1921
    %v2306 = vpack.c.b16 %v1926, %v1922
    %v2307 = vpack.c.b16 %v1927, %v1923
    %v2308 = vpack.c.b16 %v1932, %v1928
    %v2309 = vpack.c.b16 %v1933, %v1929
    %v2310 = vpack.c.b16 %v1934, %v1930
    %v2311 = vpack.c.b16 %v1935, %v1931
    %v2312 = vpack.c.b16 %v1940, %v1936
    %v2313 = vpack.c.b16 %v1941, %v1937
    %v2314 = vpack.c.b16 %v1942, %v1938
    %v2315 = vpack.c.b16 %v1943, %v1939
    %v2316 = vpack.c.b16 %v1948, %v1944
    %v2317 = vpack.c.b16 %v1949, %v1945
    %v2318 = vpack.c.b16 %v1950, %v1946
    %v2319 = vpack.c.b16 %v1951, %v1947
    %v2320 = vpack.c.b16 %v1956, %v1952
    %v2321 = vpack.c.b16 %v1957, %v1953
    %v2322 = vpack.c.b16 %v1958, %v1954
    %v2323 = vpack.c.b16 %v1959, %v1955
    %v2324 = vpack.c.b16 %v1964, %v1960
    %v2325 = vpack.c.b16 %v1965, %v1961
    %v2326 = vpack.c.b16 %v1966, %v1962
    %v2327 = vpack.c.b16 %v1967, %v1963
    %v2328 = vpack.c.b16 %v1972, %v1968
    %v2329 = vpack.c.b16 %v1973, %v1969
    %v2330 = vpack.c.b16 %v1974, %v1970
    %v2331 = vpack.c.b16 %v1975, %v1971
    %v2332 = vpack.c.b16 %v1980, %v1976
    %v2333 = vpack.c.b16 %v1981, %v1977
    %v2334 = vpack.c.b16 %v1982, %v1978
    %v2335 = vpack.c.b16 %v1983, %v1979
    %v2336 = vpack.c.b16 %v1988, %v1984
    %v2337 = vpack.c.b16 %v1989, %v1985
    %v2338 = vpack.c.b16 %v1990, %v1986
    %v2339 = vpack.c.b16 %v1991, %v1987
    %v2340 = vpack.c.b16 %v1996, %v1992
    %v2341 = vpack.c.b16 %v1997, %v1993
    %v2342 = vpack.c.b16 %v1998, %v1994
    %v2343 = vpack.c.b16 %v1999, %v1995
    %v2344 = vpack.c.b16 %v2004, %v2000
    %v2345 = vpack.c.b16 %v2005, %v2001
    %v2346 = vpack.c.b16 %v2006, %v2002
    %v2347 = vpack.c.b16 %v2007, %v2003
    %v2348 = vpack.c.b16 %v2012, %v2008
    %v2349 = vpack.c.b16 %v2013, %v2009
    %v2350 = vpack.c.b16 %v2014, %v2010
    %v2351 = vpack.c.b16 %v2015, %v2011
    %v2352 = vpack.c.b16 %v2020, %v2016
    %v2353 = vpack.c.b16 %v2021, %v2017
    %v2354 = vpack.c.b16 %v2022, %v2018
    %v2355 = vpack.c.b16 %v2023, %v2019
    %v2356 = vpack.c.b16 %v2028, %v2024
    %v2357 = vpack.c.b16 %v2029, %v2025
    %v2358 = vpack.c.b16 %v2030, %v2026
    %v2359 = vpack.c.b16 %v2031, %v2027
    %v2360 = vpack.c.b16 %v2036, %v2032
    %v2361 = vpack.c.b16 %v2037, %v2033
    %v2362 = vpack.c.b16 %v2038, %v2034
    %v2363 = vpack.c.b16 %v2039, %v2035
    %v2364 = vpack.c.b16 %v2044, %v2040
    %v2365 = vpack.c.b16 %v2045, %v2041
    %v2366 = vpack.c.b16 %v2046, %v2042
    %v2367 = vpack.c.b16 %v2047, %v2043
    %v2368 = vpack.c.b16 %v2052, %v2048
    %v2369 = vpack.c.b16 %v2053, %v2049
    %v2370 = vpack.c.b16 %v2054, %v2050
    %v2371 = vpack.c.b16 %v2055, %v2051
    %v2372 = vpack.c.b16 %v2060, %v2056
    %v2373 = vpack.c.b16 %v2061, %v2057
    %v2374 = vpack.c.b16 %v2062, %v2058
    %v2375 = vpack.c.b16 %v2063, %v2059
    %v2376 = vpack.c.b16 %v2068, %v2064
    %v2377 = vpack.c.b16 %v2069, %v2065
    %v2378 = vpack.c.b16 %v2070, %v2066
    %v2379 = vpack.c.b16 %v2071, %v2067
    %v2380 = vpack.c.b16 %v2076, %v2072
    %v2381 = vpack.c.b16 %v2077, %v2073
    %v2382 = vpack.c.b16 %v2078, %v2074
    %v2383 = vpack.c.b16 %v2079, %v2075
    %v2384 = vpack.c.b16 %v2084, %v2080
    %v2385 = vpack.c.b16 %v2085, %v2081
    %v2386 = vpack.c.b16 %v2086, %v2082
    %v2387 = vpack.c.b16 %v2087, %v2083
    %v2388 = vpack.c.b16 %v2092, %v2088
    %v2389 = vpack.c.b16 %v2093, %v2089
    %v2390 = vpack.c.b16 %v2094, %v2090
    %v2391 = vpack.c.b16 %v2095, %v2091
    %v2392 = vpack.c.b16 %v2100, %v2096
    %v2393 = vpack.c.b16 %v2101, %v2097
    %v2394 = vpack.c.b16 %v2102, %v2098
    %v2395 = vpack.c.b16 %v2103, %v2099
    %v2396 = vpack.c.b16 %v2108, %v2104
    %v2397 = vpack.c.b16 %v2109, %v2105
    %v2398 = vpack.c.b16 %v2110, %v2106
    %v2399 = vpack.c.b16 %v2111, %v2107
    %v2400 = vpack.c.b16 %v2116, %v2112
    %v2401 = vpack.c.b16 %v2117, %v2113
    %v2402 = vpack.c.b16 %v2118, %v2114
    %v2403 = vpack.c.b16 %v2119, %v2115
    %v2404 = vpack.c.b16 %v2124, %v2120
    %v2405 = vpack.c.b16 %v2125, %v2121
    %v2406 = vpack.c.b16 %v2126, %v2122
    %v2407 = vpack.c.b16 %v2127, %v2123
    %v2408 = vpack.c.b16 %v2132, %v2128
    %v2409 = vpack.c.b16 %v2133, %v2129
    %v2410 = vpack.c.b16 %v2134, %v2130
    %v2411 = vpack.c.b16 %v2135, %v2131
    %v2412 = vpack.c.b16 %v2140, %v2136
    %v2413 = vpack.c.b16 %v2141, %v2137
    %v2414 = vpack.c.b16 %v2142, %v2138
    %v2415 = vpack.c.b16 %v2143, %v2139
    %v2416 = vpack.c.b16 %v2148, %v2144
    %v2417 = vpack.c.b16 %v2149, %v2145
    %v2418 = vpack.c.b16 %v2150, %v2146
    %v2419 = vpack.c.b16 %v2151, %v2147
    %v2420 = vpack.c.b16 %v2156, %v2152
    %v2421 = vpack.c.b16 %v2157, %v2153
    %v2422 = vpack.c.b16 %v2158, %v2154
    %v2423 = vpack.c.b16 %v2159, %v2155
    %v2424 = vpack.c.b16 %v2164, %v2160
    %v2425 = vpack.c.b16 %v2165, %v2161
    %v2426 = vpack.c.b16 %v2166, %v2162
    %v2427 = vpack.c.b16 %v2167, %v2163
    %v2428 = vpack.c.b16 %v2172, %v2168
    %v2429 = vpack.c.b16 %v2173, %v2169
    %v2430 = vpack.c.b16 %v2174, %v2170
    %v2431 = vpack.c.b16 %v2175, %v2171
    %2688 = vmatprep.subr.bf16.mxu0 %v2205
    %2689 = vmatpush1.bf16.msra.mxu0 %v2204
    %2690 = vmatprep.subr.bf16.mxu0 %v2201
    %2691 = vmatpush1.bf16.msra.mxu0 %v2200
    %2692 = vmatprep.subr.bf16.mxu0 %v2197
    %2693 = vmatpush1.bf16.msra.mxu0 %v2196
    %2694 = vmatprep.subr.bf16.mxu0 %v2193
    %2695 = vmatpush1.bf16.msra.mxu0 %v2192
    %2696 = vmatprep.subr.bf16.mxu0 %v2189
    %2697 = vmatpush1.bf16.msra.mxu0 %v2188
    %2698 = vmatprep.subr.bf16.mxu0 %v2185
    %2699 = vmatpush1.bf16.msra.mxu0 %v2184
    %2700 = vmatprep.subr.bf16.mxu0 %v2181
    %2701 = vmatpush1.bf16.msra.mxu0 %v2180
    %2702 = vmatprep.subr.bf16.mxu0 %v2177
    %2703 = vmatpush1.bf16.msra.mxu0 %v2176
    %2704 = vmatprep.subr.bf16.mxu0 %v2237
    %2705 = vmatpush2.bf16.msra.mxu0 %v2236
    %2706 = vmatprep.subr.bf16.mxu0 %v2233
    %2707 = vmatpush2.bf16.msra.mxu0 %v2232
    %2708 = vmatprep.subr.bf16.mxu0 %v2229
    %2709 = vmatpush2.bf16.msra.mxu0 %v2228
    %2710 = vmatprep.subr.bf16.mxu0 %v2225
    %2711 = vmatpush2.bf16.msra.mxu0 %v2224
    %2712 = vmatprep.subr.bf16.mxu0 %v2221
    %2713 = vmatpush2.bf16.msra.mxu0 %v2220
    %2714 = vmatprep.subr.bf16.mxu0 %v2217
    %2715 = vmatpush2.bf16.msra.mxu0 %v2216
    %2716 = vmatprep.subr.bf16.mxu0 %v2213
    %2717 = vmatpush2.bf16.msra.mxu0 %v2212
    %2718 = vmatprep.subr.bf16.mxu0 %v2209
    %2719 = vmatpush2.bf16.msra.mxu0 %v2208
    %2720 = vmatprep.mubr.bf16.mxu0 %v837
    %2721 = vmatmul.mubr.bf16.gmra.mxu0 %v836
    %v2722 = vpop.f32.mrf.mxu0
    %v2723 = vadd.f32 %v1371, %v2722
    %v2724 = vpop.f32.mrf.mxu0
    %v2725 = vadd.f32 %v1375, %v2724
    %v2726 = vpop.f32.mrf.mxu0
    %v2727 = vpop.f32.mrf.mxu0
    %2728 = vdwg.mxu0
    %2729 = vmatprep.subr.bf16.mxu0 %v2269
    %2730 = vmatpush1.bf16.msra.mxu0 %v2268
    %2731 = vmatprep.subr.bf16.mxu0 %v2265
    %2732 = vmatpush1.bf16.msra.mxu0 %v2264
    %2733 = vmatprep.subr.bf16.mxu0 %v2261
    %2734 = vmatpush1.bf16.msra.mxu0 %v2260
    %2735 = vmatprep.subr.bf16.mxu0 %v2257
    %2736 = vmatpush1.bf16.msra.mxu0 %v2256
    %2737 = vmatprep.subr.bf16.mxu0 %v2253
    %2738 = vmatpush1.bf16.msra.mxu0 %v2252
    %2739 = vmatprep.subr.bf16.mxu0 %v2249
    %2740 = vmatpush1.bf16.msra.mxu0 %v2248
    %2741 = vmatprep.subr.bf16.mxu0 %v2245
    %2742 = vmatpush1.bf16.msra.mxu0 %v2244
    %2743 = vmatprep.subr.bf16.mxu0 %v2241
    %2744 = vmatpush1.bf16.msra.mxu0 %v2240
    %2745 = vmatprep.subr.bf16.mxu0 %v2301
    %2746 = vmatpush2.bf16.msra.mxu0 %v2300
    %2747 = vmatprep.subr.bf16.mxu0 %v2297
    %2748 = vmatpush2.bf16.msra.mxu0 %v2296
    %2749 = vmatprep.subr.bf16.mxu0 %v2293
    %2750 = vmatpush2.bf16.msra.mxu0 %v2292
    %2751 = vmatprep.subr.bf16.mxu0 %v2289
    %2752 = vmatpush2.bf16.msra.mxu0 %v2288
    %2753 = vmatprep.subr.bf16.mxu0 %v2285
    %2754 = vmatpush2.bf16.msra.mxu0 %v2284
    %2755 = vmatprep.subr.bf16.mxu0 %v2281
    %2756 = vmatpush2.bf16.msra.mxu0 %v2280
    %2757 = vmatprep.subr.bf16.mxu0 %v2277
    %2758 = vmatpush2.bf16.msra.mxu0 %v2276
    %2759 = vmatprep.subr.bf16.mxu0 %v2273
    %2760 = vmatpush2.bf16.msra.mxu0 %v2272
    %2761 = vmatprep.mubr.bf16.mxu0 %v839
    %2762 = vmatmul.mubr.bf16.gmra.mxu0 %v838
    %v2763 = vpop.f32.mrf.mxu0
    %v2764 = vadd.f32 %v2723, %v2763
    %v2765 = vpop.f32.mrf.mxu0
    %v2766 = vadd.f32 %v2725, %v2765
    %v2767 = vpop.f32.mrf.mxu0
    %v2768 = vpop.f32.mrf.mxu0
    %2769 = vdwg.mxu0
    %2770 = vmatprep.subr.bf16.mxu0 %v2333
    %2771 = vmatpush1.bf16.msra.mxu0 %v2332
    %2772 = vmatprep.subr.bf16.mxu0 %v2329
    %2773 = vmatpush1.bf16.msra.mxu0 %v2328
    %2774 = vmatprep.subr.bf16.mxu0 %v2325
    %2775 = vmatpush1.bf16.msra.mxu0 %v2324
    %2776 = vmatprep.subr.bf16.mxu0 %v2321
    %2777 = vmatpush1.bf16.msra.mxu0 %v2320
    %2778 = vmatprep.subr.bf16.mxu0 %v2317
    %2779 = vmatpush1.bf16.msra.mxu0 %v2316
    %2780 = vmatprep.subr.bf16.mxu0 %v2313
    %2781 = vmatpush1.bf16.msra.mxu0 %v2312
    %2782 = vmatprep.subr.bf16.mxu0 %v2309
    %2783 = vmatpush1.bf16.msra.mxu0 %v2308
    %2784 = vmatprep.subr.bf16.mxu0 %v2305
    %2785 = vmatpush1.bf16.msra.mxu0 %v2304
    %2786 = vmatprep.subr.bf16.mxu0 %v2365
    %2787 = vmatpush2.bf16.msra.mxu0 %v2364
    %2788 = vmatprep.subr.bf16.mxu0 %v2361
    %2789 = vmatpush2.bf16.msra.mxu0 %v2360
    %2790 = vmatprep.subr.bf16.mxu0 %v2357
    %2791 = vmatpush2.bf16.msra.mxu0 %v2356
    %2792 = vmatprep.subr.bf16.mxu0 %v2353
    %2793 = vmatpush2.bf16.msra.mxu0 %v2352
    %2794 = vmatprep.subr.bf16.mxu0 %v2349
    %2795 = vmatpush2.bf16.msra.mxu0 %v2348
    %2796 = vmatprep.subr.bf16.mxu0 %v2345
    %2797 = vmatpush2.bf16.msra.mxu0 %v2344
    %2798 = vmatprep.subr.bf16.mxu0 %v2341
    %2799 = vmatpush2.bf16.msra.mxu0 %v2340
    %2800 = vmatprep.subr.bf16.mxu0 %v2337
    %2801 = vmatpush2.bf16.msra.mxu0 %v2336
    %2802 = vmatprep.mubr.bf16.mxu0 %v841
    %2803 = vmatmul.mubr.bf16.gmra.mxu0 %v840
    %v2804 = vpop.f32.mrf.mxu0
    %v2805 = vadd.f32 %v2764, %v2804
    %v2806 = vpop.f32.mrf.mxu0
    %v2807 = vadd.f32 %v2766, %v2806
    %v2808 = vpop.f32.mrf.mxu0
    %v2809 = vpop.f32.mrf.mxu0
    %2810 = vdwg.mxu0
    %2811 = vmatprep.subr.bf16.mxu0 %v2397
    %2812 = vmatpush1.bf16.msra.mxu0 %v2396
    %2813 = vmatprep.subr.bf16.mxu0 %v2393
    %2814 = vmatpush1.bf16.msra.mxu0 %v2392
    %2815 = vmatprep.subr.bf16.mxu0 %v2389
    %2816 = vmatpush1.bf16.msra.mxu0 %v2388
    %2817 = vmatprep.subr.bf16.mxu0 %v2385
    %2818 = vmatpush1.bf16.msra.mxu0 %v2384
    %2819 = vmatprep.subr.bf16.mxu0 %v2381
    %2820 = vmatpush1.bf16.msra.mxu0 %v2380
    %2821 = vmatprep.subr.bf16.mxu0 %v2377
    %2822 = vmatpush1.bf16.msra.mxu0 %v2376
    %2823 = vmatprep.subr.bf16.mxu0 %v2373
    %2824 = vmatpush1.bf16.msra.mxu0 %v2372
    %2825 = vmatprep.subr.bf16.mxu0 %v2369
    %2826 = vmatpush1.bf16.msra.mxu0 %v2368
    %2827 = vmatprep.subr.bf16.mxu0 %v2429
    %2828 = vmatpush2.bf16.msra.mxu0 %v2428
    %2829 = vmatprep.subr.bf16.mxu0 %v2425
    %2830 = vmatpush2.bf16.msra.mxu0 %v2424
    %2831 = vmatprep.subr.bf16.mxu0 %v2421
    %2832 = vmatpush2.bf16.msra.mxu0 %v2420
    %2833 = vmatprep.subr.bf16.mxu0 %v2417
    %2834 = vmatpush2.bf16.msra.mxu0 %v2416
    %2835 = vmatprep.subr.bf16.mxu0 %v2413
    %2836 = vmatpush2.bf16.msra.mxu0 %v2412
    %2837 = vmatprep.subr.bf16.mxu0 %v2409
    %2838 = vmatpush2.bf16.msra.mxu0 %v2408
    %2839 = vmatprep.subr.bf16.mxu0 %v2405
    %2840 = vmatpush2.bf16.msra.mxu0 %v2404
    %2841 = vmatprep.subr.bf16.mxu0 %v2401
    %2842 = vmatpush2.bf16.msra.mxu0 %v2400
    %2843 = vmatprep.mubr.bf16.mxu0 %v843
    %2844 = vmatmul.mubr.bf16.gmra.mxu0 %v842
    %v2845 = vpop.f32.mrf.mxu0
    %v2846 = vadd.f32 %v2805, %v2845
    %v2847 = vpop.f32.mrf.mxu0
    %v2848 = vadd.f32 %v2807, %v2847
    %v2849 = vpop.f32.mrf.mxu0
    %v2850 = vpop.f32.mrf.mxu0
    %2851 = vdwg.mxu0
    %2852 = vmatprep.subr.bf16.mxu0 %v2207
    %2853 = vmatpush1.bf16.msra.mxu0 %v2206
    %2854 = vmatprep.subr.bf16.mxu0 %v2203
    %2855 = vmatpush1.bf16.msra.mxu0 %v2202
    %2856 = vmatprep.subr.bf16.mxu0 %v2199
    %2857 = vmatpush1.bf16.msra.mxu0 %v2198
    %2858 = vmatprep.subr.bf16.mxu0 %v2195
    %2859 = vmatpush1.bf16.msra.mxu0 %v2194
    %2860 = vmatprep.subr.bf16.mxu0 %v2191
    %2861 = vmatpush1.bf16.msra.mxu0 %v2190
    %2862 = vmatprep.subr.bf16.mxu0 %v2187
    %2863 = vmatpush1.bf16.msra.mxu0 %v2186
    %2864 = vmatprep.subr.bf16.mxu0 %v2183
    %2865 = vmatpush1.bf16.msra.mxu0 %v2182
    %2866 = vmatprep.subr.bf16.mxu0 %v2179
    %2867 = vmatpush1.bf16.msra.mxu0 %v2178
    %2868 = vmatprep.subr.bf16.mxu0 %v2239
    %2869 = vmatpush2.bf16.msra.mxu0 %v2238
    %2870 = vmatprep.subr.bf16.mxu0 %v2235
    %2871 = vmatpush2.bf16.msra.mxu0 %v2234
    %2872 = vmatprep.subr.bf16.mxu0 %v2231
    %2873 = vmatpush2.bf16.msra.mxu0 %v2230
    %2874 = vmatprep.subr.bf16.mxu0 %v2227
    %2875 = vmatpush2.bf16.msra.mxu0 %v2226
    %2876 = vmatprep.subr.bf16.mxu0 %v2223
    %2877 = vmatpush2.bf16.msra.mxu0 %v2222
    %2878 = vmatprep.subr.bf16.mxu0 %v2219
    %2879 = vmatpush2.bf16.msra.mxu0 %v2218
    %2880 = vmatprep.subr.bf16.mxu0 %v2215
    %2881 = vmatpush2.bf16.msra.mxu0 %v2214
    %2882 = vmatprep.subr.bf16.mxu0 %v2211
    %2883 = vmatpush2.bf16.msra.mxu0 %v2210
    %2884 = vmatprep.mubr.bf16.mxu0 %v837
    %2885 = vmatmul.mubr.bf16.gmra.mxu0 %v836
    %v2886 = vpop.f32.mrf.mxu0
    %v2887 = vadd.f32 %v1379, %v2886
    %v2888 = vpop.f32.mrf.mxu0
    %v2889 = vadd.f32 %v1383, %v2888
    %v2890 = vpop.f32.mrf.mxu0
    %v2891 = vpop.f32.mrf.mxu0
    %2892 = vdwg.mxu0
    %2893 = vmatprep.subr.bf16.mxu0 %v2271
    %2894 = vmatpush1.bf16.msra.mxu0 %v2270
    %2895 = vmatprep.subr.bf16.mxu0 %v2267
    %2896 = vmatpush1.bf16.msra.mxu0 %v2266
    %2897 = vmatprep.subr.bf16.mxu0 %v2263
    %2898 = vmatpush1.bf16.msra.mxu0 %v2262
    %2899 = vmatprep.subr.bf16.mxu0 %v2259
    %2900 = vmatpush1.bf16.msra.mxu0 %v2258
    %2901 = vmatprep.subr.bf16.mxu0 %v2255
    %2902 = vmatpush1.bf16.msra.mxu0 %v2254
    %2903 = vmatprep.subr.bf16.mxu0 %v2251
    %2904 = vmatpush1.bf16.msra.mxu0 %v2250
    %2905 = vmatprep.subr.bf16.mxu0 %v2247
    %2906 = vmatpush1.bf16.msra.mxu0 %v2246
    %2907 = vmatprep.subr.bf16.mxu0 %v2243
    %2908 = vmatpush1.bf16.msra.mxu0 %v2242
    %2909 = vmatprep.subr.bf16.mxu0 %v2303
    %2910 = vmatpush2.bf16.msra.mxu0 %v2302
    %2911 = vmatprep.subr.bf16.mxu0 %v2299
    %2912 = vmatpush2.bf16.msra.mxu0 %v2298
    %2913 = vmatprep.subr.bf16.mxu0 %v2295
    %2914 = vmatpush2.bf16.msra.mxu0 %v2294
    %2915 = vmatprep.subr.bf16.mxu0 %v2291
    %2916 = vmatpush2.bf16.msra.mxu0 %v2290
    %2917 = vmatprep.subr.bf16.mxu0 %v2287
    %2918 = vmatpush2.bf16.msra.mxu0 %v2286
    %2919 = vmatprep.subr.bf16.mxu0 %v2283
    %2920 = vmatpush2.bf16.msra.mxu0 %v2282
    %2921 = vmatprep.subr.bf16.mxu0 %v2279
    %2922 = vmatpush2.bf16.msra.mxu0 %v2278
    %2923 = vmatprep.subr.bf16.mxu0 %v2275
    %2924 = vmatpush2.bf16.msra.mxu0 %v2274
    %2925 = vmatprep.mubr.bf16.mxu0 %v839
    %2926 = vmatmul.mubr.bf16.gmra.mxu0 %v838
    %v2927 = vpop.f32.mrf.mxu0
    %v2928 = vadd.f32 %v2887, %v2927
    %v2929 = vpop.f32.mrf.mxu0
    %v2930 = vadd.f32 %v2889, %v2929
    %v2931 = vpop.f32.mrf.mxu0
    %v2932 = vpop.f32.mrf.mxu0
    %2933 = vdwg.mxu0
    %2934 = vmatprep.subr.bf16.mxu0 %v2335
    %2935 = vmatpush1.bf16.msra.mxu0 %v2334
    %2936 = vmatprep.subr.bf16.mxu0 %v2331
    %2937 = vmatpush1.bf16.msra.mxu0 %v2330
    %2938 = vmatprep.subr.bf16.mxu0 %v2327
    %2939 = vmatpush1.bf16.msra.mxu0 %v2326
    %2940 = vmatprep.subr.bf16.mxu0 %v2323
    %2941 = vmatpush1.bf16.msra.mxu0 %v2322
    %2942 = vmatprep.subr.bf16.mxu0 %v2319
    %2943 = vmatpush1.bf16.msra.mxu0 %v2318
    %2944 = vmatprep.subr.bf16.mxu0 %v2315
    %2945 = vmatpush1.bf16.msra.mxu0 %v2314
    %2946 = vmatprep.subr.bf16.mxu0 %v2311
    %2947 = vmatpush1.bf16.msra.mxu0 %v2310
    %2948 = vmatprep.subr.bf16.mxu0 %v2307
    %2949 = vmatpush1.bf16.msra.mxu0 %v2306
    %2950 = vmatprep.subr.bf16.mxu0 %v2367
    %2951 = vmatpush2.bf16.msra.mxu0 %v2366
    %2952 = vmatprep.subr.bf16.mxu0 %v2363
    %2953 = vmatpush2.bf16.msra.mxu0 %v2362
    %2954 = vmatprep.subr.bf16.mxu0 %v2359
    %2955 = vmatpush2.bf16.msra.mxu0 %v2358
    %2956 = vmatprep.subr.bf16.mxu0 %v2355
    %2957 = vmatpush2.bf16.msra.mxu0 %v2354
    %2958 = vmatprep.subr.bf16.mxu0 %v2351
    %2959 = vmatpush2.bf16.msra.mxu0 %v2350
    %2960 = vmatprep.subr.bf16.mxu0 %v2347
    %2961 = vmatpush2.bf16.msra.mxu0 %v2346
    %2962 = vmatprep.subr.bf16.mxu0 %v2343
    %2963 = vmatpush2.bf16.msra.mxu0 %v2342
    %2964 = vmatprep.subr.bf16.mxu0 %v2339
    %2965 = vmatpush2.bf16.msra.mxu0 %v2338
    %2966 = vmatprep.mubr.bf16.mxu0 %v841
    %2967 = vmatmul.mubr.bf16.gmra.mxu0 %v840
    %v2968 = vpop.f32.mrf.mxu0
    %v2969 = vadd.f32 %v2928, %v2968
    %v2970 = vpop.f32.mrf.mxu0
    %v2971 = vadd.f32 %v2930, %v2970
    %v2972 = vpop.f32.mrf.mxu0
    %v2973 = vpop.f32.mrf.mxu0
    %2974 = vdwg.mxu0
    %2975 = vmatprep.subr.bf16.mxu0 %v2399
    %2976 = vmatpush1.bf16.msra.mxu0 %v2398
    %2977 = vmatprep.subr.bf16.mxu0 %v2395
    %2978 = vmatpush1.bf16.msra.mxu0 %v2394
    %2979 = vmatprep.subr.bf16.mxu0 %v2391
    %2980 = vmatpush1.bf16.msra.mxu0 %v2390
    %2981 = vmatprep.subr.bf16.mxu0 %v2387
    %2982 = vmatpush1.bf16.msra.mxu0 %v2386
    %2983 = vmatprep.subr.bf16.mxu0 %v2383
    %2984 = vmatpush1.bf16.msra.mxu0 %v2382
    %2985 = vmatprep.subr.bf16.mxu0 %v2379
    %2986 = vmatpush1.bf16.msra.mxu0 %v2378
    %2987 = vmatprep.subr.bf16.mxu0 %v2375
    %2988 = vmatpush1.bf16.msra.mxu0 %v2374
    %2989 = vmatprep.subr.bf16.mxu0 %v2371
    %2990 = vmatpush1.bf16.msra.mxu0 %v2370
    %2991 = vmatprep.subr.bf16.mxu0 %v2431
    %2992 = vmatpush2.bf16.msra.mxu0 %v2430
    %2993 = vmatprep.subr.bf16.mxu0 %v2427
    %2994 = vmatpush2.bf16.msra.mxu0 %v2426
    %2995 = vmatprep.subr.bf16.mxu0 %v2423
    %2996 = vmatpush2.bf16.msra.mxu0 %v2422
    %2997 = vmatprep.subr.bf16.mxu0 %v2419
    %2998 = vmatpush2.bf16.msra.mxu0 %v2418
    %2999 = vmatprep.subr.bf16.mxu0 %v2415
    %3000 = vmatpush2.bf16.msra.mxu0 %v2414
    %3001 = vmatprep.subr.bf16.mxu0 %v2411
    %3002 = vmatpush2.bf16.msra.mxu0 %v2410
    %3003 = vmatprep.subr.bf16.mxu0 %v2407
    %3004 = vmatpush2.bf16.msra.mxu0 %v2406
    %3005 = vmatprep.subr.bf16.mxu0 %v2403
    %3006 = vmatpush2.bf16.msra.mxu0 %v2402
    %3007 = vmatprep.mubr.bf16.mxu0 %v843
    %3008 = vmatmul.mubr.bf16.gmra.mxu0 %v842
    %v3009 = vpop.f32.mrf.mxu0
    %v3010 = vadd.f32 %v2969, %v3009
    %v3011 = vpop.f32.mrf.mxu0
    %v3012 = vadd.f32 %v2971, %v3011
    %v3013 = vpop.f32.mrf.mxu0
    %v3014 = vpop.f32.mrf.mxu0
    %3015 = vdwg.mxu0
    %v3272 = vunpack.c.l.b16 %v1108
    %v3273 = vunpack.c.h.b16 %v1108
    %v3274 = vunpack.c.l.b16 %v1109
    %v3275 = vunpack.c.h.b16 %v1109
    %v3276 = vunpack.c.l.b16 %v1110
    %v3277 = vunpack.c.h.b16 %v1110
    %v3278 = vunpack.c.l.b16 %v1111
    %v3279 = vunpack.c.h.b16 %v1111
    %v3280 = vunpack.c.l.b16 %v1112
    %v3281 = vunpack.c.h.b16 %v1112
    %v3282 = vunpack.c.l.b16 %v1113
    %v3283 = vunpack.c.h.b16 %v1113
    %v3284 = vunpack.c.l.b16 %v1114
    %v3285 = vunpack.c.h.b16 %v1114
    %v3286 = vunpack.c.l.b16 %v1115
    %v3287 = vunpack.c.h.b16 %v1115
    %v3288 = vunpack.c.l.b16 %v1116
    %v3289 = vunpack.c.h.b16 %v1116
    %v3290 = vunpack.c.l.b16 %v1117
    %v3291 = vunpack.c.h.b16 %v1117
    %v3292 = vunpack.c.l.b16 %v1118
    %v3293 = vunpack.c.h.b16 %v1118
    %v3294 = vunpack.c.l.b16 %v1119
    %v3295 = vunpack.c.h.b16 %v1119
    %v3296 = vunpack.c.l.b16 %v1120
    %v3297 = vunpack.c.h.b16 %v1120
    %v3298 = vunpack.c.l.b16 %v1121
    %v3299 = vunpack.c.h.b16 %v1121
    %v3300 = vunpack.c.l.b16 %v1122
    %v3301 = vunpack.c.h.b16 %v1122
    %v3302 = vunpack.c.l.b16 %v1123
    %v3303 = vunpack.c.h.b16 %v1123
    %v3304 = vunpack.c.l.b16 %v1124
    %v3305 = vunpack.c.h.b16 %v1124
    %v3306 = vunpack.c.l.b16 %v1125
    %v3307 = vunpack.c.h.b16 %v1125
    %v3308 = vunpack.c.l.b16 %v1126
    %v3309 = vunpack.c.h.b16 %v1126
    %v3310 = vunpack.c.l.b16 %v1127
    %v3311 = vunpack.c.h.b16 %v1127
    %v3312 = vunpack.c.l.b16 %v1128
    %v3313 = vunpack.c.h.b16 %v1128
    %v3314 = vunpack.c.l.b16 %v1129
    %v3315 = vunpack.c.h.b16 %v1129
    %v3316 = vunpack.c.l.b16 %v1130
    %v3317 = vunpack.c.h.b16 %v1130
    %v3318 = vunpack.c.l.b16 %v1131
    %v3319 = vunpack.c.h.b16 %v1131
    %v3320 = vunpack.c.l.b16 %v1132
    %v3321 = vunpack.c.h.b16 %v1132
    %v3322 = vunpack.c.l.b16 %v1133
    %v3323 = vunpack.c.h.b16 %v1133
    %v3324 = vunpack.c.l.b16 %v1134
    %v3325 = vunpack.c.h.b16 %v1134
    %v3326 = vunpack.c.l.b16 %v1135
    %v3327 = vunpack.c.h.b16 %v1135
    %v3328 = vunpack.c.l.b16 %v1136
    %v3329 = vunpack.c.h.b16 %v1136
    %v3330 = vunpack.c.l.b16 %v1137
    %v3331 = vunpack.c.h.b16 %v1137
    %v3332 = vunpack.c.l.b16 %v1138
    %v3333 = vunpack.c.h.b16 %v1138
    %v3334 = vunpack.c.l.b16 %v1139
    %v3335 = vunpack.c.h.b16 %v1139
    %v3336 = vunpack.c.l.b16 %v1140
    %v3337 = vunpack.c.h.b16 %v1140
    %v3338 = vunpack.c.l.b16 %v1141
    %v3339 = vunpack.c.h.b16 %v1141
    %v3340 = vunpack.c.l.b16 %v1142
    %v3341 = vunpack.c.h.b16 %v1142
    %v3342 = vunpack.c.l.b16 %v1143
    %v3343 = vunpack.c.h.b16 %v1143
    %v3344 = vunpack.c.l.b16 %v1144
    %v3345 = vunpack.c.h.b16 %v1144
    %v3346 = vunpack.c.l.b16 %v1145
    %v3347 = vunpack.c.h.b16 %v1145
    %v3348 = vunpack.c.l.b16 %v1146
    %v3349 = vunpack.c.h.b16 %v1146
    %v3350 = vunpack.c.l.b16 %v1147
    %v3351 = vunpack.c.h.b16 %v1147
    %v3352 = vunpack.c.l.b16 %v1148
    %v3353 = vunpack.c.h.b16 %v1148
    %v3354 = vunpack.c.l.b16 %v1149
    %v3355 = vunpack.c.h.b16 %v1149
    %v3356 = vunpack.c.l.b16 %v1150
    %v3357 = vunpack.c.h.b16 %v1150
    %v3358 = vunpack.c.l.b16 %v1151
    %v3359 = vunpack.c.h.b16 %v1151
    %v3360 = vunpack.c.l.b16 %v1152
    %v3361 = vunpack.c.h.b16 %v1152
    %v3362 = vunpack.c.l.b16 %v1153
    %v3363 = vunpack.c.h.b16 %v1153
    %v3364 = vunpack.c.l.b16 %v1154
    %v3365 = vunpack.c.h.b16 %v1154
    %v3366 = vunpack.c.l.b16 %v1155
    %v3367 = vunpack.c.h.b16 %v1155
    %v3368 = vunpack.c.l.b16 %v1156
    %v3369 = vunpack.c.h.b16 %v1156
    %v3370 = vunpack.c.l.b16 %v1157
    %v3371 = vunpack.c.h.b16 %v1157
    %v3372 = vunpack.c.l.b16 %v1158
    %v3373 = vunpack.c.h.b16 %v1158
    %v3374 = vunpack.c.l.b16 %v1159
    %v3375 = vunpack.c.h.b16 %v1159
    %v3376 = vunpack.c.l.b16 %v1160
    %v3377 = vunpack.c.h.b16 %v1160
    %v3378 = vunpack.c.l.b16 %v1161
    %v3379 = vunpack.c.h.b16 %v1161
    %v3380 = vunpack.c.l.b16 %v1162
    %v3381 = vunpack.c.h.b16 %v1162
    %v3382 = vunpack.c.l.b16 %v1163
    %v3383 = vunpack.c.h.b16 %v1163
    %v3384 = vunpack.c.l.b16 %v1164
    %v3385 = vunpack.c.h.b16 %v1164
    %v3386 = vunpack.c.l.b16 %v1165
    %v3387 = vunpack.c.h.b16 %v1165
    %v3388 = vunpack.c.l.b16 %v1166
    %v3389 = vunpack.c.h.b16 %v1166
    %v3390 = vunpack.c.l.b16 %v1167
    %v3391 = vunpack.c.h.b16 %v1167
    %v3392 = vunpack.c.l.b16 %v1168
    %v3393 = vunpack.c.h.b16 %v1168
    %v3394 = vunpack.c.l.b16 %v1169
    %v3395 = vunpack.c.h.b16 %v1169
    %v3396 = vunpack.c.l.b16 %v1170
    %v3397 = vunpack.c.h.b16 %v1170
    %v3398 = vunpack.c.l.b16 %v1171
    %v3399 = vunpack.c.h.b16 %v1171
    %v3400 = vunpack.c.l.b16 %v1172
    %v3401 = vunpack.c.h.b16 %v1172
    %v3402 = vunpack.c.l.b16 %v1173
    %v3403 = vunpack.c.h.b16 %v1173
    %v3404 = vunpack.c.l.b16 %v1174
    %v3405 = vunpack.c.h.b16 %v1174
    %v3406 = vunpack.c.l.b16 %v1175
    %v3407 = vunpack.c.h.b16 %v1175
    %v3408 = vunpack.c.l.b16 %v1176
    %v3409 = vunpack.c.h.b16 %v1176
    %v3410 = vunpack.c.l.b16 %v1177
    %v3411 = vunpack.c.h.b16 %v1177
    %v3412 = vunpack.c.l.b16 %v1178
    %v3413 = vunpack.c.h.b16 %v1178
    %v3414 = vunpack.c.l.b16 %v1179
    %v3415 = vunpack.c.h.b16 %v1179
    %v3416 = vunpack.c.l.b16 %v1180
    %v3417 = vunpack.c.h.b16 %v1180
    %v3418 = vunpack.c.l.b16 %v1181
    %v3419 = vunpack.c.h.b16 %v1181
    %v3420 = vunpack.c.l.b16 %v1182
    %v3421 = vunpack.c.h.b16 %v1182
    %v3422 = vunpack.c.l.b16 %v1183
    %v3423 = vunpack.c.h.b16 %v1183
    %v3424 = vunpack.c.l.b16 %v1184
    %v3425 = vunpack.c.h.b16 %v1184
    %v3426 = vunpack.c.l.b16 %v1185
    %v3427 = vunpack.c.h.b16 %v1185
    %v3428 = vunpack.c.l.b16 %v1186
    %v3429 = vunpack.c.h.b16 %v1186
    %v3430 = vunpack.c.l.b16 %v1187
    %v3431 = vunpack.c.h.b16 %v1187
    %v3432 = vunpack.c.l.b16 %v1188
    %v3433 = vunpack.c.h.b16 %v1188
    %v3434 = vunpack.c.l.b16 %v1189
    %v3435 = vunpack.c.h.b16 %v1189
    %v3436 = vunpack.c.l.b16 %v1190
    %v3437 = vunpack.c.h.b16 %v1190
    %v3438 = vunpack.c.l.b16 %v1191
    %v3439 = vunpack.c.h.b16 %v1191
    %v3440 = vunpack.c.l.b16 %v1192
    %v3441 = vunpack.c.h.b16 %v1192
    %v3442 = vunpack.c.l.b16 %v1193
    %v3443 = vunpack.c.h.b16 %v1193
    %v3444 = vunpack.c.l.b16 %v1194
    %v3445 = vunpack.c.h.b16 %v1194
    %v3446 = vunpack.c.l.b16 %v1195
    %v3447 = vunpack.c.h.b16 %v1195
    %v3448 = vunpack.c.l.b16 %v1196
    %v3449 = vunpack.c.h.b16 %v1196
    %v3450 = vunpack.c.l.b16 %v1197
    %v3451 = vunpack.c.h.b16 %v1197
    %v3452 = vunpack.c.l.b16 %v1198
    %v3453 = vunpack.c.h.b16 %v1198
    %v3454 = vunpack.c.l.b16 %v1199
    %v3455 = vunpack.c.h.b16 %v1199
    %v3456 = vunpack.c.l.b16 %v1200
    %v3457 = vunpack.c.h.b16 %v1200
    %v3458 = vunpack.c.l.b16 %v1201
    %v3459 = vunpack.c.h.b16 %v1201
    %v3460 = vunpack.c.l.b16 %v1202
    %v3461 = vunpack.c.h.b16 %v1202
    %v3462 = vunpack.c.l.b16 %v1203
    %v3463 = vunpack.c.h.b16 %v1203
    %v3464 = vunpack.c.l.b16 %v1204
    %v3465 = vunpack.c.h.b16 %v1204
    %v3466 = vunpack.c.l.b16 %v1205
    %v3467 = vunpack.c.h.b16 %v1205
    %v3468 = vunpack.c.l.b16 %v1206
    %v3469 = vunpack.c.h.b16 %v1206
    %v3470 = vunpack.c.l.b16 %v1207
    %v3471 = vunpack.c.h.b16 %v1207
    %v3472 = vunpack.c.l.b16 %v1208
    %v3473 = vunpack.c.h.b16 %v1208
    %v3474 = vunpack.c.l.b16 %v1209
    %v3475 = vunpack.c.h.b16 %v1209
    %v3476 = vunpack.c.l.b16 %v1210
    %v3477 = vunpack.c.h.b16 %v1210
    %v3478 = vunpack.c.l.b16 %v1211
    %v3479 = vunpack.c.h.b16 %v1211
    %v3480 = vunpack.c.l.b16 %v1212
    %v3481 = vunpack.c.h.b16 %v1212
    %v3482 = vunpack.c.l.b16 %v1213
    %v3483 = vunpack.c.h.b16 %v1213
    %v3484 = vunpack.c.l.b16 %v1214
    %v3485 = vunpack.c.h.b16 %v1214
    %v3486 = vunpack.c.l.b16 %v1215
    %v3487 = vunpack.c.h.b16 %v1215
    %v3488 = vunpack.c.l.b16 %v1216
    %v3489 = vunpack.c.h.b16 %v1216
    %v3490 = vunpack.c.l.b16 %v1217
    %v3491 = vunpack.c.h.b16 %v1217
    %v3492 = vunpack.c.l.b16 %v1218
    %v3493 = vunpack.c.h.b16 %v1218
    %v3494 = vunpack.c.l.b16 %v1219
    %v3495 = vunpack.c.h.b16 %v1219
    %v3496 = vunpack.c.l.b16 %v1220
    %v3497 = vunpack.c.h.b16 %v1220
    %v3498 = vunpack.c.l.b16 %v1221
    %v3499 = vunpack.c.h.b16 %v1221
    %v3500 = vunpack.c.l.b16 %v1222
    %v3501 = vunpack.c.h.b16 %v1222
    %v3502 = vunpack.c.l.b16 %v1223
    %v3503 = vunpack.c.h.b16 %v1223
    %v3504 = vunpack.c.l.b16 %v1224
    %v3505 = vunpack.c.h.b16 %v1224
    %v3506 = vunpack.c.l.b16 %v1225
    %v3507 = vunpack.c.h.b16 %v1225
    %v3508 = vunpack.c.l.b16 %v1226
    %v3509 = vunpack.c.h.b16 %v1226
    %v3510 = vunpack.c.l.b16 %v1227
    %v3511 = vunpack.c.h.b16 %v1227
    %v3512 = vunpack.c.l.b16 %v1228
    %v3513 = vunpack.c.h.b16 %v1228
    %v3514 = vunpack.c.l.b16 %v1229
    %v3515 = vunpack.c.h.b16 %v1229
    %v3516 = vunpack.c.l.b16 %v1230
    %v3517 = vunpack.c.h.b16 %v1230
    %v3518 = vunpack.c.l.b16 %v1231
    %v3519 = vunpack.c.h.b16 %v1231
    %v3520 = vunpack.c.l.b16 %v1232
    %v3521 = vunpack.c.h.b16 %v1232
    %v3522 = vunpack.c.l.b16 %v1233
    %v3523 = vunpack.c.h.b16 %v1233
    %v3524 = vunpack.c.l.b16 %v1234
    %v3525 = vunpack.c.h.b16 %v1234
    %v3526 = vunpack.c.l.b16 %v1235
    %v3527 = vunpack.c.h.b16 %v1235
    %v3528 = vunpack.c.l.b16 %v1236
    %v3529 = vunpack.c.h.b16 %v1236
    %v3530 = vunpack.c.l.b16 %v1237
    %v3531 = vunpack.c.h.b16 %v1237
    %v3532 = vunpack.c.l.b16 %v1238
    %v3533 = vunpack.c.h.b16 %v1238
    %v3534 = vunpack.c.l.b16 %v1239
    %v3535 = vunpack.c.h.b16 %v1239
    %v3536 = vunpack.c.l.b16 %v1240
    %v3537 = vunpack.c.h.b16 %v1240
    %v3538 = vunpack.c.l.b16 %v1241
    %v3539 = vunpack.c.h.b16 %v1241
    %v3540 = vunpack.c.l.b16 %v1242
    %v3541 = vunpack.c.h.b16 %v1242
    %v3542 = vunpack.c.l.b16 %v1243
    %v3543 = vunpack.c.h.b16 %v1243
    %v3544 = vunpack.c.l.b16 %v1244
    %v3545 = vunpack.c.h.b16 %v1244
    %v3546 = vunpack.c.l.b16 %v1245
    %v3547 = vunpack.c.h.b16 %v1245
    %v3548 = vunpack.c.l.b16 %v1246
    %v3549 = vunpack.c.h.b16 %v1246
    %v3550 = vunpack.c.l.b16 %v1247
    %v3551 = vunpack.c.h.b16 %v1247
    %v3552 = vunpack.c.l.b16 %v1248
    %v3553 = vunpack.c.h.b16 %v1248
    %v3554 = vunpack.c.l.b16 %v1249
    %v3555 = vunpack.c.h.b16 %v1249
    %v3556 = vunpack.c.l.b16 %v1250
    %v3557 = vunpack.c.h.b16 %v1250
    %v3558 = vunpack.c.l.b16 %v1251
    %v3559 = vunpack.c.h.b16 %v1251
    %v3560 = vunpack.c.l.b16 %v1252
    %v3561 = vunpack.c.h.b16 %v1252
    %v3562 = vunpack.c.l.b16 %v1253
    %v3563 = vunpack.c.h.b16 %v1253
    %v3564 = vunpack.c.l.b16 %v1254
    %v3565 = vunpack.c.h.b16 %v1254
    %v3566 = vunpack.c.l.b16 %v1255
    %v3567 = vunpack.c.h.b16 %v1255
    %v3568 = vunpack.c.l.b16 %v1256
    %v3569 = vunpack.c.h.b16 %v1256
    %v3570 = vunpack.c.l.b16 %v1257
    %v3571 = vunpack.c.h.b16 %v1257
    %v3572 = vunpack.c.l.b16 %v1258
    %v3573 = vunpack.c.h.b16 %v1258
    %v3574 = vunpack.c.l.b16 %v1259
    %v3575 = vunpack.c.h.b16 %v1259
    %v3576 = vunpack.c.l.b16 %v1260
    %v3577 = vunpack.c.h.b16 %v1260
    %v3578 = vunpack.c.l.b16 %v1261
    %v3579 = vunpack.c.h.b16 %v1261
    %v3580 = vunpack.c.l.b16 %v1262
    %v3581 = vunpack.c.h.b16 %v1262
    %v3582 = vunpack.c.l.b16 %v1263
    %v3583 = vunpack.c.h.b16 %v1263
    %v3584 = vunpack.c.l.b16 %v1264
    %v3585 = vunpack.c.h.b16 %v1264
    %v3586 = vunpack.c.l.b16 %v1265
    %v3587 = vunpack.c.h.b16 %v1265
    %v3588 = vunpack.c.l.b16 %v1266
    %v3589 = vunpack.c.h.b16 %v1266
    %v3590 = vunpack.c.l.b16 %v1267
    %v3591 = vunpack.c.h.b16 %v1267
    %v3592 = vunpack.c.l.b16 %v1268
    %v3593 = vunpack.c.h.b16 %v1268
    %v3594 = vunpack.c.l.b16 %v1269
    %v3595 = vunpack.c.h.b16 %v1269
    %v3596 = vunpack.c.l.b16 %v1270
    %v3597 = vunpack.c.h.b16 %v1270
    %v3598 = vunpack.c.l.b16 %v1271
    %v3599 = vunpack.c.h.b16 %v1271
    %v3600 = vunpack.c.l.b16 %v1272
    %v3601 = vunpack.c.h.b16 %v1272
    %v3602 = vunpack.c.l.b16 %v1273
    %v3603 = vunpack.c.h.b16 %v1273
    %v3604 = vunpack.c.l.b16 %v1274
    %v3605 = vunpack.c.h.b16 %v1274
    %v3606 = vunpack.c.l.b16 %v1275
    %v3607 = vunpack.c.h.b16 %v1275
    %v3608 = vunpack.c.l.b16 %v1276
    %v3609 = vunpack.c.h.b16 %v1276
    %v3610 = vunpack.c.l.b16 %v1277
    %v3611 = vunpack.c.h.b16 %v1277
    %v3612 = vunpack.c.l.b16 %v1278
    %v3613 = vunpack.c.h.b16 %v1278
    %v3614 = vunpack.c.l.b16 %v1279
    %v3615 = vunpack.c.h.b16 %v1279
    %v3616 = vunpack.c.l.b16 %v1280
    %v3617 = vunpack.c.h.b16 %v1280
    %v3618 = vunpack.c.l.b16 %v1281
    %v3619 = vunpack.c.h.b16 %v1281
    %v3620 = vunpack.c.l.b16 %v1282
    %v3621 = vunpack.c.h.b16 %v1282
    %v3622 = vunpack.c.l.b16 %v1283
    %v3623 = vunpack.c.h.b16 %v1283
    %v3624 = vunpack.c.l.b16 %v1284
    %v3625 = vunpack.c.h.b16 %v1284
    %v3626 = vunpack.c.l.b16 %v1285
    %v3627 = vunpack.c.h.b16 %v1285
    %v3628 = vunpack.c.l.b16 %v1286
    %v3629 = vunpack.c.h.b16 %v1286
    %v3630 = vunpack.c.l.b16 %v1287
    %v3631 = vunpack.c.h.b16 %v1287
    %v3632 = vunpack.c.l.b16 %v1288
    %v3633 = vunpack.c.h.b16 %v1288
    %v3634 = vunpack.c.l.b16 %v1289
    %v3635 = vunpack.c.h.b16 %v1289
    %v3636 = vunpack.c.l.b16 %v1290
    %v3637 = vunpack.c.h.b16 %v1290
    %v3638 = vunpack.c.l.b16 %v1291
    %v3639 = vunpack.c.h.b16 %v1291
    %v3640 = vunpack.c.l.b16 %v1292
    %v3641 = vunpack.c.h.b16 %v1292
    %v3642 = vunpack.c.l.b16 %v1293
    %v3643 = vunpack.c.h.b16 %v1293
    %v3644 = vunpack.c.l.b16 %v1294
    %v3645 = vunpack.c.h.b16 %v1294
    %v3646 = vunpack.c.l.b16 %v1295
    %v3647 = vunpack.c.h.b16 %v1295
    %v3648 = vunpack.c.l.b16 %v1296
    %v3649 = vunpack.c.h.b16 %v1296
    %v3650 = vunpack.c.l.b16 %v1297
    %v3651 = vunpack.c.h.b16 %v1297
    %v3652 = vunpack.c.l.b16 %v1298
    %v3653 = vunpack.c.h.b16 %v1298
    %v3654 = vunpack.c.l.b16 %v1299
    %v3655 = vunpack.c.h.b16 %v1299
    %v3656 = vunpack.c.l.b16 %v1300
    %v3657 = vunpack.c.h.b16 %v1300
    %v3658 = vunpack.c.l.b16 %v1301
    %v3659 = vunpack.c.h.b16 %v1301
    %v3660 = vunpack.c.l.b16 %v1302
    %v3661 = vunpack.c.h.b16 %v1302
    %v3662 = vunpack.c.l.b16 %v1303
    %v3663 = vunpack.c.h.b16 %v1303
    %v3664 = vunpack.c.l.b16 %v1304
    %v3665 = vunpack.c.h.b16 %v1304
    %v3666 = vunpack.c.l.b16 %v1305
    %v3667 = vunpack.c.h.b16 %v1305
    %v3668 = vunpack.c.l.b16 %v1306
    %v3669 = vunpack.c.h.b16 %v1306
    %v3670 = vunpack.c.l.b16 %v1307
    %v3671 = vunpack.c.h.b16 %v1307
    %v3672 = vunpack.c.l.b16 %v1308
    %v3673 = vunpack.c.h.b16 %v1308
    %v3674 = vunpack.c.l.b16 %v1309
    %v3675 = vunpack.c.h.b16 %v1309
    %v3676 = vunpack.c.l.b16 %v1310
    %v3677 = vunpack.c.h.b16 %v1310
    %v3678 = vunpack.c.l.b16 %v1311
    %v3679 = vunpack.c.h.b16 %v1311
    %v3680 = vunpack.c.l.b16 %v1312
    %v3681 = vunpack.c.h.b16 %v1312
    %v3682 = vunpack.c.l.b16 %v1313
    %v3683 = vunpack.c.h.b16 %v1313
    %v3684 = vunpack.c.l.b16 %v1314
    %v3685 = vunpack.c.h.b16 %v1314
    %v3686 = vunpack.c.l.b16 %v1315
    %v3687 = vunpack.c.h.b16 %v1315
    %v3688 = vunpack.c.l.b16 %v1316
    %v3689 = vunpack.c.h.b16 %v1316
    %v3690 = vunpack.c.l.b16 %v1317
    %v3691 = vunpack.c.h.b16 %v1317
    %v3692 = vunpack.c.l.b16 %v1318
    %v3693 = vunpack.c.h.b16 %v1318
    %v3694 = vunpack.c.l.b16 %v1319
    %v3695 = vunpack.c.h.b16 %v1319
    %v3696 = vunpack.c.l.b16 %v1320
    %v3697 = vunpack.c.h.b16 %v1320
    %v3698 = vunpack.c.l.b16 %v1321
    %v3699 = vunpack.c.h.b16 %v1321
    %v3700 = vunpack.c.l.b16 %v1322
    %v3701 = vunpack.c.h.b16 %v1322
    %v3702 = vunpack.c.l.b16 %v1323
    %v3703 = vunpack.c.h.b16 %v1323
    %v3704 = vunpack.c.l.b16 %v1324
    %v3705 = vunpack.c.h.b16 %v1324
    %v3706 = vunpack.c.l.b16 %v1325
    %v3707 = vunpack.c.h.b16 %v1325
    %v3708 = vunpack.c.l.b16 %v1326
    %v3709 = vunpack.c.h.b16 %v1326
    %v3710 = vunpack.c.l.b16 %v1327
    %v3711 = vunpack.c.h.b16 %v1327
    %v3712 = vunpack.c.l.b16 %v1328
    %v3713 = vunpack.c.h.b16 %v1328
    %v3714 = vunpack.c.l.b16 %v1329
    %v3715 = vunpack.c.h.b16 %v1329
    %v3716 = vunpack.c.l.b16 %v1330
    %v3717 = vunpack.c.h.b16 %v1330
    %v3718 = vunpack.c.l.b16 %v1331
    %v3719 = vunpack.c.h.b16 %v1331
    %v3720 = vunpack.c.l.b16 %v1332
    %v3721 = vunpack.c.h.b16 %v1332
    %v3722 = vunpack.c.l.b16 %v1333
    %v3723 = vunpack.c.h.b16 %v1333
    %v3724 = vunpack.c.l.b16 %v1334
    %v3725 = vunpack.c.h.b16 %v1334
    %v3726 = vunpack.c.l.b16 %v1335
    %v3727 = vunpack.c.h.b16 %v1335
    %v3728 = vunpack.c.l.b16 %v1336
    %v3729 = vunpack.c.h.b16 %v1336
    %v3730 = vunpack.c.l.b16 %v1337
    %v3731 = vunpack.c.h.b16 %v1337
    %v3732 = vunpack.c.l.b16 %v1338
    %v3733 = vunpack.c.h.b16 %v1338
    %v3734 = vunpack.c.l.b16 %v1339
    %v3735 = vunpack.c.h.b16 %v1339
    %v3736 = vunpack.c.l.b16 %v1340
    %v3737 = vunpack.c.h.b16 %v1340
    %v3738 = vunpack.c.l.b16 %v1341
    %v3739 = vunpack.c.h.b16 %v1341
    %v3740 = vunpack.c.l.b16 %v1342
    %v3741 = vunpack.c.h.b16 %v1342
    %v3742 = vunpack.c.l.b16 %v1343
    %v3743 = vunpack.c.h.b16 %v1343
    %v3744 = vunpack.c.l.b16 %v1344
    %v3745 = vunpack.c.h.b16 %v1344
    %v3746 = vunpack.c.l.b16 %v1345
    %v3747 = vunpack.c.h.b16 %v1345
    %v3748 = vunpack.c.l.b16 %v1346
    %v3749 = vunpack.c.h.b16 %v1346
    %v3750 = vunpack.c.l.b16 %v1347
    %v3751 = vunpack.c.h.b16 %v1347
    %v3752 = vunpack.c.l.b16 %v1348
    %v3753 = vunpack.c.h.b16 %v1348
    %v3754 = vunpack.c.l.b16 %v1349
    %v3755 = vunpack.c.h.b16 %v1349
    %v3756 = vunpack.c.l.b16 %v1350
    %v3757 = vunpack.c.h.b16 %v1350
    %v3758 = vunpack.c.l.b16 %v1351
    %v3759 = vunpack.c.h.b16 %v1351
    %v3760 = vunpack.c.l.b16 %v1352
    %v3761 = vunpack.c.h.b16 %v1352
    %v3762 = vunpack.c.l.b16 %v1353
    %v3763 = vunpack.c.h.b16 %v1353
    %v3764 = vunpack.c.l.b16 %v1354
    %v3765 = vunpack.c.h.b16 %v1354
    %v3766 = vunpack.c.l.b16 %v1355
    %v3767 = vunpack.c.h.b16 %v1355
    %v3768 = vunpack.c.l.b16 %v1356
    %v3769 = vunpack.c.h.b16 %v1356
    %v3770 = vunpack.c.l.b16 %v1357
    %v3771 = vunpack.c.h.b16 %v1357
    %v3772 = vunpack.c.l.b16 %v1358
    %v3773 = vunpack.c.h.b16 %v1358
    %v3774 = vunpack.c.l.b16 %v1359
    %v3775 = vunpack.c.h.b16 %v1359
    %v3776 = vunpack.c.l.b16 %v1360
    %v3777 = vunpack.c.h.b16 %v1360
    %v3778 = vunpack.c.l.b16 %v1361
    %v3779 = vunpack.c.h.b16 %v1361
    %v3780 = vunpack.c.l.b16 %v1362
    %v3781 = vunpack.c.h.b16 %v1362
    %v3782 = vunpack.c.l.b16 %v1363
    %v3783 = vunpack.c.h.b16 %v1363
    %v3784 = vpack.c.b16 %v3276, %v3272
    %v3785 = vpack.c.b16 %v3277, %v3273
    %v3786 = vpack.c.b16 %v3278, %v3274
    %v3787 = vpack.c.b16 %v3279, %v3275
    %v3788 = vpack.c.b16 %v3284, %v3280
    %v3789 = vpack.c.b16 %v3285, %v3281
    %v3790 = vpack.c.b16 %v3286, %v3282
    %v3791 = vpack.c.b16 %v3287, %v3283
    %v3792 = vpack.c.b16 %v3292, %v3288
    %v3793 = vpack.c.b16 %v3293, %v3289
    %v3794 = vpack.c.b16 %v3294, %v3290
    %v3795 = vpack.c.b16 %v3295, %v3291
    %v3796 = vpack.c.b16 %v3300, %v3296
    %v3797 = vpack.c.b16 %v3301, %v3297
    %v3798 = vpack.c.b16 %v3302, %v3298
    %v3799 = vpack.c.b16 %v3303, %v3299
    %v3800 = vpack.c.b16 %v3308, %v3304
    %v3801 = vpack.c.b16 %v3309, %v3305
    %v3802 = vpack.c.b16 %v3310, %v3306
    %v3803 = vpack.c.b16 %v3311, %v3307
    %v3804 = vpack.c.b16 %v3316, %v3312
    %v3805 = vpack.c.b16 %v3317, %v3313
    %v3806 = vpack.c.b16 %v3318, %v3314
    %v3807 = vpack.c.b16 %v3319, %v3315
    %v3808 = vpack.c.b16 %v3324, %v3320
    %v3809 = vpack.c.b16 %v3325, %v3321
    %v3810 = vpack.c.b16 %v3326, %v3322
    %v3811 = vpack.c.b16 %v3327, %v3323
    %v3812 = vpack.c.b16 %v3332, %v3328
    %v3813 = vpack.c.b16 %v3333, %v3329
    %v3814 = vpack.c.b16 %v3334, %v3330
    %v3815 = vpack.c.b16 %v3335, %v3331
    %v3816 = vpack.c.b16 %v3340, %v3336
    %v3817 = vpack.c.b16 %v3341, %v3337
    %v3818 = vpack.c.b16 %v3342, %v3338
    %v3819 = vpack.c.b16 %v3343, %v3339
    %v3820 = vpack.c.b16 %v3348, %v3344
    %v3821 = vpack.c.b16 %v3349, %v3345
    %v3822 = vpack.c.b16 %v3350, %v3346
    %v3823 = vpack.c.b16 %v3351, %v3347
    %v3824 = vpack.c.b16 %v3356, %v3352
    %v3825 = vpack.c.b16 %v3357, %v3353
    %v3826 = vpack.c.b16 %v3358, %v3354
    %v3827 = vpack.c.b16 %v3359, %v3355
    %v3828 = vpack.c.b16 %v3364, %v3360
    %v3829 = vpack.c.b16 %v3365, %v3361
    %v3830 = vpack.c.b16 %v3366, %v3362
    %v3831 = vpack.c.b16 %v3367, %v3363
    %v3832 = vpack.c.b16 %v3372, %v3368
    %v3833 = vpack.c.b16 %v3373, %v3369
    %v3834 = vpack.c.b16 %v3374, %v3370
    %v3835 = vpack.c.b16 %v3375, %v3371
    %v3836 = vpack.c.b16 %v3380, %v3376
    %v3837 = vpack.c.b16 %v3381, %v3377
    %v3838 = vpack.c.b16 %v3382, %v3378
    %v3839 = vpack.c.b16 %v3383, %v3379
    %v3840 = vpack.c.b16 %v3388, %v3384
    %v3841 = vpack.c.b16 %v3389, %v3385
    %v3842 = vpack.c.b16 %v3390, %v3386
    %v3843 = vpack.c.b16 %v3391, %v3387
    %v3844 = vpack.c.b16 %v3396, %v3392
    %v3845 = vpack.c.b16 %v3397, %v3393
    %v3846 = vpack.c.b16 %v3398, %v3394
    %v3847 = vpack.c.b16 %v3399, %v3395
    %v3848 = vpack.c.b16 %v3404, %v3400
    %v3849 = vpack.c.b16 %v3405, %v3401
    %v3850 = vpack.c.b16 %v3406, %v3402
    %v3851 = vpack.c.b16 %v3407, %v3403
    %v3852 = vpack.c.b16 %v3412, %v3408
    %v3853 = vpack.c.b16 %v3413, %v3409
    %v3854 = vpack.c.b16 %v3414, %v3410
    %v3855 = vpack.c.b16 %v3415, %v3411
    %v3856 = vpack.c.b16 %v3420, %v3416
    %v3857 = vpack.c.b16 %v3421, %v3417
    %v3858 = vpack.c.b16 %v3422, %v3418
    %v3859 = vpack.c.b16 %v3423, %v3419
    %v3860 = vpack.c.b16 %v3428, %v3424
    %v3861 = vpack.c.b16 %v3429, %v3425
    %v3862 = vpack.c.b16 %v3430, %v3426
    %v3863 = vpack.c.b16 %v3431, %v3427
    %v3864 = vpack.c.b16 %v3436, %v3432
    %v3865 = vpack.c.b16 %v3437, %v3433
    %v3866 = vpack.c.b16 %v3438, %v3434
    %v3867 = vpack.c.b16 %v3439, %v3435
    %v3868 = vpack.c.b16 %v3444, %v3440
    %v3869 = vpack.c.b16 %v3445, %v3441
    %v3870 = vpack.c.b16 %v3446, %v3442
    %v3871 = vpack.c.b16 %v3447, %v3443
    %v3872 = vpack.c.b16 %v3452, %v3448
    %v3873 = vpack.c.b16 %v3453, %v3449
    %v3874 = vpack.c.b16 %v3454, %v3450
    %v3875 = vpack.c.b16 %v3455, %v3451
    %v3876 = vpack.c.b16 %v3460, %v3456
    %v3877 = vpack.c.b16 %v3461, %v3457
    %v3878 = vpack.c.b16 %v3462, %v3458
    %v3879 = vpack.c.b16 %v3463, %v3459
    %v3880 = vpack.c.b16 %v3468, %v3464
    %v3881 = vpack.c.b16 %v3469, %v3465
    %v3882 = vpack.c.b16 %v3470, %v3466
    %v3883 = vpack.c.b16 %v3471, %v3467
    %v3884 = vpack.c.b16 %v3476, %v3472
    %v3885 = vpack.c.b16 %v3477, %v3473
    %v3886 = vpack.c.b16 %v3478, %v3474
    %v3887 = vpack.c.b16 %v3479, %v3475
    %v3888 = vpack.c.b16 %v3484, %v3480
    %v3889 = vpack.c.b16 %v3485, %v3481
    %v3890 = vpack.c.b16 %v3486, %v3482
    %v3891 = vpack.c.b16 %v3487, %v3483
    %v3892 = vpack.c.b16 %v3492, %v3488
    %v3893 = vpack.c.b16 %v3493, %v3489
    %v3894 = vpack.c.b16 %v3494, %v3490
    %v3895 = vpack.c.b16 %v3495, %v3491
    %v3896 = vpack.c.b16 %v3500, %v3496
    %v3897 = vpack.c.b16 %v3501, %v3497
    %v3898 = vpack.c.b16 %v3502, %v3498
    %v3899 = vpack.c.b16 %v3503, %v3499
    %v3900 = vpack.c.b16 %v3508, %v3504
    %v3901 = vpack.c.b16 %v3509, %v3505
    %v3902 = vpack.c.b16 %v3510, %v3506
    %v3903 = vpack.c.b16 %v3511, %v3507
    %v3904 = vpack.c.b16 %v3516, %v3512
    %v3905 = vpack.c.b16 %v3517, %v3513
    %v3906 = vpack.c.b16 %v3518, %v3514
    %v3907 = vpack.c.b16 %v3519, %v3515
    %v3908 = vpack.c.b16 %v3524, %v3520
    %v3909 = vpack.c.b16 %v3525, %v3521
    %v3910 = vpack.c.b16 %v3526, %v3522
    %v3911 = vpack.c.b16 %v3527, %v3523
    %v3912 = vpack.c.b16 %v3532, %v3528
    %v3913 = vpack.c.b16 %v3533, %v3529
    %v3914 = vpack.c.b16 %v3534, %v3530
    %v3915 = vpack.c.b16 %v3535, %v3531
    %v3916 = vpack.c.b16 %v3540, %v3536
    %v3917 = vpack.c.b16 %v3541, %v3537
    %v3918 = vpack.c.b16 %v3542, %v3538
    %v3919 = vpack.c.b16 %v3543, %v3539
    %v3920 = vpack.c.b16 %v3548, %v3544
    %v3921 = vpack.c.b16 %v3549, %v3545
    %v3922 = vpack.c.b16 %v3550, %v3546
    %v3923 = vpack.c.b16 %v3551, %v3547
    %v3924 = vpack.c.b16 %v3556, %v3552
    %v3925 = vpack.c.b16 %v3557, %v3553
    %v3926 = vpack.c.b16 %v3558, %v3554
    %v3927 = vpack.c.b16 %v3559, %v3555
    %v3928 = vpack.c.b16 %v3564, %v3560
    %v3929 = vpack.c.b16 %v3565, %v3561
    %v3930 = vpack.c.b16 %v3566, %v3562
    %v3931 = vpack.c.b16 %v3567, %v3563
    %v3932 = vpack.c.b16 %v3572, %v3568
    %v3933 = vpack.c.b16 %v3573, %v3569
    %v3934 = vpack.c.b16 %v3574, %v3570
    %v3935 = vpack.c.b16 %v3575, %v3571
    %v3936 = vpack.c.b16 %v3580, %v3576
    %v3937 = vpack.c.b16 %v3581, %v3577
    %v3938 = vpack.c.b16 %v3582, %v3578
    %v3939 = vpack.c.b16 %v3583, %v3579
    %v3940 = vpack.c.b16 %v3588, %v3584
    %v3941 = vpack.c.b16 %v3589, %v3585
    %v3942 = vpack.c.b16 %v3590, %v3586
    %v3943 = vpack.c.b16 %v3591, %v3587
    %v3944 = vpack.c.b16 %v3596, %v3592
    %v3945 = vpack.c.b16 %v3597, %v3593
    %v3946 = vpack.c.b16 %v3598, %v3594
    %v3947 = vpack.c.b16 %v3599, %v3595
    %v3948 = vpack.c.b16 %v3604, %v3600
    %v3949 = vpack.c.b16 %v3605, %v3601
    %v3950 = vpack.c.b16 %v3606, %v3602
    %v3951 = vpack.c.b16 %v3607, %v3603
    %v3952 = vpack.c.b16 %v3612, %v3608
    %v3953 = vpack.c.b16 %v3613, %v3609
    %v3954 = vpack.c.b16 %v3614, %v3610
    %v3955 = vpack.c.b16 %v3615, %v3611
    %v3956 = vpack.c.b16 %v3620, %v3616
    %v3957 = vpack.c.b16 %v3621, %v3617
    %v3958 = vpack.c.b16 %v3622, %v3618
    %v3959 = vpack.c.b16 %v3623, %v3619
    %v3960 = vpack.c.b16 %v3628, %v3624
    %v3961 = vpack.c.b16 %v3629, %v3625
    %v3962 = vpack.c.b16 %v3630, %v3626
    %v3963 = vpack.c.b16 %v3631, %v3627
    %v3964 = vpack.c.b16 %v3636, %v3632
    %v3965 = vpack.c.b16 %v3637, %v3633
    %v3966 = vpack.c.b16 %v3638, %v3634
    %v3967 = vpack.c.b16 %v3639, %v3635
    %v3968 = vpack.c.b16 %v3644, %v3640
    %v3969 = vpack.c.b16 %v3645, %v3641
    %v3970 = vpack.c.b16 %v3646, %v3642
    %v3971 = vpack.c.b16 %v3647, %v3643
    %v3972 = vpack.c.b16 %v3652, %v3648
    %v3973 = vpack.c.b16 %v3653, %v3649
    %v3974 = vpack.c.b16 %v3654, %v3650
    %v3975 = vpack.c.b16 %v3655, %v3651
    %v3976 = vpack.c.b16 %v3660, %v3656
    %v3977 = vpack.c.b16 %v3661, %v3657
    %v3978 = vpack.c.b16 %v3662, %v3658
    %v3979 = vpack.c.b16 %v3663, %v3659
    %v3980 = vpack.c.b16 %v3668, %v3664
    %v3981 = vpack.c.b16 %v3669, %v3665
    %v3982 = vpack.c.b16 %v3670, %v3666
    %v3983 = vpack.c.b16 %v3671, %v3667
    %v3984 = vpack.c.b16 %v3676, %v3672
    %v3985 = vpack.c.b16 %v3677, %v3673
    %v3986 = vpack.c.b16 %v3678, %v3674
    %v3987 = vpack.c.b16 %v3679, %v3675
    %v3988 = vpack.c.b16 %v3684, %v3680
    %v3989 = vpack.c.b16 %v3685, %v3681
    %v3990 = vpack.c.b16 %v3686, %v3682
    %v3991 = vpack.c.b16 %v3687, %v3683
    %v3992 = vpack.c.b16 %v3692, %v3688
    %v3993 = vpack.c.b16 %v3693, %v3689
    %v3994 = vpack.c.b16 %v3694, %v3690
    %v3995 = vpack.c.b16 %v3695, %v3691
    %v3996 = vpack.c.b16 %v3700, %v3696
    %v3997 = vpack.c.b16 %v3701, %v3697
    %v3998 = vpack.c.b16 %v3702, %v3698
    %v3999 = vpack.c.b16 %v3703, %v3699
    %v4000 = vpack.c.b16 %v3708, %v3704
    %v4001 = vpack.c.b16 %v3709, %v3705
    %v4002 = vpack.c.b16 %v3710, %v3706
    %v4003 = vpack.c.b16 %v3711, %v3707
    %v4004 = vpack.c.b16 %v3716, %v3712
    %v4005 = vpack.c.b16 %v3717, %v3713
    %v4006 = vpack.c.b16 %v3718, %v3714
    %v4007 = vpack.c.b16 %v3719, %v3715
    %v4008 = vpack.c.b16 %v3724, %v3720
    %v4009 = vpack.c.b16 %v3725, %v3721
    %v4010 = vpack.c.b16 %v3726, %v3722
    %v4011 = vpack.c.b16 %v3727, %v3723
    %v4012 = vpack.c.b16 %v3732, %v3728
    %v4013 = vpack.c.b16 %v3733, %v3729
    %v4014 = vpack.c.b16 %v3734, %v3730
    %v4015 = vpack.c.b16 %v3735, %v3731
    %v4016 = vpack.c.b16 %v3740, %v3736
    %v4017 = vpack.c.b16 %v3741, %v3737
    %v4018 = vpack.c.b16 %v3742, %v3738
    %v4019 = vpack.c.b16 %v3743, %v3739
    %v4020 = vpack.c.b16 %v3748, %v3744
    %v4021 = vpack.c.b16 %v3749, %v3745
    %v4022 = vpack.c.b16 %v3750, %v3746
    %v4023 = vpack.c.b16 %v3751, %v3747
    %v4024 = vpack.c.b16 %v3756, %v3752
    %v4025 = vpack.c.b16 %v3757, %v3753
    %v4026 = vpack.c.b16 %v3758, %v3754
    %v4027 = vpack.c.b16 %v3759, %v3755
    %v4028 = vpack.c.b16 %v3764, %v3760
    %v4029 = vpack.c.b16 %v3765, %v3761
    %v4030 = vpack.c.b16 %v3766, %v3762
    %v4031 = vpack.c.b16 %v3767, %v3763
    %v4032 = vpack.c.b16 %v3772, %v3768
    %v4033 = vpack.c.b16 %v3773, %v3769
    %v4034 = vpack.c.b16 %v3774, %v3770
    %v4035 = vpack.c.b16 %v3775, %v3771
    %v4036 = vpack.c.b16 %v3780, %v3776
    %v4037 = vpack.c.b16 %v3781, %v3777
    %v4038 = vpack.c.b16 %v3782, %v3778
    %v4039 = vpack.c.b16 %v3783, %v3779
    %4296 = vmatprep.subr.bf16.mxu0 %v3813
    %4297 = vmatpush1.bf16.msra.mxu0 %v3812
    %4298 = vmatprep.subr.bf16.mxu0 %v3809
    %4299 = vmatpush1.bf16.msra.mxu0 %v3808
    %4300 = vmatprep.subr.bf16.mxu0 %v3805
    %4301 = vmatpush1.bf16.msra.mxu0 %v3804
    %4302 = vmatprep.subr.bf16.mxu0 %v3801
    %4303 = vmatpush1.bf16.msra.mxu0 %v3800
    %4304 = vmatprep.subr.bf16.mxu0 %v3797
    %4305 = vmatpush1.bf16.msra.mxu0 %v3796
    %4306 = vmatprep.subr.bf16.mxu0 %v3793
    %4307 = vmatpush1.bf16.msra.mxu0 %v3792
    %4308 = vmatprep.subr.bf16.mxu0 %v3789
    %4309 = vmatpush1.bf16.msra.mxu0 %v3788
    %4310 = vmatprep.subr.bf16.mxu0 %v3785
    %4311 = vmatpush1.bf16.msra.mxu0 %v3784
    %4312 = vmatprep.subr.bf16.mxu0 %v3845
    %4313 = vmatpush2.bf16.msra.mxu0 %v3844
    %4314 = vmatprep.subr.bf16.mxu0 %v3841
    %4315 = vmatpush2.bf16.msra.mxu0 %v3840
    %4316 = vmatprep.subr.bf16.mxu0 %v3837
    %4317 = vmatpush2.bf16.msra.mxu0 %v3836
    %4318 = vmatprep.subr.bf16.mxu0 %v3833
    %4319 = vmatpush2.bf16.msra.mxu0 %v3832
    %4320 = vmatprep.subr.bf16.mxu0 %v3829
    %4321 = vmatpush2.bf16.msra.mxu0 %v3828
    %4322 = vmatprep.subr.bf16.mxu0 %v3825
    %4323 = vmatpush2.bf16.msra.mxu0 %v3824
    %4324 = vmatprep.subr.bf16.mxu0 %v3821
    %4325 = vmatpush2.bf16.msra.mxu0 %v3820
    %4326 = vmatprep.subr.bf16.mxu0 %v3817
    %4327 = vmatpush2.bf16.msra.mxu0 %v3816
    %4328 = vmatprep.mubr.bf16.mxu0 %v845
    %4329 = vmatmul.mubr.bf16.gmra.mxu0 %v844
    %v4330 = vpop.f32.mrf.mxu0
    %v4331 = vadd.f32 %v1387, %v4330
    %v4332 = vpop.f32.mrf.mxu0
    %v4333 = vadd.f32 %v1391, %v4332
    %v4334 = vpop.f32.mrf.mxu0
    %v4335 = vpop.f32.mrf.mxu0
    %4336 = vdwg.mxu0
    %4337 = vmatprep.subr.bf16.mxu0 %v3877
    %4338 = vmatpush1.bf16.msra.mxu0 %v3876
    %4339 = vmatprep.subr.bf16.mxu0 %v3873
    %4340 = vmatpush1.bf16.msra.mxu0 %v3872
    %4341 = vmatprep.subr.bf16.mxu0 %v3869
    %4342 = vmatpush1.bf16.msra.mxu0 %v3868
    %4343 = vmatprep.subr.bf16.mxu0 %v3865
    %4344 = vmatpush1.bf16.msra.mxu0 %v3864
    %4345 = vmatprep.subr.bf16.mxu0 %v3861
    %4346 = vmatpush1.bf16.msra.mxu0 %v3860
    %4347 = vmatprep.subr.bf16.mxu0 %v3857
    %4348 = vmatpush1.bf16.msra.mxu0 %v3856
    %4349 = vmatprep.subr.bf16.mxu0 %v3853
    %4350 = vmatpush1.bf16.msra.mxu0 %v3852
    %4351 = vmatprep.subr.bf16.mxu0 %v3849
    %4352 = vmatpush1.bf16.msra.mxu0 %v3848
    %4353 = vmatprep.subr.bf16.mxu0 %v3909
    %4354 = vmatpush2.bf16.msra.mxu0 %v3908
    %4355 = vmatprep.subr.bf16.mxu0 %v3905
    %4356 = vmatpush2.bf16.msra.mxu0 %v3904
    %4357 = vmatprep.subr.bf16.mxu0 %v3901
    %4358 = vmatpush2.bf16.msra.mxu0 %v3900
    %4359 = vmatprep.subr.bf16.mxu0 %v3897
    %4360 = vmatpush2.bf16.msra.mxu0 %v3896
    %4361 = vmatprep.subr.bf16.mxu0 %v3893
    %4362 = vmatpush2.bf16.msra.mxu0 %v3892
    %4363 = vmatprep.subr.bf16.mxu0 %v3889
    %4364 = vmatpush2.bf16.msra.mxu0 %v3888
    %4365 = vmatprep.subr.bf16.mxu0 %v3885
    %4366 = vmatpush2.bf16.msra.mxu0 %v3884
    %4367 = vmatprep.subr.bf16.mxu0 %v3881
    %4368 = vmatpush2.bf16.msra.mxu0 %v3880
    %4369 = vmatprep.mubr.bf16.mxu0 %v847
    %4370 = vmatmul.mubr.bf16.gmra.mxu0 %v846
    %v4371 = vpop.f32.mrf.mxu0
    %v4372 = vadd.f32 %v4331, %v4371
    %v4373 = vpop.f32.mrf.mxu0
    %v4374 = vadd.f32 %v4333, %v4373
    %v4375 = vpop.f32.mrf.mxu0
    %v4376 = vpop.f32.mrf.mxu0
    %4377 = vdwg.mxu0
    %4378 = vmatprep.subr.bf16.mxu0 %v3941
    %4379 = vmatpush1.bf16.msra.mxu0 %v3940
    %4380 = vmatprep.subr.bf16.mxu0 %v3937
    %4381 = vmatpush1.bf16.msra.mxu0 %v3936
    %4382 = vmatprep.subr.bf16.mxu0 %v3933
    %4383 = vmatpush1.bf16.msra.mxu0 %v3932
    %4384 = vmatprep.subr.bf16.mxu0 %v3929
    %4385 = vmatpush1.bf16.msra.mxu0 %v3928
    %4386 = vmatprep.subr.bf16.mxu0 %v3925
    %4387 = vmatpush1.bf16.msra.mxu0 %v3924
    %4388 = vmatprep.subr.bf16.mxu0 %v3921
    %4389 = vmatpush1.bf16.msra.mxu0 %v3920
    %4390 = vmatprep.subr.bf16.mxu0 %v3917
    %4391 = vmatpush1.bf16.msra.mxu0 %v3916
    %4392 = vmatprep.subr.bf16.mxu0 %v3913
    %4393 = vmatpush1.bf16.msra.mxu0 %v3912
    %4394 = vmatprep.subr.bf16.mxu0 %v3973
    %4395 = vmatpush2.bf16.msra.mxu0 %v3972
    %4396 = vmatprep.subr.bf16.mxu0 %v3969
    %4397 = vmatpush2.bf16.msra.mxu0 %v3968
    %4398 = vmatprep.subr.bf16.mxu0 %v3965
    %4399 = vmatpush2.bf16.msra.mxu0 %v3964
    %4400 = vmatprep.subr.bf16.mxu0 %v3961
    %4401 = vmatpush2.bf16.msra.mxu0 %v3960
    %4402 = vmatprep.subr.bf16.mxu0 %v3957
    %4403 = vmatpush2.bf16.msra.mxu0 %v3956
    %4404 = vmatprep.subr.bf16.mxu0 %v3953
    %4405 = vmatpush2.bf16.msra.mxu0 %v3952
    %4406 = vmatprep.subr.bf16.mxu0 %v3949
    %4407 = vmatpush2.bf16.msra.mxu0 %v3948
    %4408 = vmatprep.subr.bf16.mxu0 %v3945
    %4409 = vmatpush2.bf16.msra.mxu0 %v3944
    %4410 = vmatprep.mubr.bf16.mxu0 %v849
    %4411 = vmatmul.mubr.bf16.gmra.mxu0 %v848
    %v4412 = vpop.f32.mrf.mxu0
    %v4413 = vadd.f32 %v4372, %v4412
    %v4414 = vpop.f32.mrf.mxu0
    %v4415 = vadd.f32 %v4374, %v4414
    %v4416 = vpop.f32.mrf.mxu0
    %v4417 = vpop.f32.mrf.mxu0
    %4418 = vdwg.mxu0
    %4419 = vmatprep.subr.bf16.mxu0 %v4005
    %4420 = vmatpush1.bf16.msra.mxu0 %v4004
    %4421 = vmatprep.subr.bf16.mxu0 %v4001
    %4422 = vmatpush1.bf16.msra.mxu0 %v4000
    %4423 = vmatprep.subr.bf16.mxu0 %v3997
    %4424 = vmatpush1.bf16.msra.mxu0 %v3996
    %4425 = vmatprep.subr.bf16.mxu0 %v3993
    %4426 = vmatpush1.bf16.msra.mxu0 %v3992
    %4427 = vmatprep.subr.bf16.mxu0 %v3989
    %4428 = vmatpush1.bf16.msra.mxu0 %v3988
    %4429 = vmatprep.subr.bf16.mxu0 %v3985
    %4430 = vmatpush1.bf16.msra.mxu0 %v3984
    %4431 = vmatprep.subr.bf16.mxu0 %v3981
    %4432 = vmatpush1.bf16.msra.mxu0 %v3980
    %4433 = vmatprep.subr.bf16.mxu0 %v3977
    %4434 = vmatpush1.bf16.msra.mxu0 %v3976
    %4435 = vmatprep.subr.bf16.mxu0 %v4037
    %4436 = vmatpush2.bf16.msra.mxu0 %v4036
    %4437 = vmatprep.subr.bf16.mxu0 %v4033
    %4438 = vmatpush2.bf16.msra.mxu0 %v4032
    %4439 = vmatprep.subr.bf16.mxu0 %v4029
    %4440 = vmatpush2.bf16.msra.mxu0 %v4028
    %4441 = vmatprep.subr.bf16.mxu0 %v4025
    %4442 = vmatpush2.bf16.msra.mxu0 %v4024
    %4443 = vmatprep.subr.bf16.mxu0 %v4021
    %4444 = vmatpush2.bf16.msra.mxu0 %v4020
    %4445 = vmatprep.subr.bf16.mxu0 %v4017
    %4446 = vmatpush2.bf16.msra.mxu0 %v4016
    %4447 = vmatprep.subr.bf16.mxu0 %v4013
    %4448 = vmatpush2.bf16.msra.mxu0 %v4012
    %4449 = vmatprep.subr.bf16.mxu0 %v4009
    %4450 = vmatpush2.bf16.msra.mxu0 %v4008
    %4451 = vmatprep.mubr.bf16.mxu0 %v851
    %4452 = vmatmul.mubr.bf16.gmra.mxu0 %v850
    %v4453 = vpop.f32.mrf.mxu0
    %v4454 = vadd.f32 %v4413, %v4453
    %v4455 = vpop.f32.mrf.mxu0
    %v4456 = vadd.f32 %v4415, %v4455
    %v4457 = vpop.f32.mrf.mxu0
    %v4458 = vpop.f32.mrf.mxu0
    %4459 = vdwg.mxu0
    %4460 = vmatprep.subr.bf16.mxu0 %v3815
    %4461 = vmatpush1.bf16.msra.mxu0 %v3814
    %4462 = vmatprep.subr.bf16.mxu0 %v3811
    %4463 = vmatpush1.bf16.msra.mxu0 %v3810
    %4464 = vmatprep.subr.bf16.mxu0 %v3807
    %4465 = vmatpush1.bf16.msra.mxu0 %v3806
    %4466 = vmatprep.subr.bf16.mxu0 %v3803
    %4467 = vmatpush1.bf16.msra.mxu0 %v3802
    %4468 = vmatprep.subr.bf16.mxu0 %v3799
    %4469 = vmatpush1.bf16.msra.mxu0 %v3798
    %4470 = vmatprep.subr.bf16.mxu0 %v3795
    %4471 = vmatpush1.bf16.msra.mxu0 %v3794
    %4472 = vmatprep.subr.bf16.mxu0 %v3791
    %4473 = vmatpush1.bf16.msra.mxu0 %v3790
    %4474 = vmatprep.subr.bf16.mxu0 %v3787
    %4475 = vmatpush1.bf16.msra.mxu0 %v3786
    %4476 = vmatprep.subr.bf16.mxu0 %v3847
    %4477 = vmatpush2.bf16.msra.mxu0 %v3846
    %4478 = vmatprep.subr.bf16.mxu0 %v3843
    %4479 = vmatpush2.bf16.msra.mxu0 %v3842
    %4480 = vmatprep.subr.bf16.mxu0 %v3839
    %4481 = vmatpush2.bf16.msra.mxu0 %v3838
    %4482 = vmatprep.subr.bf16.mxu0 %v3835
    %4483 = vmatpush2.bf16.msra.mxu0 %v3834
    %4484 = vmatprep.subr.bf16.mxu0 %v3831
    %4485 = vmatpush2.bf16.msra.mxu0 %v3830
    %4486 = vmatprep.subr.bf16.mxu0 %v3827
    %4487 = vmatpush2.bf16.msra.mxu0 %v3826
    %4488 = vmatprep.subr.bf16.mxu0 %v3823
    %4489 = vmatpush2.bf16.msra.mxu0 %v3822
    %4490 = vmatprep.subr.bf16.mxu0 %v3819
    %4491 = vmatpush2.bf16.msra.mxu0 %v3818
    %4492 = vmatprep.mubr.bf16.mxu0 %v845
    %4493 = vmatmul.mubr.bf16.gmra.mxu0 %v844
    %v4494 = vpop.f32.mrf.mxu0
    %v4495 = vadd.f32 %v1395, %v4494
    %v4496 = vpop.f32.mrf.mxu0
    %v4497 = vadd.f32 %v1399, %v4496
    %v4498 = vpop.f32.mrf.mxu0
    %v4499 = vpop.f32.mrf.mxu0
    %4500 = vdwg.mxu0
    %4501 = vmatprep.subr.bf16.mxu0 %v3879
    %4502 = vmatpush1.bf16.msra.mxu0 %v3878
    %4503 = vmatprep.subr.bf16.mxu0 %v3875
    %4504 = vmatpush1.bf16.msra.mxu0 %v3874
    %4505 = vmatprep.subr.bf16.mxu0 %v3871
    %4506 = vmatpush1.bf16.msra.mxu0 %v3870
    %4507 = vmatprep.subr.bf16.mxu0 %v3867
    %4508 = vmatpush1.bf16.msra.mxu0 %v3866
    %4509 = vmatprep.subr.bf16.mxu0 %v3863
    %4510 = vmatpush1.bf16.msra.mxu0 %v3862
    %4511 = vmatprep.subr.bf16.mxu0 %v3859
    %4512 = vmatpush1.bf16.msra.mxu0 %v3858
    %4513 = vmatprep.subr.bf16.mxu0 %v3855
    %4514 = vmatpush1.bf16.msra.mxu0 %v3854
    %4515 = vmatprep.subr.bf16.mxu0 %v3851
    %4516 = vmatpush1.bf16.msra.mxu0 %v3850
    %4517 = vmatprep.subr.bf16.mxu0 %v3911
    %4518 = vmatpush2.bf16.msra.mxu0 %v3910
    %4519 = vmatprep.subr.bf16.mxu0 %v3907
    %4520 = vmatpush2.bf16.msra.mxu0 %v3906
    %4521 = vmatprep.subr.bf16.mxu0 %v3903
    %4522 = vmatpush2.bf16.msra.mxu0 %v3902
    %4523 = vmatprep.subr.bf16.mxu0 %v3899
    %4524 = vmatpush2.bf16.msra.mxu0 %v3898
    %4525 = vmatprep.subr.bf16.mxu0 %v3895
    %4526 = vmatpush2.bf16.msra.mxu0 %v3894
    %4527 = vmatprep.subr.bf16.mxu0 %v3891
    %4528 = vmatpush2.bf16.msra.mxu0 %v3890
    %4529 = vmatprep.subr.bf16.mxu0 %v3887
    %4530 = vmatpush2.bf16.msra.mxu0 %v3886
    %4531 = vmatprep.subr.bf16.mxu0 %v3883
    %4532 = vmatpush2.bf16.msra.mxu0 %v3882
    %4533 = vmatprep.mubr.bf16.mxu0 %v847
    %4534 = vmatmul.mubr.bf16.gmra.mxu0 %v846
    %v4535 = vpop.f32.mrf.mxu0
    %v4536 = vadd.f32 %v4495, %v4535
    %v4537 = vpop.f32.mrf.mxu0
    %v4538 = vadd.f32 %v4497, %v4537
    %v4539 = vpop.f32.mrf.mxu0
    %v4540 = vpop.f32.mrf.mxu0
    %4541 = vdwg.mxu0
    %4542 = vmatprep.subr.bf16.mxu0 %v3943
    %4543 = vmatpush1.bf16.msra.mxu0 %v3942
    %4544 = vmatprep.subr.bf16.mxu0 %v3939
    %4545 = vmatpush1.bf16.msra.mxu0 %v3938
    %4546 = vmatprep.subr.bf16.mxu0 %v3935
    %4547 = vmatpush1.bf16.msra.mxu0 %v3934
    %4548 = vmatprep.subr.bf16.mxu0 %v3931
    %4549 = vmatpush1.bf16.msra.mxu0 %v3930
    %4550 = vmatprep.subr.bf16.mxu0 %v3927
    %4551 = vmatpush1.bf16.msra.mxu0 %v3926
    %4552 = vmatprep.subr.bf16.mxu0 %v3923
    %4553 = vmatpush1.bf16.msra.mxu0 %v3922
    %4554 = vmatprep.subr.bf16.mxu0 %v3919
    %4555 = vmatpush1.bf16.msra.mxu0 %v3918
    %4556 = vmatprep.subr.bf16.mxu0 %v3915
    %4557 = vmatpush1.bf16.msra.mxu0 %v3914
    %4558 = vmatprep.subr.bf16.mxu0 %v3975
    %4559 = vmatpush2.bf16.msra.mxu0 %v3974
    %4560 = vmatprep.subr.bf16.mxu0 %v3971
    %4561 = vmatpush2.bf16.msra.mxu0 %v3970
    %4562 = vmatprep.subr.bf16.mxu0 %v3967
    %4563 = vmatpush2.bf16.msra.mxu0 %v3966
    %4564 = vmatprep.subr.bf16.mxu0 %v3963
    %4565 = vmatpush2.bf16.msra.mxu0 %v3962
    %4566 = vmatprep.subr.bf16.mxu0 %v3959
    %4567 = vmatpush2.bf16.msra.mxu0 %v3958
    %4568 = vmatprep.subr.bf16.mxu0 %v3955
    %4569 = vmatpush2.bf16.msra.mxu0 %v3954
    %4570 = vmatprep.subr.bf16.mxu0 %v3951
    %4571 = vmatpush2.bf16.msra.mxu0 %v3950
    %4572 = vmatprep.subr.bf16.mxu0 %v3947
    %4573 = vmatpush2.bf16.msra.mxu0 %v3946
    %4574 = vmatprep.mubr.bf16.mxu0 %v849
    %4575 = vmatmul.mubr.bf16.gmra.mxu0 %v848
    %v4576 = vpop.f32.mrf.mxu0
    %v4577 = vadd.f32 %v4536, %v4576
    %v4578 = vpop.f32.mrf.mxu0
    %v4579 = vadd.f32 %v4538, %v4578
    %v4580 = vpop.f32.mrf.mxu0
    %v4581 = vpop.f32.mrf.mxu0
    %4582 = vdwg.mxu0
    %4583 = vmatprep.subr.bf16.mxu0 %v4007
    %4584 = vmatpush1.bf16.msra.mxu0 %v4006
    %4585 = vmatprep.subr.bf16.mxu0 %v4003
    %4586 = vmatpush1.bf16.msra.mxu0 %v4002
    %4587 = vmatprep.subr.bf16.mxu0 %v3999
    %4588 = vmatpush1.bf16.msra.mxu0 %v3998
    %4589 = vmatprep.subr.bf16.mxu0 %v3995
    %4590 = vmatpush1.bf16.msra.mxu0 %v3994
    %4591 = vmatprep.subr.bf16.mxu0 %v3991
    %4592 = vmatpush1.bf16.msra.mxu0 %v3990
    %4593 = vmatprep.subr.bf16.mxu0 %v3987
    %4594 = vmatpush1.bf16.msra.mxu0 %v3986
    %4595 = vmatprep.subr.bf16.mxu0 %v3983
    %4596 = vmatpush1.bf16.msra.mxu0 %v3982
    %4597 = vmatprep.subr.bf16.mxu0 %v3979
    %4598 = vmatpush1.bf16.msra.mxu0 %v3978
    %4599 = vmatprep.subr.bf16.mxu0 %v4039
    %4600 = vmatpush2.bf16.msra.mxu0 %v4038
    %4601 = vmatprep.subr.bf16.mxu0 %v4035
    %4602 = vmatpush2.bf16.msra.mxu0 %v4034
    %4603 = vmatprep.subr.bf16.mxu0 %v4031
    %4604 = vmatpush2.bf16.msra.mxu0 %v4030
    %4605 = vmatprep.subr.bf16.mxu0 %v4027
    %4606 = vmatpush2.bf16.msra.mxu0 %v4026
    %4607 = vmatprep.subr.bf16.mxu0 %v4023
    %4608 = vmatpush2.bf16.msra.mxu0 %v4022
    %4609 = vmatprep.subr.bf16.mxu0 %v4019
    %4610 = vmatpush2.bf16.msra.mxu0 %v4018
    %4611 = vmatprep.subr.bf16.mxu0 %v4015
    %4612 = vmatpush2.bf16.msra.mxu0 %v4014
    %4613 = vmatprep.subr.bf16.mxu0 %v4011
    %4614 = vmatpush2.bf16.msra.mxu0 %v4010
    %4615 = vmatprep.mubr.bf16.mxu0 %v851
    %4616 = vmatmul.mubr.bf16.gmra.mxu0 %v850
    %v4617 = vpop.f32.mrf.mxu0
    %v4618 = vadd.f32 %v4577, %v4617
    %v4619 = vpop.f32.mrf.mxu0
    %v4620 = vadd.f32 %v4579, %v4619
    %v4621 = vpop.f32.mrf.mxu0
    %v4622 = vpop.f32.mrf.mxu0
    %4623 = vdwg.mxu0
    %vm4624 = vcmp.gt.f32.partialorder %v2846, 0.0
    %vm4625 = vcmp.gt.f32.partialorder %v2848, 0.0
    %vm4626 = vcmp.gt.f32.partialorder %v3010, 0.0
    %vm4627 = vcmp.gt.f32.partialorder %v3012, 0.0
    %vm4628 = vcmp.gt.f32.partialorder %v4454, 0.0
    %vm4629 = vcmp.gt.f32.partialorder %v4456, 0.0
    %vm4630 = vcmp.gt.f32.partialorder %v4618, 0.0
    %vm4631 = vcmp.gt.f32.partialorder %v4620, 0.0
    %v4632 = vmul.f32 %v2846, 0.01
    %v4633 = vmul.f32 %v2848, 0.01
    %v4634 = vmul.f32 %v3010, 0.01
    %v4635 = vmul.f32 %v3012, 0.01
    %v4636 = vmul.f32 %v4454, 0.01
    %v4637 = vmul.f32 %v4456, 0.01
    %v4638 = vmul.f32 %v4618, 0.01
    %v4639 = vmul.f32 %v4620, 0.01
    %v4640 = vsel %vm4624, %v2846, %v4632
    %v4641 = vsel %vm4625, %v2848, %v4633
    %v4642 = vsel %vm4626, %v3010, %v4634
    %v4643 = vsel %vm4627, %v3012, %v4635
    %v4644 = vsel %vm4628, %v4454, %v4636
    %v4645 = vsel %vm4629, %v4456, %v4637
    %v4646 = vsel %vm4630, %v4618, %v4638
    %v4647 = vsel %vm4631, %v4620, %v4639
    %v4648 = vpack.c.bf16 %v4640, %v4640
    %v4649 = vpack.c.bf16 %v4641, %v4641
    %v4650 = vpack.c.bf16 %v4642, %v4642
    %v4651 = vpack.c.bf16 %v4643, %v4643
    %v4652 = vpack.c.bf16 %v4644, %v4644
    %v4653 = vpack.c.bf16 %v4645, %v4645
    %v4654 = vpack.c.bf16 %v4646, %v4646
    %v4655 = vpack.c.bf16 %v4647, %v4647
    %v4656 = vld [vmem:[#allocation10] sm:$0xff]
    %v4657 = vld [vmem:[#allocation10 + $0x8] sm:$0xff]
    %v4658 = vld [vmem:[#allocation10 + $0x10] sm:$0xff]
    %v4659 = vld [vmem:[#allocation10 + $0x18] sm:$0xff]
    %v4660 = vld [vmem:[#allocation10 + $0x20] sm:$0xff]
    %v4661 = vld [vmem:[#allocation10 + $0x28] sm:$0xff]
    %v4662 = vld [vmem:[#allocation10 + $0x30] sm:$0xff]
    %v4663 = vld [vmem:[#allocation10 + $0x38] sm:$0xff]
    %v4664 = vld [vmem:[#allocation10 + $0x40] sm:$0xff]
    %v4665 = vld [vmem:[#allocation10 + $0x48] sm:$0xff]
    %v4666 = vld [vmem:[#allocation10 + $0x50] sm:$0xff]
    %v4667 = vld [vmem:[#allocation10 + $0x58] sm:$0xff]
    %v4668 = vld [vmem:[#allocation10 + $0x60] sm:$0xff]
    %v4669 = vld [vmem:[#allocation10 + $0x68] sm:$0xff]
    %v4670 = vld [vmem:[#allocation10 + $0x70] sm:$0xff]
    %v4671 = vld [vmem:[#allocation10 + $0x78] sm:$0xff]
    %v4672 = vld [vmem:[#allocation10 + $0x80] sm:$0xff]
    %v4673 = vld [vmem:[#allocation10 + $0x88] sm:$0xff]
    %v4674 = vld [vmem:[#allocation10 + $0x90] sm:$0xff]
    %v4675 = vld [vmem:[#allocation10 + $0x98] sm:$0xff]
    %v4676 = vld [vmem:[#allocation10 + $0xa0] sm:$0xff]
    %v4677 = vld [vmem:[#allocation10 + $0xa8] sm:$0xff]
    %v4678 = vld [vmem:[#allocation10 + $0xb0] sm:$0xff]
    %v4679 = vld [vmem:[#allocation10 + $0xb8] sm:$0xff]
    %v4680 = vld [vmem:[#allocation10 + $0xc0] sm:$0xff]
    %v4681 = vld [vmem:[#allocation10 + $0xc8] sm:$0xff]
    %v4682 = vld [vmem:[#allocation10 + $0xd0] sm:$0xff]
    %v4683 = vld [vmem:[#allocation10 + $0xd8] sm:$0xff]
    %v4684 = vld [vmem:[#allocation10 + $0xe0] sm:$0xff]
    %v4685 = vld [vmem:[#allocation10 + $0xe8] sm:$0xff]
    %v4686 = vld [vmem:[#allocation10 + $0xf0] sm:$0xff]
    %v4687 = vld [vmem:[#allocation10 + $0xf8] sm:$0xff]
    %v4688 = vld [vmem:[#allocation10 + $0x100] sm:$0xff]
    %v4689 = vld [vmem:[#allocation10 + $0x108] sm:$0xff]
    %v4690 = vld [vmem:[#allocation10 + $0x110] sm:$0xff]
    %v4691 = vld [vmem:[#allocation10 + $0x118] sm:$0xff]
    %v4692 = vld [vmem:[#allocation10 + $0x120] sm:$0xff]
    %v4693 = vld [vmem:[#allocation10 + $0x128] sm:$0xff]
    %v4694 = vld [vmem:[#allocation10 + $0x130] sm:$0xff]
    %v4695 = vld [vmem:[#allocation10 + $0x138] sm:$0xff]
    %v4696 = vld [vmem:[#allocation10 + $0x140] sm:$0xff]
    %v4697 = vld [vmem:[#allocation10 + $0x148] sm:$0xff]
    %v4698 = vld [vmem:[#allocation10 + $0x150] sm:$0xff]
    %v4699 = vld [vmem:[#allocation10 + $0x158] sm:$0xff]
    %v4700 = vld [vmem:[#allocation10 + $0x160] sm:$0xff]
    %v4701 = vld [vmem:[#allocation10 + $0x168] sm:$0xff]
    %v4702 = vld [vmem:[#allocation10 + $0x170] sm:$0xff]
    %v4703 = vld [vmem:[#allocation10 + $0x178] sm:$0xff]
    %v4704 = vld [vmem:[#allocation10 + $0x180] sm:$0xff]
    %v4705 = vld [vmem:[#allocation10 + $0x188] sm:$0xff]
    %v4706 = vld [vmem:[#allocation10 + $0x190] sm:$0xff]
    %v4707 = vld [vmem:[#allocation10 + $0x198] sm:$0xff]
    %v4708 = vld [vmem:[#allocation10 + $0x1a0] sm:$0xff]
    %v4709 = vld [vmem:[#allocation10 + $0x1a8] sm:$0xff]
    %v4710 = vld [vmem:[#allocation10 + $0x1b0] sm:$0xff]
    %v4711 = vld [vmem:[#allocation10 + $0x1b8] sm:$0xff]
    %v4712 = vld [vmem:[#allocation10 + $0x1c0] sm:$0xff]
    %v4713 = vld [vmem:[#allocation10 + $0x1c8] sm:$0xff]
    %v4714 = vld [vmem:[#allocation10 + $0x1d0] sm:$0xff]
    %v4715 = vld [vmem:[#allocation10 + $0x1d8] sm:$0xff]
    %v4716 = vld [vmem:[#allocation10 + $0x1e0] sm:$0xff]
    %v4717 = vld [vmem:[#allocation10 + $0x1e8] sm:$0xff]
    %v4718 = vld [vmem:[#allocation10 + $0x1f0] sm:$0xff]
    %v4719 = vld [vmem:[#allocation10 + $0x1f8] sm:$0xff]
    %v4720 = vld [vmem:[#allocation10 + $0x200] sm:$0xff]
    %v4721 = vld [vmem:[#allocation10 + $0x208] sm:$0xff]
    %v4722 = vld [vmem:[#allocation10 + $0x210] sm:$0xff]
    %v4723 = vld [vmem:[#allocation10 + $0x218] sm:$0xff]
    %v4724 = vld [vmem:[#allocation10 + $0x220] sm:$0xff]
    %v4725 = vld [vmem:[#allocation10 + $0x228] sm:$0xff]
    %v4726 = vld [vmem:[#allocation10 + $0x230] sm:$0xff]
    %v4727 = vld [vmem:[#allocation10 + $0x238] sm:$0xff]
    %v4728 = vld [vmem:[#allocation10 + $0x240] sm:$0xff]
    %v4729 = vld [vmem:[#allocation10 + $0x248] sm:$0xff]
    %v4730 = vld [vmem:[#allocation10 + $0x250] sm:$0xff]
    %v4731 = vld [vmem:[#allocation10 + $0x258] sm:$0xff]
    %v4732 = vld [vmem:[#allocation10 + $0x260] sm:$0xff]
    %v4733 = vld [vmem:[#allocation10 + $0x268] sm:$0xff]
    %v4734 = vld [vmem:[#allocation10 + $0x270] sm:$0xff]
    %v4735 = vld [vmem:[#allocation10 + $0x278] sm:$0xff]
    %v4736 = vld [vmem:[#allocation10 + $0x280] sm:$0xff]
    %v4737 = vld [vmem:[#allocation10 + $0x288] sm:$0xff]
    %v4738 = vld [vmem:[#allocation10 + $0x290] sm:$0xff]
    %v4739 = vld [vmem:[#allocation10 + $0x298] sm:$0xff]
    %v4740 = vld [vmem:[#allocation10 + $0x2a0] sm:$0xff]
    %v4741 = vld [vmem:[#allocation10 + $0x2a8] sm:$0xff]
    %v4742 = vld [vmem:[#allocation10 + $0x2b0] sm:$0xff]
    %v4743 = vld [vmem:[#allocation10 + $0x2b8] sm:$0xff]
    %v4744 = vld [vmem:[#allocation10 + $0x2c0] sm:$0xff]
    %v4745 = vld [vmem:[#allocation10 + $0x2c8] sm:$0xff]
    %v4746 = vld [vmem:[#allocation10 + $0x2d0] sm:$0xff]
    %v4747 = vld [vmem:[#allocation10 + $0x2d8] sm:$0xff]
    %v4748 = vld [vmem:[#allocation10 + $0x2e0] sm:$0xff]
    %v4749 = vld [vmem:[#allocation10 + $0x2e8] sm:$0xff]
    %v4750 = vld [vmem:[#allocation10 + $0x2f0] sm:$0xff]
    %v4751 = vld [vmem:[#allocation10 + $0x2f8] sm:$0xff]
    %v4752 = vld [vmem:[#allocation10 + $0x300] sm:$0xff]
    %v4753 = vld [vmem:[#allocation10 + $0x308] sm:$0xff]
    %v4754 = vld [vmem:[#allocation10 + $0x310] sm:$0xff]
    %v4755 = vld [vmem:[#allocation10 + $0x318] sm:$0xff]
    %v4756 = vld [vmem:[#allocation10 + $0x320] sm:$0xff]
    %v4757 = vld [vmem:[#allocation10 + $0x328] sm:$0xff]
    %v4758 = vld [vmem:[#allocation10 + $0x330] sm:$0xff]
    %v4759 = vld [vmem:[#allocation10 + $0x338] sm:$0xff]
    %v4760 = vld [vmem:[#allocation10 + $0x340] sm:$0xff]
    %v4761 = vld [vmem:[#allocation10 + $0x348] sm:$0xff]
    %v4762 = vld [vmem:[#allocation10 + $0x350] sm:$0xff]
    %v4763 = vld [vmem:[#allocation10 + $0x358] sm:$0xff]
    %v4764 = vld [vmem:[#allocation10 + $0x360] sm:$0xff]
    %v4765 = vld [vmem:[#allocation10 + $0x368] sm:$0xff]
    %v4766 = vld [vmem:[#allocation10 + $0x370] sm:$0xff]
    %v4767 = vld [vmem:[#allocation10 + $0x378] sm:$0xff]
    %v4768 = vld [vmem:[#allocation10 + $0x380] sm:$0xff]
    %v4769 = vld [vmem:[#allocation10 + $0x388] sm:$0xff]
    %v4770 = vld [vmem:[#allocation10 + $0x390] sm:$0xff]
    %v4771 = vld [vmem:[#allocation10 + $0x398] sm:$0xff]
    %v4772 = vld [vmem:[#allocation10 + $0x3a0] sm:$0xff]
    %v4773 = vld [vmem:[#allocation10 + $0x3a8] sm:$0xff]
    %v4774 = vld [vmem:[#allocation10 + $0x3b0] sm:$0xff]
    %v4775 = vld [vmem:[#allocation10 + $0x3b8] sm:$0xff]
    %v4776 = vld [vmem:[#allocation10 + $0x3c0] sm:$0xff]
    %v4777 = vld [vmem:[#allocation10 + $0x3c8] sm:$0xff]
    %v4778 = vld [vmem:[#allocation10 + $0x3d0] sm:$0xff]
    %v4779 = vld [vmem:[#allocation10 + $0x3d8] sm:$0xff]
    %v4780 = vld [vmem:[#allocation10 + $0x3e0] sm:$0xff]
    %v4781 = vld [vmem:[#allocation10 + $0x3e8] sm:$0xff]
    %v4782 = vld [vmem:[#allocation10 + $0x3f0] sm:$0xff]
    %v4783 = vld [vmem:[#allocation10 + $0x3f8] sm:$0xff]
    %v4784 = vld [vmem:[#allocation11] sm:$0x3]
    %v4785 = vld [vmem:[#allocation11 + $0x2] sm:$0x3]
    %v4788 = vlaneseq
    %v4789 = vshrl.u32 %v4788, 7
    %v4790 = vsub.s32 0, %v4789
    %v4791 = vrot.slane %v4784, %v4790
    %v4792 = vlaneseq
    %v4793 = vshrl.u32 %v4792, 7
    %v4794 = vsub.s32 1, %v4793
    %v4795 = vrot.slane %v4784, %v4794
    %v4796 = vlaneseq
    %v4797 = vshrl.u32 %v4796, 7
    %v4798 = vsub.s32 0, %v4797
    %v4799 = vrot.slane %v4785, %v4798
    %v4800 = vlaneseq
    %v4801 = vshrl.u32 %v4800, 7
    %v4802 = vsub.s32 1, %v4801
    %v4803 = vrot.slane %v4785, %v4802
    %v4872 = vunpack.c.l.b16 %v4656
    %v4873 = vunpack.c.h.b16 %v4656
    %v4874 = vunpack.c.l.b16 %v4657
    %v4875 = vunpack.c.h.b16 %v4657
    %v4876 = vunpack.c.l.b16 %v4658
    %v4877 = vunpack.c.h.b16 %v4658
    %v4878 = vunpack.c.l.b16 %v4659
    %v4879 = vunpack.c.h.b16 %v4659
    %v4880 = vunpack.c.l.b16 %v4660
    %v4881 = vunpack.c.h.b16 %v4660
    %v4882 = vunpack.c.l.b16 %v4661
    %v4883 = vunpack.c.h.b16 %v4661
    %v4884 = vunpack.c.l.b16 %v4662
    %v4885 = vunpack.c.h.b16 %v4662
    %v4886 = vunpack.c.l.b16 %v4663
    %v4887 = vunpack.c.h.b16 %v4663
    %v4888 = vunpack.c.l.b16 %v4664
    %v4889 = vunpack.c.h.b16 %v4664
    %v4890 = vunpack.c.l.b16 %v4665
    %v4891 = vunpack.c.h.b16 %v4665
    %v4892 = vunpack.c.l.b16 %v4666
    %v4893 = vunpack.c.h.b16 %v4666
    %v4894 = vunpack.c.l.b16 %v4667
    %v4895 = vunpack.c.h.b16 %v4667
    %v4896 = vunpack.c.l.b16 %v4668
    %v4897 = vunpack.c.h.b16 %v4668
    %v4898 = vunpack.c.l.b16 %v4669
    %v4899 = vunpack.c.h.b16 %v4669
    %v4900 = vunpack.c.l.b16 %v4670
    %v4901 = vunpack.c.h.b16 %v4670
    %v4902 = vunpack.c.l.b16 %v4671
    %v4903 = vunpack.c.h.b16 %v4671
    %v4904 = vunpack.c.l.b16 %v4672
    %v4905 = vunpack.c.h.b16 %v4672
    %v4906 = vunpack.c.l.b16 %v4673
    %v4907 = vunpack.c.h.b16 %v4673
    %v4908 = vunpack.c.l.b16 %v4674
    %v4909 = vunpack.c.h.b16 %v4674
    %v4910 = vunpack.c.l.b16 %v4675
    %v4911 = vunpack.c.h.b16 %v4675
    %v4912 = vunpack.c.l.b16 %v4676
    %v4913 = vunpack.c.h.b16 %v4676
    %v4914 = vunpack.c.l.b16 %v4677
    %v4915 = vunpack.c.h.b16 %v4677
    %v4916 = vunpack.c.l.b16 %v4678
    %v4917 = vunpack.c.h.b16 %v4678
    %v4918 = vunpack.c.l.b16 %v4679
    %v4919 = vunpack.c.h.b16 %v4679
    %v4920 = vunpack.c.l.b16 %v4680
    %v4921 = vunpack.c.h.b16 %v4680
    %v4922 = vunpack.c.l.b16 %v4681
    %v4923 = vunpack.c.h.b16 %v4681
    %v4924 = vunpack.c.l.b16 %v4682
    %v4925 = vunpack.c.h.b16 %v4682
    %v4926 = vunpack.c.l.b16 %v4683
    %v4927 = vunpack.c.h.b16 %v4683
    %v4928 = vunpack.c.l.b16 %v4684
    %v4929 = vunpack.c.h.b16 %v4684
    %v4930 = vunpack.c.l.b16 %v4685
    %v4931 = vunpack.c.h.b16 %v4685
    %v4932 = vunpack.c.l.b16 %v4686
    %v4933 = vunpack.c.h.b16 %v4686
    %v4934 = vunpack.c.l.b16 %v4687
    %v4935 = vunpack.c.h.b16 %v4687
    %v4936 = vunpack.c.l.b16 %v4688
    %v4937 = vunpack.c.h.b16 %v4688
    %v4938 = vunpack.c.l.b16 %v4689
    %v4939 = vunpack.c.h.b16 %v4689
    %v4940 = vunpack.c.l.b16 %v4690
    %v4941 = vunpack.c.h.b16 %v4690
    %v4942 = vunpack.c.l.b16 %v4691
    %v4943 = vunpack.c.h.b16 %v4691
    %v4944 = vunpack.c.l.b16 %v4692
    %v4945 = vunpack.c.h.b16 %v4692
    %v4946 = vunpack.c.l.b16 %v4693
    %v4947 = vunpack.c.h.b16 %v4693
    %v4948 = vunpack.c.l.b16 %v4694
    %v4949 = vunpack.c.h.b16 %v4694
    %v4950 = vunpack.c.l.b16 %v4695
    %v4951 = vunpack.c.h.b16 %v4695
    %v4952 = vunpack.c.l.b16 %v4696
    %v4953 = vunpack.c.h.b16 %v4696
    %v4954 = vunpack.c.l.b16 %v4697
    %v4955 = vunpack.c.h.b16 %v4697
    %v4956 = vunpack.c.l.b16 %v4698
    %v4957 = vunpack.c.h.b16 %v4698
    %v4958 = vunpack.c.l.b16 %v4699
    %v4959 = vunpack.c.h.b16 %v4699
    %v4960 = vunpack.c.l.b16 %v4700
    %v4961 = vunpack.c.h.b16 %v4700
    %v4962 = vunpack.c.l.b16 %v4701
    %v4963 = vunpack.c.h.b16 %v4701
    %v4964 = vunpack.c.l.b16 %v4702
    %v4965 = vunpack.c.h.b16 %v4702
    %v4966 = vunpack.c.l.b16 %v4703
    %v4967 = vunpack.c.h.b16 %v4703
    %v4968 = vunpack.c.l.b16 %v4704
    %v4969 = vunpack.c.h.b16 %v4704
    %v4970 = vunpack.c.l.b16 %v4705
    %v4971 = vunpack.c.h.b16 %v4705
    %v4972 = vunpack.c.l.b16 %v4706
    %v4973 = vunpack.c.h.b16 %v4706
    %v4974 = vunpack.c.l.b16 %v4707
    %v4975 = vunpack.c.h.b16 %v4707
    %v4976 = vunpack.c.l.b16 %v4708
    %v4977 = vunpack.c.h.b16 %v4708
    %v4978 = vunpack.c.l.b16 %v4709
    %v4979 = vunpack.c.h.b16 %v4709
    %v4980 = vunpack.c.l.b16 %v4710
    %v4981 = vunpack.c.h.b16 %v4710
    %v4982 = vunpack.c.l.b16 %v4711
    %v4983 = vunpack.c.h.b16 %v4711
    %v4984 = vunpack.c.l.b16 %v4712
    %v4985 = vunpack.c.h.b16 %v4712
    %v4986 = vunpack.c.l.b16 %v4713
    %v4987 = vunpack.c.h.b16 %v4713
    %v4988 = vunpack.c.l.b16 %v4714
    %v4989 = vunpack.c.h.b16 %v4714
    %v4990 = vunpack.c.l.b16 %v4715
    %v4991 = vunpack.c.h.b16 %v4715
    %v4992 = vunpack.c.l.b16 %v4716
    %v4993 = vunpack.c.h.b16 %v4716
    %v4994 = vunpack.c.l.b16 %v4717
    %v4995 = vunpack.c.h.b16 %v4717
    %v4996 = vunpack.c.l.b16 %v4718
    %v4997 = vunpack.c.h.b16 %v4718
    %v4998 = vunpack.c.l.b16 %v4719
    %v4999 = vunpack.c.h.b16 %v4719
    %v5000 = vpack.c.b16 %v4874, %v4872
    %v5001 = vpack.c.b16 %v4875, %v4873
    %v5002 = vpack.c.b16 %v4878, %v4876
    %v5003 = vpack.c.b16 %v4879, %v4877
    %v5004 = vpack.c.b16 %v4882, %v4880
    %v5005 = vpack.c.b16 %v4883, %v4881
    %v5006 = vpack.c.b16 %v4886, %v4884
    %v5007 = vpack.c.b16 %v4887, %v4885
    %v5008 = vpack.c.b16 %v4890, %v4888
    %v5009 = vpack.c.b16 %v4891, %v4889
    %v5010 = vpack.c.b16 %v4894, %v4892
    %v5011 = vpack.c.b16 %v4895, %v4893
    %v5012 = vpack.c.b16 %v4898, %v4896
    %v5013 = vpack.c.b16 %v4899, %v4897
    %v5014 = vpack.c.b16 %v4902, %v4900
    %v5015 = vpack.c.b16 %v4903, %v4901
    %v5016 = vpack.c.b16 %v4906, %v4904
    %v5017 = vpack.c.b16 %v4907, %v4905
    %v5018 = vpack.c.b16 %v4910, %v4908
    %v5019 = vpack.c.b16 %v4911, %v4909
    %v5020 = vpack.c.b16 %v4914, %v4912
    %v5021 = vpack.c.b16 %v4915, %v4913
    %v5022 = vpack.c.b16 %v4918, %v4916
    %v5023 = vpack.c.b16 %v4919, %v4917
    %v5024 = vpack.c.b16 %v4922, %v4920
    %v5025 = vpack.c.b16 %v4923, %v4921
    %v5026 = vpack.c.b16 %v4926, %v4924
    %v5027 = vpack.c.b16 %v4927, %v4925
    %v5028 = vpack.c.b16 %v4930, %v4928
    %v5029 = vpack.c.b16 %v4931, %v4929
    %v5030 = vpack.c.b16 %v4934, %v4932
    %v5031 = vpack.c.b16 %v4935, %v4933
    %v5032 = vpack.c.b16 %v4938, %v4936
    %v5033 = vpack.c.b16 %v4939, %v4937
    %v5034 = vpack.c.b16 %v4942, %v4940
    %v5035 = vpack.c.b16 %v4943, %v4941
    %v5036 = vpack.c.b16 %v4946, %v4944
    %v5037 = vpack.c.b16 %v4947, %v4945
    %v5038 = vpack.c.b16 %v4950, %v4948
    %v5039 = vpack.c.b16 %v4951, %v4949
    %v5040 = vpack.c.b16 %v4954, %v4952
    %v5041 = vpack.c.b16 %v4955, %v4953
    %v5042 = vpack.c.b16 %v4958, %v4956
    %v5043 = vpack.c.b16 %v4959, %v4957
    %v5044 = vpack.c.b16 %v4962, %v4960
    %v5045 = vpack.c.b16 %v4963, %v4961
    %v5046 = vpack.c.b16 %v4966, %v4964
    %v5047 = vpack.c.b16 %v4967, %v4965
    %v5048 = vpack.c.b16 %v4970, %v4968
    %v5049 = vpack.c.b16 %v4971, %v4969
    %v5050 = vpack.c.b16 %v4974, %v4972
    %v5051 = vpack.c.b16 %v4975, %v4973
    %v5052 = vpack.c.b16 %v4978, %v4976
    %v5053 = vpack.c.b16 %v4979, %v4977
    %v5054 = vpack.c.b16 %v4982, %v4980
    %v5055 = vpack.c.b16 %v4983, %v4981
    %v5056 = vpack.c.b16 %v4986, %v4984
    %v5057 = vpack.c.b16 %v4987, %v4985
    %v5058 = vpack.c.b16 %v4990, %v4988
    %v5059 = vpack.c.b16 %v4991, %v4989
    %v5060 = vpack.c.b16 %v4994, %v4992
    %v5061 = vpack.c.b16 %v4995, %v4993
    %v5062 = vpack.c.b16 %v4998, %v4996
    %v5063 = vpack.c.b16 %v4999, %v4997
    %5128 = vmatprep.subr.bf16.mxu0 %v5015
    %5129 = vmatpush1.bf16.msra.mxu0 %v5014
    %5130 = vmatprep.subr.bf16.mxu0 %v5013
    %5131 = vmatpush1.bf16.msra.mxu0 %v5012
    %5132 = vmatprep.subr.bf16.mxu0 %v5011
    %5133 = vmatpush1.bf16.msra.mxu0 %v5010
    %5134 = vmatprep.subr.bf16.mxu0 %v5009
    %5135 = vmatpush1.bf16.msra.mxu0 %v5008
    %5136 = vmatprep.subr.bf16.mxu0 %v5007
    %5137 = vmatpush1.bf16.msra.mxu0 %v5006
    %5138 = vmatprep.subr.bf16.mxu0 %v5005
    %5139 = vmatpush1.bf16.msra.mxu0 %v5004
    %5140 = vmatprep.subr.bf16.mxu0 %v5003
    %5141 = vmatpush1.bf16.msra.mxu0 %v5002
    %5142 = vmatprep.subr.bf16.mxu0 %v5001
    %5143 = vmatpush1.bf16.msra.mxu0 %v5000
    %5144 = vmatprep.subr.bf16.mxu0 %v5031
    %5145 = vmatpush2.bf16.msra.mxu0 %v5030
    %5146 = vmatprep.subr.bf16.mxu0 %v5029
    %5147 = vmatpush2.bf16.msra.mxu0 %v5028
    %5148 = vmatprep.subr.bf16.mxu0 %v5027
    %5149 = vmatpush2.bf16.msra.mxu0 %v5026
    %5150 = vmatprep.subr.bf16.mxu0 %v5025
    %5151 = vmatpush2.bf16.msra.mxu0 %v5024
    %5152 = vmatprep.subr.bf16.mxu0 %v5023
    %5153 = vmatpush2.bf16.msra.mxu0 %v5022
    %5154 = vmatprep.subr.bf16.mxu0 %v5021
    %5155 = vmatpush2.bf16.msra.mxu0 %v5020
    %5156 = vmatprep.subr.bf16.mxu0 %v5019
    %5157 = vmatpush2.bf16.msra.mxu0 %v5018
    %5158 = vmatprep.subr.bf16.mxu0 %v5017
    %5159 = vmatpush2.bf16.msra.mxu0 %v5016
    %5160 = vmatprep.mubr.bf16.mxu0 %v4649
    %5161 = vmatmul.mubr.bf16.gmra.mxu0 %v4648
    %v5162 = vpop.f32.mrf.mxu0
    %v5163 = vadd.f32 %v4791, %v5162
    %v5164 = vpop.f32.mrf.mxu0
    %v5165 = vadd.f32 %v4795, %v5164
    %v5166 = vpop.f32.mrf.mxu0
    %v5167 = vpop.f32.mrf.mxu0
    %5168 = vdwg.mxu0
    %5169 = vmatprep.subr.bf16.mxu0 %v5047
    %5170 = vmatpush1.bf16.msra.mxu0 %v5046
    %5171 = vmatprep.subr.bf16.mxu0 %v5045
    %5172 = vmatpush1.bf16.msra.mxu0 %v5044
    %5173 = vmatprep.subr.bf16.mxu0 %v5043
    %5174 = vmatpush1.bf16.msra.mxu0 %v5042
    %5175 = vmatprep.subr.bf16.mxu0 %v5041
    %5176 = vmatpush1.bf16.msra.mxu0 %v5040
    %5177 = vmatprep.subr.bf16.mxu0 %v5039
    %5178 = vmatpush1.bf16.msra.mxu0 %v5038
    %5179 = vmatprep.subr.bf16.mxu0 %v5037
    %5180 = vmatpush1.bf16.msra.mxu0 %v5036
    %5181 = vmatprep.subr.bf16.mxu0 %v5035
    %5182 = vmatpush1.bf16.msra.mxu0 %v5034
    %5183 = vmatprep.subr.bf16.mxu0 %v5033
    %5184 = vmatpush1.bf16.msra.mxu0 %v5032
    %5185 = vmatprep.subr.bf16.mxu0 %v5063
    %5186 = vmatpush2.bf16.msra.mxu0 %v5062
    %5187 = vmatprep.subr.bf16.mxu0 %v5061
    %5188 = vmatpush2.bf16.msra.mxu0 %v5060
    %5189 = vmatprep.subr.bf16.mxu0 %v5059
    %5190 = vmatpush2.bf16.msra.mxu0 %v5058
    %5191 = vmatprep.subr.bf16.mxu0 %v5057
    %5192 = vmatpush2.bf16.msra.mxu0 %v5056
    %5193 = vmatprep.subr.bf16.mxu0 %v5055
    %5194 = vmatpush2.bf16.msra.mxu0 %v5054
    %5195 = vmatprep.subr.bf16.mxu0 %v5053
    %5196 = vmatpush2.bf16.msra.mxu0 %v5052
    %5197 = vmatprep.subr.bf16.mxu0 %v5051
    %5198 = vmatpush2.bf16.msra.mxu0 %v5050
    %5199 = vmatprep.subr.bf16.mxu0 %v5049
    %5200 = vmatpush2.bf16.msra.mxu0 %v5048
    %5201 = vmatprep.mubr.bf16.mxu0 %v4651
    %5202 = vmatmul.mubr.bf16.gmra.mxu0 %v4650
    %v5203 = vpop.f32.mrf.mxu0
    %v5204 = vadd.f32 %v5163, %v5203
    %v5205 = vpop.f32.mrf.mxu0
    %v5206 = vadd.f32 %v5165, %v5205
    %v5207 = vpop.f32.mrf.mxu0
    %v5208 = vpop.f32.mrf.mxu0
    %5209 = vdwg.mxu0
    %v5274 = vunpack.c.l.b16 %v4720
    %v5275 = vunpack.c.h.b16 %v4720
    %v5276 = vunpack.c.l.b16 %v4721
    %v5277 = vunpack.c.h.b16 %v4721
    %v5278 = vunpack.c.l.b16 %v4722
    %v5279 = vunpack.c.h.b16 %v4722
    %v5280 = vunpack.c.l.b16 %v4723
    %v5281 = vunpack.c.h.b16 %v4723
    %v5282 = vunpack.c.l.b16 %v4724
    %v5283 = vunpack.c.h.b16 %v4724
    %v5284 = vunpack.c.l.b16 %v4725
    %v5285 = vunpack.c.h.b16 %v4725
    %v5286 = vunpack.c.l.b16 %v4726
    %v5287 = vunpack.c.h.b16 %v4726
    %v5288 = vunpack.c.l.b16 %v4727
    %v5289 = vunpack.c.h.b16 %v4727
    %v5290 = vunpack.c.l.b16 %v4728
    %v5291 = vunpack.c.h.b16 %v4728
    %v5292 = vunpack.c.l.b16 %v4729
    %v5293 = vunpack.c.h.b16 %v4729
    %v5294 = vunpack.c.l.b16 %v4730
    %v5295 = vunpack.c.h.b16 %v4730
    %v5296 = vunpack.c.l.b16 %v4731
    %v5297 = vunpack.c.h.b16 %v4731
    %v5298 = vunpack.c.l.b16 %v4732
    %v5299 = vunpack.c.h.b16 %v4732
    %v5300 = vunpack.c.l.b16 %v4733
    %v5301 = vunpack.c.h.b16 %v4733
    %v5302 = vunpack.c.l.b16 %v4734
    %v5303 = vunpack.c.h.b16 %v4734
    %v5304 = vunpack.c.l.b16 %v4735
    %v5305 = vunpack.c.h.b16 %v4735
    %v5306 = vunpack.c.l.b16 %v4736
    %v5307 = vunpack.c.h.b16 %v4736
    %v5308 = vunpack.c.l.b16 %v4737
    %v5309 = vunpack.c.h.b16 %v4737
    %v5310 = vunpack.c.l.b16 %v4738
    %v5311 = vunpack.c.h.b16 %v4738
    %v5312 = vunpack.c.l.b16 %v4739
    %v5313 = vunpack.c.h.b16 %v4739
    %v5314 = vunpack.c.l.b16 %v4740
    %v5315 = vunpack.c.h.b16 %v4740
    %v5316 = vunpack.c.l.b16 %v4741
    %v5317 = vunpack.c.h.b16 %v4741
    %v5318 = vunpack.c.l.b16 %v4742
    %v5319 = vunpack.c.h.b16 %v4742
    %v5320 = vunpack.c.l.b16 %v4743
    %v5321 = vunpack.c.h.b16 %v4743
    %v5322 = vunpack.c.l.b16 %v4744
    %v5323 = vunpack.c.h.b16 %v4744
    %v5324 = vunpack.c.l.b16 %v4745
    %v5325 = vunpack.c.h.b16 %v4745
    %v5326 = vunpack.c.l.b16 %v4746
    %v5327 = vunpack.c.h.b16 %v4746
    %v5328 = vunpack.c.l.b16 %v4747
    %v5329 = vunpack.c.h.b16 %v4747
    %v5330 = vunpack.c.l.b16 %v4748
    %v5331 = vunpack.c.h.b16 %v4748
    %v5332 = vunpack.c.l.b16 %v4749
    %v5333 = vunpack.c.h.b16 %v4749
    %v5334 = vunpack.c.l.b16 %v4750
    %v5335 = vunpack.c.h.b16 %v4750
    %v5336 = vunpack.c.l.b16 %v4751
    %v5337 = vunpack.c.h.b16 %v4751
    %v5338 = vunpack.c.l.b16 %v4752
    %v5339 = vunpack.c.h.b16 %v4752
    %v5340 = vunpack.c.l.b16 %v4753
    %v5341 = vunpack.c.h.b16 %v4753
    %v5342 = vunpack.c.l.b16 %v4754
    %v5343 = vunpack.c.h.b16 %v4754
    %v5344 = vunpack.c.l.b16 %v4755
    %v5345 = vunpack.c.h.b16 %v4755
    %v5346 = vunpack.c.l.b16 %v4756
    %v5347 = vunpack.c.h.b16 %v4756
    %v5348 = vunpack.c.l.b16 %v4757
    %v5349 = vunpack.c.h.b16 %v4757
    %v5350 = vunpack.c.l.b16 %v4758
    %v5351 = vunpack.c.h.b16 %v4758
    %v5352 = vunpack.c.l.b16 %v4759
    %v5353 = vunpack.c.h.b16 %v4759
    %v5354 = vunpack.c.l.b16 %v4760
    %v5355 = vunpack.c.h.b16 %v4760
    %v5356 = vunpack.c.l.b16 %v4761
    %v5357 = vunpack.c.h.b16 %v4761
    %v5358 = vunpack.c.l.b16 %v4762
    %v5359 = vunpack.c.h.b16 %v4762
    %v5360 = vunpack.c.l.b16 %v4763
    %v5361 = vunpack.c.h.b16 %v4763
    %v5362 = vunpack.c.l.b16 %v4764
    %v5363 = vunpack.c.h.b16 %v4764
    %v5364 = vunpack.c.l.b16 %v4765
    %v5365 = vunpack.c.h.b16 %v4765
    %v5366 = vunpack.c.l.b16 %v4766
    %v5367 = vunpack.c.h.b16 %v4766
    %v5368 = vunpack.c.l.b16 %v4767
    %v5369 = vunpack.c.h.b16 %v4767
    %v5370 = vunpack.c.l.b16 %v4768
    %v5371 = vunpack.c.h.b16 %v4768
    %v5372 = vunpack.c.l.b16 %v4769
    %v5373 = vunpack.c.h.b16 %v4769
    %v5374 = vunpack.c.l.b16 %v4770
    %v5375 = vunpack.c.h.b16 %v4770
    %v5376 = vunpack.c.l.b16 %v4771
    %v5377 = vunpack.c.h.b16 %v4771
    %v5378 = vunpack.c.l.b16 %v4772
    %v5379 = vunpack.c.h.b16 %v4772
    %v5380 = vunpack.c.l.b16 %v4773
    %v5381 = vunpack.c.h.b16 %v4773
    %v5382 = vunpack.c.l.b16 %v4774
    %v5383 = vunpack.c.h.b16 %v4774
    %v5384 = vunpack.c.l.b16 %v4775
    %v5385 = vunpack.c.h.b16 %v4775
    %v5386 = vunpack.c.l.b16 %v4776
    %v5387 = vunpack.c.h.b16 %v4776
    %v5388 = vunpack.c.l.b16 %v4777
    %v5389 = vunpack.c.h.b16 %v4777
    %v5390 = vunpack.c.l.b16 %v4778
    %v5391 = vunpack.c.h.b16 %v4778
    %v5392 = vunpack.c.l.b16 %v4779
    %v5393 = vunpack.c.h.b16 %v4779
    %v5394 = vunpack.c.l.b16 %v4780
    %v5395 = vunpack.c.h.b16 %v4780
    %v5396 = vunpack.c.l.b16 %v4781
    %v5397 = vunpack.c.h.b16 %v4781
    %v5398 = vunpack.c.l.b16 %v4782
    %v5399 = vunpack.c.h.b16 %v4782
    %v5400 = vunpack.c.l.b16 %v4783
    %v5401 = vunpack.c.h.b16 %v4783
    %v5402 = vpack.c.b16 %v5276, %v5274
    %v5403 = vpack.c.b16 %v5277, %v5275
    %v5404 = vpack.c.b16 %v5280, %v5278
    %v5405 = vpack.c.b16 %v5281, %v5279
    %v5406 = vpack.c.b16 %v5284, %v5282
    %v5407 = vpack.c.b16 %v5285, %v5283
    %v5408 = vpack.c.b16 %v5288, %v5286
    %v5409 = vpack.c.b16 %v5289, %v5287
    %v5410 = vpack.c.b16 %v5292, %v5290
    %v5411 = vpack.c.b16 %v5293, %v5291
    %v5412 = vpack.c.b16 %v5296, %v5294
    %v5413 = vpack.c.b16 %v5297, %v5295
    %v5414 = vpack.c.b16 %v5300, %v5298
    %v5415 = vpack.c.b16 %v5301, %v5299
    %v5416 = vpack.c.b16 %v5304, %v5302
    %v5417 = vpack.c.b16 %v5305, %v5303
    %v5418 = vpack.c.b16 %v5308, %v5306
    %v5419 = vpack.c.b16 %v5309, %v5307
    %v5420 = vpack.c.b16 %v5312, %v5310
    %v5421 = vpack.c.b16 %v5313, %v5311
    %v5422 = vpack.c.b16 %v5316, %v5314
    %v5423 = vpack.c.b16 %v5317, %v5315
    %v5424 = vpack.c.b16 %v5320, %v5318
    %v5425 = vpack.c.b16 %v5321, %v5319
    %v5426 = vpack.c.b16 %v5324, %v5322
    %v5427 = vpack.c.b16 %v5325, %v5323
    %v5428 = vpack.c.b16 %v5328, %v5326
    %v5429 = vpack.c.b16 %v5329, %v5327
    %v5430 = vpack.c.b16 %v5332, %v5330
    %v5431 = vpack.c.b16 %v5333, %v5331
    %v5432 = vpack.c.b16 %v5336, %v5334
    %v5433 = vpack.c.b16 %v5337, %v5335
    %v5434 = vpack.c.b16 %v5340, %v5338
    %v5435 = vpack.c.b16 %v5341, %v5339
    %v5436 = vpack.c.b16 %v5344, %v5342
    %v5437 = vpack.c.b16 %v5345, %v5343
    %v5438 = vpack.c.b16 %v5348, %v5346
    %v5439 = vpack.c.b16 %v5349, %v5347
    %v5440 = vpack.c.b16 %v5352, %v5350
    %v5441 = vpack.c.b16 %v5353, %v5351
    %v5442 = vpack.c.b16 %v5356, %v5354
    %v5443 = vpack.c.b16 %v5357, %v5355
    %v5444 = vpack.c.b16 %v5360, %v5358
    %v5445 = vpack.c.b16 %v5361, %v5359
    %v5446 = vpack.c.b16 %v5364, %v5362
    %v5447 = vpack.c.b16 %v5365, %v5363
    %v5448 = vpack.c.b16 %v5368, %v5366
    %v5449 = vpack.c.b16 %v5369, %v5367
    %v5450 = vpack.c.b16 %v5372, %v5370
    %v5451 = vpack.c.b16 %v5373, %v5371
    %v5452 = vpack.c.b16 %v5376, %v5374
    %v5453 = vpack.c.b16 %v5377, %v5375
    %v5454 = vpack.c.b16 %v5380, %v5378
    %v5455 = vpack.c.b16 %v5381, %v5379
    %v5456 = vpack.c.b16 %v5384, %v5382
    %v5457 = vpack.c.b16 %v5385, %v5383
    %v5458 = vpack.c.b16 %v5388, %v5386
    %v5459 = vpack.c.b16 %v5389, %v5387
    %v5460 = vpack.c.b16 %v5392, %v5390
    %v5461 = vpack.c.b16 %v5393, %v5391
    %v5462 = vpack.c.b16 %v5396, %v5394
    %v5463 = vpack.c.b16 %v5397, %v5395
    %v5464 = vpack.c.b16 %v5400, %v5398
    %v5465 = vpack.c.b16 %v5401, %v5399
    %5530 = vmatprep.subr.bf16.mxu0 %v5417
    %5531 = vmatpush1.bf16.msra.mxu0 %v5416
    %5532 = vmatprep.subr.bf16.mxu0 %v5415
    %5533 = vmatpush1.bf16.msra.mxu0 %v5414
    %5534 = vmatprep.subr.bf16.mxu0 %v5413
    %5535 = vmatpush1.bf16.msra.mxu0 %v5412
    %5536 = vmatprep.subr.bf16.mxu0 %v5411
    %5537 = vmatpush1.bf16.msra.mxu0 %v5410
    %5538 = vmatprep.subr.bf16.mxu0 %v5409
    %5539 = vmatpush1.bf16.msra.mxu0 %v5408
    %5540 = vmatprep.subr.bf16.mxu0 %v5407
    %5541 = vmatpush1.bf16.msra.mxu0 %v5406
    %5542 = vmatprep.subr.bf16.mxu0 %v5405
    %5543 = vmatpush1.bf16.msra.mxu0 %v5404
    %5544 = vmatprep.subr.bf16.mxu0 %v5403
    %5545 = vmatpush1.bf16.msra.mxu0 %v5402
    %5546 = vmatprep.subr.bf16.mxu0 %v5433
    %5547 = vmatpush2.bf16.msra.mxu0 %v5432
    %5548 = vmatprep.subr.bf16.mxu0 %v5431
    %5549 = vmatpush2.bf16.msra.mxu0 %v5430
    %5550 = vmatprep.subr.bf16.mxu0 %v5429
    %5551 = vmatpush2.bf16.msra.mxu0 %v5428
    %5552 = vmatprep.subr.bf16.mxu0 %v5427
    %5553 = vmatpush2.bf16.msra.mxu0 %v5426
    %5554 = vmatprep.subr.bf16.mxu0 %v5425
    %5555 = vmatpush2.bf16.msra.mxu0 %v5424
    %5556 = vmatprep.subr.bf16.mxu0 %v5423
    %5557 = vmatpush2.bf16.msra.mxu0 %v5422
    %5558 = vmatprep.subr.bf16.mxu0 %v5421
    %5559 = vmatpush2.bf16.msra.mxu0 %v5420
    %5560 = vmatprep.subr.bf16.mxu0 %v5419
    %5561 = vmatpush2.bf16.msra.mxu0 %v5418
    %5562 = vmatprep.mubr.bf16.mxu0 %v4653
    %5563 = vmatmul.mubr.bf16.gmra.mxu0 %v4652
    %v5564 = vpop.f32.mrf.mxu0
    %v5565 = vadd.f32 %v4799, %v5564
    %v5566 = vpop.f32.mrf.mxu0
    %v5567 = vadd.f32 %v4803, %v5566
    %v5568 = vpop.f32.mrf.mxu0
    %v5569 = vpop.f32.mrf.mxu0
    %5570 = vdwg.mxu0
    %5571 = vmatprep.subr.bf16.mxu0 %v5449
    %5572 = vmatpush1.bf16.msra.mxu0 %v5448
    %5573 = vmatprep.subr.bf16.mxu0 %v5447
    %5574 = vmatpush1.bf16.msra.mxu0 %v5446
    %5575 = vmatprep.subr.bf16.mxu0 %v5445
    %5576 = vmatpush1.bf16.msra.mxu0 %v5444
    %5577 = vmatprep.subr.bf16.mxu0 %v5443
    %5578 = vmatpush1.bf16.msra.mxu0 %v5442
    %5579 = vmatprep.subr.bf16.mxu0 %v5441
    %5580 = vmatpush1.bf16.msra.mxu0 %v5440
    %5581 = vmatprep.subr.bf16.mxu0 %v5439
    %5582 = vmatpush1.bf16.msra.mxu0 %v5438
    %5583 = vmatprep.subr.bf16.mxu0 %v5437
    %5584 = vmatpush1.bf16.msra.mxu0 %v5436
    %5585 = vmatprep.subr.bf16.mxu0 %v5435
    %5586 = vmatpush1.bf16.msra.mxu0 %v5434
    %5587 = vmatprep.subr.bf16.mxu0 %v5465
    %5588 = vmatpush2.bf16.msra.mxu0 %v5464
    %5589 = vmatprep.subr.bf16.mxu0 %v5463
    %5590 = vmatpush2.bf16.msra.mxu0 %v5462
    %5591 = vmatprep.subr.bf16.mxu0 %v5461
    %5592 = vmatpush2.bf16.msra.mxu0 %v5460
    %5593 = vmatprep.subr.bf16.mxu0 %v5459
    %5594 = vmatpush2.bf16.msra.mxu0 %v5458
    %5595 = vmatprep.subr.bf16.mxu0 %v5457
    %5596 = vmatpush2.bf16.msra.mxu0 %v5456
    %5597 = vmatprep.subr.bf16.mxu0 %v5455
    %5598 = vmatpush2.bf16.msra.mxu0 %v5454
    %5599 = vmatprep.subr.bf16.mxu0 %v5453
    %5600 = vmatpush2.bf16.msra.mxu0 %v5452
    %5601 = vmatprep.subr.bf16.mxu0 %v5451
    %5602 = vmatpush2.bf16.msra.mxu0 %v5450
    %5603 = vmatprep.mubr.bf16.mxu0 %v4655
    %5604 = vmatmul.mubr.bf16.gmra.mxu0 %v4654
    %v5605 = vpop.f32.mrf.mxu0
    %v5606 = vadd.f32 %v5565, %v5605
    %v5607 = vpop.f32.mrf.mxu0
    %v5608 = vadd.f32 %v5567, %v5607
    %v5609 = vpop.f32.mrf.mxu0
    %v5610 = vpop.f32.mrf.mxu0
    %5611 = vdwg.mxu0
    %vm5612 = vcmp.gt.f32.partialorder %v5204, 0.0
    %vm5613 = vcmp.gt.f32.partialorder %v5206, 0.0
    %vm5614 = vcmp.gt.f32.partialorder %v5606, 0.0
    %vm5615 = vcmp.gt.f32.partialorder %v5608, 0.0
    %v5616 = vmul.f32 %v5204, 0.01
    %v5617 = vmul.f32 %v5206, 0.01
    %v5618 = vmul.f32 %v5606, 0.01
    %v5619 = vmul.f32 %v5608, 0.01
    %v5620 = vsel %vm5612, %v5204, %v5616
    %v5621 = vsel %vm5613, %v5206, %v5617
    %v5622 = vsel %vm5614, %v5606, %v5618
    %v5623 = vsel %vm5615, %v5608, %v5619
    %v5624 = vpack.c.bf16 %v5620, %v5620
    %v5625 = vpack.c.bf16 %v5621, %v5621
    %v5626 = vpack.c.bf16 %v5622, %v5622
    %v5627 = vpack.c.bf16 %v5623, %v5623
    %v5628 = vld [vmem:[#allocation13] sm:$0xff]
    %v5629 = vld [vmem:[#allocation13 + $0x8] sm:$0xff]
    %v5630 = vld [vmem:[#allocation13 + $0x10] sm:$0xff]
    %v5631 = vld [vmem:[#allocation13 + $0x18] sm:$0xff]
    %v5632 = vld [vmem:[#allocation13 + $0x20] sm:$0xff]
    %v5633 = vld [vmem:[#allocation13 + $0x28] sm:$0xff]
    %v5634 = vld [vmem:[#allocation13 + $0x30] sm:$0xff]
    %v5635 = vld [vmem:[#allocation13 + $0x38] sm:$0xff]
    %v5636 = vld [vmem:[#allocation13 + $0x40] sm:$0xff]
    %v5637 = vld [vmem:[#allocation13 + $0x48] sm:$0xff]
    %v5638 = vld [vmem:[#allocation13 + $0x50] sm:$0xff]
    %v5639 = vld [vmem:[#allocation13 + $0x58] sm:$0xff]
    %v5640 = vld [vmem:[#allocation13 + $0x60] sm:$0xff]
    %v5641 = vld [vmem:[#allocation13 + $0x68] sm:$0xff]
    %v5642 = vld [vmem:[#allocation13 + $0x70] sm:$0xff]
    %v5643 = vld [vmem:[#allocation13 + $0x78] sm:$0xff]
    %v5644 = vld [vmem:[#allocation13 + $0x80] sm:$0xff]
    %v5645 = vld [vmem:[#allocation13 + $0x88] sm:$0xff]
    %v5646 = vld [vmem:[#allocation13 + $0x90] sm:$0xff]
    %v5647 = vld [vmem:[#allocation13 + $0x98] sm:$0xff]
    %v5648 = vld [vmem:[#allocation13 + $0xa0] sm:$0xff]
    %v5649 = vld [vmem:[#allocation13 + $0xa8] sm:$0xff]
    %v5650 = vld [vmem:[#allocation13 + $0xb0] sm:$0xff]
    %v5651 = vld [vmem:[#allocation13 + $0xb8] sm:$0xff]
    %v5652 = vld [vmem:[#allocation13 + $0xc0] sm:$0xff]
    %v5653 = vld [vmem:[#allocation13 + $0xc8] sm:$0xff]
    %v5654 = vld [vmem:[#allocation13 + $0xd0] sm:$0xff]
    %v5655 = vld [vmem:[#allocation13 + $0xd8] sm:$0xff]
    %v5656 = vld [vmem:[#allocation13 + $0xe0] sm:$0xff]
    %v5657 = vld [vmem:[#allocation13 + $0xe8] sm:$0xff]
    %v5658 = vld [vmem:[#allocation13 + $0xf0] sm:$0xff]
    %v5659 = vld [vmem:[#allocation13 + $0xf8] sm:$0xff]
    %v5660 = vld [vmem:[#allocation14] sm:$0xff]
    %v5661 = vld [vmem:[#allocation14 + $0x8] sm:$0xff]
    %v5662 = vld [vmem:[#allocation14 + $0x10] sm:$0xff]
    %v5663 = vld [vmem:[#allocation14 + $0x18] sm:$0xff]
    %v5664 = vld [vmem:[#allocation14 + $0x20] sm:$0xff]
    %v5665 = vld [vmem:[#allocation14 + $0x28] sm:$0xff]
    %v5666 = vld [vmem:[#allocation14 + $0x30] sm:$0xff]
    %v5667 = vld [vmem:[#allocation14 + $0x38] sm:$0xff]
    %v5668 = vld [vmem:[#allocation14 + $0x40] sm:$0xff]
    %v5669 = vld [vmem:[#allocation14 + $0x48] sm:$0xff]
    %v5670 = vld [vmem:[#allocation14 + $0x50] sm:$0xff]
    %v5671 = vld [vmem:[#allocation14 + $0x58] sm:$0xff]
    %v5672 = vld [vmem:[#allocation14 + $0x60] sm:$0xff]
    %v5673 = vld [vmem:[#allocation14 + $0x68] sm:$0xff]
    %v5674 = vld [vmem:[#allocation14 + $0x70] sm:$0xff]
    %v5675 = vld [vmem:[#allocation14 + $0x78] sm:$0xff]
    %v5676 = vld [vmem:[#allocation14 + $0x80] sm:$0xff]
    %v5677 = vld [vmem:[#allocation14 + $0x88] sm:$0xff]
    %v5678 = vld [vmem:[#allocation14 + $0x90] sm:$0xff]
    %v5679 = vld [vmem:[#allocation14 + $0x98] sm:$0xff]
    %v5680 = vld [vmem:[#allocation14 + $0xa0] sm:$0xff]
    %v5681 = vld [vmem:[#allocation14 + $0xa8] sm:$0xff]
    %v5682 = vld [vmem:[#allocation14 + $0xb0] sm:$0xff]
    %v5683 = vld [vmem:[#allocation14 + $0xb8] sm:$0xff]
    %v5684 = vld [vmem:[#allocation14 + $0xc0] sm:$0xff]
    %v5685 = vld [vmem:[#allocation14 + $0xc8] sm:$0xff]
    %v5686 = vld [vmem:[#allocation14 + $0xd0] sm:$0xff]
    %v5687 = vld [vmem:[#allocation14 + $0xd8] sm:$0xff]
    %v5688 = vld [vmem:[#allocation14 + $0xe0] sm:$0xff]
    %v5689 = vld [vmem:[#allocation14 + $0xe8] sm:$0xff]
    %v5690 = vld [vmem:[#allocation14 + $0xf0] sm:$0xff]
    %v5691 = vld [vmem:[#allocation14 + $0xf8] sm:$0xff]
    %v5724 = vunpack.c.l.b16 %v5660
    %v5725 = vunpack.c.h.b16 %v5660
    %v5726 = vunpack.c.l.b16 %v5661
    %v5727 = vunpack.c.h.b16 %v5661
    %v5728 = vunpack.c.l.b16 %v5662
    %v5729 = vunpack.c.h.b16 %v5662
    %v5730 = vunpack.c.l.b16 %v5663
    %v5731 = vunpack.c.h.b16 %v5663
    %v5732 = vunpack.c.l.b16 %v5664
    %v5733 = vunpack.c.h.b16 %v5664
    %v5734 = vunpack.c.l.b16 %v5665
    %v5735 = vunpack.c.h.b16 %v5665
    %v5736 = vunpack.c.l.b16 %v5666
    %v5737 = vunpack.c.h.b16 %v5666
    %v5738 = vunpack.c.l.b16 %v5667
    %v5739 = vunpack.c.h.b16 %v5667
    %v5740 = vunpack.c.l.b16 %v5668
    %v5741 = vunpack.c.h.b16 %v5668
    %v5742 = vunpack.c.l.b16 %v5669
    %v5743 = vunpack.c.h.b16 %v5669
    %v5744 = vunpack.c.l.b16 %v5670
    %v5745 = vunpack.c.h.b16 %v5670
    %v5746 = vunpack.c.l.b16 %v5671
    %v5747 = vunpack.c.h.b16 %v5671
    %v5748 = vunpack.c.l.b16 %v5672
    %v5749 = vunpack.c.h.b16 %v5672
    %v5750 = vunpack.c.l.b16 %v5673
    %v5751 = vunpack.c.h.b16 %v5673
    %v5752 = vunpack.c.l.b16 %v5674
    %v5753 = vunpack.c.h.b16 %v5674
    %v5754 = vunpack.c.l.b16 %v5675
    %v5755 = vunpack.c.h.b16 %v5675
    %v5756 = vunpack.c.l.b16 %v5676
    %v5757 = vunpack.c.h.b16 %v5676
    %v5758 = vunpack.c.l.b16 %v5677
    %v5759 = vunpack.c.h.b16 %v5677
    %v5760 = vunpack.c.l.b16 %v5678
    %v5761 = vunpack.c.h.b16 %v5678
    %v5762 = vunpack.c.l.b16 %v5679
    %v5763 = vunpack.c.h.b16 %v5679
    %v5764 = vunpack.c.l.b16 %v5680
    %v5765 = vunpack.c.h.b16 %v5680
    %v5766 = vunpack.c.l.b16 %v5681
    %v5767 = vunpack.c.h.b16 %v5681
    %v5768 = vunpack.c.l.b16 %v5682
    %v5769 = vunpack.c.h.b16 %v5682
    %v5770 = vunpack.c.l.b16 %v5683
    %v5771 = vunpack.c.h.b16 %v5683
    %v5772 = vunpack.c.l.b16 %v5684
    %v5773 = vunpack.c.h.b16 %v5684
    %v5774 = vunpack.c.l.b16 %v5685
    %v5775 = vunpack.c.h.b16 %v5685
    %v5776 = vunpack.c.l.b16 %v5686
    %v5777 = vunpack.c.h.b16 %v5686
    %v5778 = vunpack.c.l.b16 %v5687
    %v5779 = vunpack.c.h.b16 %v5687
    %v5780 = vunpack.c.l.b16 %v5688
    %v5781 = vunpack.c.h.b16 %v5688
    %v5782 = vunpack.c.l.b16 %v5689
    %v5783 = vunpack.c.h.b16 %v5689
    %v5784 = vunpack.c.l.b16 %v5690
    %v5785 = vunpack.c.h.b16 %v5690
    %v5786 = vunpack.c.l.b16 %v5691
    %v5787 = vunpack.c.h.b16 %v5691
    %v5788 = vpack.c.b16 %v5726, %v5724
    %v5789 = vpack.c.b16 %v5727, %v5725
    %v5790 = vpack.c.b16 %v5730, %v5728
    %v5791 = vpack.c.b16 %v5731, %v5729
    %v5792 = vpack.c.b16 %v5734, %v5732
    %v5793 = vpack.c.b16 %v5735, %v5733
    %v5794 = vpack.c.b16 %v5738, %v5736
    %v5795 = vpack.c.b16 %v5739, %v5737
    %v5796 = vpack.c.b16 %v5742, %v5740
    %v5797 = vpack.c.b16 %v5743, %v5741
    %v5798 = vpack.c.b16 %v5746, %v5744
    %v5799 = vpack.c.b16 %v5747, %v5745
    %v5800 = vpack.c.b16 %v5750, %v5748
    %v5801 = vpack.c.b16 %v5751, %v5749
    %v5802 = vpack.c.b16 %v5754, %v5752
    %v5803 = vpack.c.b16 %v5755, %v5753
    %v5804 = vpack.c.b16 %v5758, %v5756
    %v5805 = vpack.c.b16 %v5759, %v5757
    %v5806 = vpack.c.b16 %v5762, %v5760
    %v5807 = vpack.c.b16 %v5763, %v5761
    %v5808 = vpack.c.b16 %v5766, %v5764
    %v5809 = vpack.c.b16 %v5767, %v5765
    %v5810 = vpack.c.b16 %v5770, %v5768
    %v5811 = vpack.c.b16 %v5771, %v5769
    %v5812 = vpack.c.b16 %v5774, %v5772
    %v5813 = vpack.c.b16 %v5775, %v5773
    %v5814 = vpack.c.b16 %v5778, %v5776
    %v5815 = vpack.c.b16 %v5779, %v5777
    %v5816 = vpack.c.b16 %v5782, %v5780
    %v5817 = vpack.c.b16 %v5783, %v5781
    %v5818 = vpack.c.b16 %v5786, %v5784
    %v5819 = vpack.c.b16 %v5787, %v5785
    %5852 = vmatprep.subr.bf16.mxu0 %v5803
    %5853 = vmatpush1.bf16.msra.mxu0 %v5802
    %5854 = vmatprep.subr.bf16.mxu0 %v5801
    %5855 = vmatpush1.bf16.msra.mxu0 %v5800
    %5856 = vmatprep.subr.bf16.mxu0 %v5799
    %5857 = vmatpush1.bf16.msra.mxu0 %v5798
    %5858 = vmatprep.subr.bf16.mxu0 %v5797
    %5859 = vmatpush1.bf16.msra.mxu0 %v5796
    %5860 = vmatprep.subr.bf16.mxu0 %v5795
    %5861 = vmatpush1.bf16.msra.mxu0 %v5794
    %5862 = vmatprep.subr.bf16.mxu0 %v5793
    %5863 = vmatpush1.bf16.msra.mxu0 %v5792
    %5864 = vmatprep.subr.bf16.mxu0 %v5791
    %5865 = vmatpush1.bf16.msra.mxu0 %v5790
    %5866 = vmatprep.subr.bf16.mxu0 %v5789
    %5867 = vmatpush1.bf16.msra.mxu0 %v5788
    %5868 = vmatprep.subr.bf16.mxu0 %v5819
    %5869 = vmatpush2.bf16.msra.mxu0 %v5818
    %5870 = vmatprep.subr.bf16.mxu0 %v5817
    %5871 = vmatpush2.bf16.msra.mxu0 %v5816
    %5872 = vmatprep.subr.bf16.mxu0 %v5815
    %5873 = vmatpush2.bf16.msra.mxu0 %v5814
    %5874 = vmatprep.subr.bf16.mxu0 %v5813
    %5875 = vmatpush2.bf16.msra.mxu0 %v5812
    %5876 = vmatprep.subr.bf16.mxu0 %v5811
    %5877 = vmatpush2.bf16.msra.mxu0 %v5810
    %5878 = vmatprep.subr.bf16.mxu0 %v5809
    %5879 = vmatpush2.bf16.msra.mxu0 %v5808
    %5880 = vmatprep.subr.bf16.mxu0 %v5807
    %5881 = vmatpush2.bf16.msra.mxu0 %v5806
    %5882 = vmatprep.subr.bf16.mxu0 %v5805
    %5883 = vmatpush2.bf16.msra.mxu0 %v5804
    %5884 = vmatprep.mubr.bf16.mxu0 %v5627
    %5885 = vmatmul.mubr.bf16.gmra.mxu0 %v5626
    %v5886 = vpop.f32.mrf.mxu0
    %v5887 = vadd.f32 0.0, %v5886
    %v5888 = vpop.f32.mrf.mxu0
    %v5889 = vadd.f32 0.0, %v5888
    %v5890 = vpop.f32.mrf.mxu0
    %v5891 = vpop.f32.mrf.mxu0
    %5892 = vdwg.mxu0
    %v5925 = vunpack.c.l.b16 %v5628
    %v5926 = vunpack.c.h.b16 %v5628
    %v5927 = vunpack.c.l.b16 %v5629
    %v5928 = vunpack.c.h.b16 %v5629
    %v5929 = vunpack.c.l.b16 %v5630
    %v5930 = vunpack.c.h.b16 %v5630
    %v5931 = vunpack.c.l.b16 %v5631
    %v5932 = vunpack.c.h.b16 %v5631
    %v5933 = vunpack.c.l.b16 %v5632
    %v5934 = vunpack.c.h.b16 %v5632
    %v5935 = vunpack.c.l.b16 %v5633
    %v5936 = vunpack.c.h.b16 %v5633
    %v5937 = vunpack.c.l.b16 %v5634
    %v5938 = vunpack.c.h.b16 %v5634
    %v5939 = vunpack.c.l.b16 %v5635
    %v5940 = vunpack.c.h.b16 %v5635
    %v5941 = vunpack.c.l.b16 %v5636
    %v5942 = vunpack.c.h.b16 %v5636
    %v5943 = vunpack.c.l.b16 %v5637
    %v5944 = vunpack.c.h.b16 %v5637
    %v5945 = vunpack.c.l.b16 %v5638
    %v5946 = vunpack.c.h.b16 %v5638
    %v5947 = vunpack.c.l.b16 %v5639
    %v5948 = vunpack.c.h.b16 %v5639
    %v5949 = vunpack.c.l.b16 %v5640
    %v5950 = vunpack.c.h.b16 %v5640
    %v5951 = vunpack.c.l.b16 %v5641
    %v5952 = vunpack.c.h.b16 %v5641
    %v5953 = vunpack.c.l.b16 %v5642
    %v5954 = vunpack.c.h.b16 %v5642
    %v5955 = vunpack.c.l.b16 %v5643
    %v5956 = vunpack.c.h.b16 %v5643
    %v5957 = vunpack.c.l.b16 %v5644
    %v5958 = vunpack.c.h.b16 %v5644
    %v5959 = vunpack.c.l.b16 %v5645
    %v5960 = vunpack.c.h.b16 %v5645
    %v5961 = vunpack.c.l.b16 %v5646
    %v5962 = vunpack.c.h.b16 %v5646
    %v5963 = vunpack.c.l.b16 %v5647
    %v5964 = vunpack.c.h.b16 %v5647
    %v5965 = vunpack.c.l.b16 %v5648
    %v5966 = vunpack.c.h.b16 %v5648
    %v5967 = vunpack.c.l.b16 %v5649
    %v5968 = vunpack.c.h.b16 %v5649
    %v5969 = vunpack.c.l.b16 %v5650
    %v5970 = vunpack.c.h.b16 %v5650
    %v5971 = vunpack.c.l.b16 %v5651
    %v5972 = vunpack.c.h.b16 %v5651
    %v5973 = vunpack.c.l.b16 %v5652
    %v5974 = vunpack.c.h.b16 %v5652
    %v5975 = vunpack.c.l.b16 %v5653
    %v5976 = vunpack.c.h.b16 %v5653
    %v5977 = vunpack.c.l.b16 %v5654
    %v5978 = vunpack.c.h.b16 %v5654
    %v5979 = vunpack.c.l.b16 %v5655
    %v5980 = vunpack.c.h.b16 %v5655
    %v5981 = vunpack.c.l.b16 %v5656
    %v5982 = vunpack.c.h.b16 %v5656
    %v5983 = vunpack.c.l.b16 %v5657
    %v5984 = vunpack.c.h.b16 %v5657
    %v5985 = vunpack.c.l.b16 %v5658
    %v5986 = vunpack.c.h.b16 %v5658
    %v5987 = vunpack.c.l.b16 %v5659
    %v5988 = vunpack.c.h.b16 %v5659
    %v5989 = vpack.c.b16 %v5927, %v5925
    %v5990 = vpack.c.b16 %v5928, %v5926
    %v5991 = vpack.c.b16 %v5931, %v5929
    %v5992 = vpack.c.b16 %v5932, %v5930
    %v5993 = vpack.c.b16 %v5935, %v5933
    %v5994 = vpack.c.b16 %v5936, %v5934
    %v5995 = vpack.c.b16 %v5939, %v5937
    %v5996 = vpack.c.b16 %v5940, %v5938
    %v5997 = vpack.c.b16 %v5943, %v5941
    %v5998 = vpack.c.b16 %v5944, %v5942
    %v5999 = vpack.c.b16 %v5947, %v5945
    %v6000 = vpack.c.b16 %v5948, %v5946
    %v6001 = vpack.c.b16 %v5951, %v5949
    %v6002 = vpack.c.b16 %v5952, %v5950
    %v6003 = vpack.c.b16 %v5955, %v5953
    %v6004 = vpack.c.b16 %v5956, %v5954
    %v6005 = vpack.c.b16 %v5959, %v5957
    %v6006 = vpack.c.b16 %v5960, %v5958
    %v6007 = vpack.c.b16 %v5963, %v5961
    %v6008 = vpack.c.b16 %v5964, %v5962
    %v6009 = vpack.c.b16 %v5967, %v5965
    %v6010 = vpack.c.b16 %v5968, %v5966
    %v6011 = vpack.c.b16 %v5971, %v5969
    %v6012 = vpack.c.b16 %v5972, %v5970
    %v6013 = vpack.c.b16 %v5975, %v5973
    %v6014 = vpack.c.b16 %v5976, %v5974
    %v6015 = vpack.c.b16 %v5979, %v5977
    %v6016 = vpack.c.b16 %v5980, %v5978
    %v6017 = vpack.c.b16 %v5983, %v5981
    %v6018 = vpack.c.b16 %v5984, %v5982
    %v6019 = vpack.c.b16 %v5987, %v5985
    %v6020 = vpack.c.b16 %v5988, %v5986
    %6053 = vmatprep.subr.bf16.mxu0 %v6004
    %6054 = vmatpush1.bf16.msra.mxu0 %v6003
    %6055 = vmatprep.subr.bf16.mxu0 %v6002
    %6056 = vmatpush1.bf16.msra.mxu0 %v6001
    %6057 = vmatprep.subr.bf16.mxu0 %v6000
    %6058 = vmatpush1.bf16.msra.mxu0 %v5999
    %6059 = vmatprep.subr.bf16.mxu0 %v5998
    %6060 = vmatpush1.bf16.msra.mxu0 %v5997
    %6061 = vmatprep.subr.bf16.mxu0 %v5996
    %6062 = vmatpush1.bf16.msra.mxu0 %v5995
    %6063 = vmatprep.subr.bf16.mxu0 %v5994
    %6064 = vmatpush1.bf16.msra.mxu0 %v5993
    %6065 = vmatprep.subr.bf16.mxu0 %v5992
    %6066 = vmatpush1.bf16.msra.mxu0 %v5991
    %6067 = vmatprep.subr.bf16.mxu0 %v5990
    %6068 = vmatpush1.bf16.msra.mxu0 %v5989
    %6069 = vmatprep.subr.bf16.mxu0 %v6020
    %6070 = vmatpush2.bf16.msra.mxu0 %v6019
    %6071 = vmatprep.subr.bf16.mxu0 %v6018
    %6072 = vmatpush2.bf16.msra.mxu0 %v6017
    %6073 = vmatprep.subr.bf16.mxu0 %v6016
    %6074 = vmatpush2.bf16.msra.mxu0 %v6015
    %6075 = vmatprep.subr.bf16.mxu0 %v6014
    %6076 = vmatpush2.bf16.msra.mxu0 %v6013
    %6077 = vmatprep.subr.bf16.mxu0 %v6012
    %6078 = vmatpush2.bf16.msra.mxu0 %v6011
    %6079 = vmatprep.subr.bf16.mxu0 %v6010
    %6080 = vmatpush2.bf16.msra.mxu0 %v6009
    %6081 = vmatprep.subr.bf16.mxu0 %v6008
    %6082 = vmatpush2.bf16.msra.mxu0 %v6007
    %6083 = vmatprep.subr.bf16.mxu0 %v6006
    %6084 = vmatpush2.bf16.msra.mxu0 %v6005
    %6085 = vmatprep.mubr.bf16.mxu0 %v5625
    %6086 = vmatmul.mubr.bf16.gmra.mxu0 %v5624
    %v6087 = vpop.f32.mrf.mxu0
    %v6088 = vadd.f32 %v5887, %v6087
    %v6089 = vpop.f32.mrf.mxu0
    %v6090 = vadd.f32 %v5889, %v6089
    %v6091 = vpop.f32.mrf.mxu0
    %v6092 = vpop.f32.mrf.mxu0
    %6093 = vdwg.mxu0
    %v6094 = vld [vmem:[#allocation16] sm:$0x3]
    %v6096 = vlaneseq
    %v6097 = vshrl.u32 %v6096, 7
    %v6098 = vsub.s32 0, %v6097
    %v6099 = vrot.slane %v6094, %v6098
    %v6100 = vlaneseq
    %v6101 = vshrl.u32 %v6100, 7
    %v6102 = vsub.s32 1, %v6101
    %v6103 = vrot.slane %v6094, %v6102
    %v6106 = vadd.f32 %v6088, %v6099
    %v6107 = vadd.f32 %v6090, %v6103
    %vm6108 = vcmp.gt.f32.partialorder %v6106, 0.0
    %vm6109 = vcmp.gt.f32.partialorder %v6107, 0.0
    %v6110 = vmul.f32 %v6106, 0.01
    %v6111 = vmul.f32 %v6107, 0.01
    %v6112 = vsel %vm6108, %v6106, %v6110
    %v6113 = vsel %vm6109, %v6107, %v6111
    %v6114 = vpack.c.bf16 %v6112, %v6112
    %v6115 = vpack.c.bf16 %v6113, %v6113
    %v6116 = vld [vmem:[%s10] sm:$0xf]
    %v6117 = vld [vmem:[%s10 + $0x4] sm:$0xf]
    %v6118 = vld [vmem:[%s10 + $0x8] sm:$0xf]
    %v6119 = vld [vmem:[%s10 + $0xc] sm:$0xf]
    %v6120 = vld [vmem:[%s10 + $0x10] sm:$0xf]
    %v6121 = vld [vmem:[%s10 + $0x14] sm:$0xf]
    %v6122 = vld [vmem:[%s10 + $0x18] sm:$0xf]
    %v6123 = vld [vmem:[%s10 + $0x1c] sm:$0xf]
    %v6124 = vld [vmem:[%s10 + $0x20] sm:$0xf]
    %v6125 = vld [vmem:[%s10 + $0x24] sm:$0xf]
    %v6126 = vld [vmem:[%s10 + $0x28] sm:$0xf]
    %v6127 = vld [vmem:[%s10 + $0x2c] sm:$0xf]
    %v6128 = vld [vmem:[%s10 + $0x30] sm:$0xf]
    %v6129 = vld [vmem:[%s10 + $0x34] sm:$0xf]
    %v6130 = vld [vmem:[%s10 + $0x38] sm:$0xf]
    %v6131 = vld [vmem:[%s10 + $0x3c] sm:$0xf]
    %v6132 = vld [vmem:[%s10 + $0x40] sm:$0xf]
    %v6133 = vld [vmem:[%s10 + $0x44] sm:$0xf]
    %v6134 = vld [vmem:[%s10 + $0x48] sm:$0xf]
    %v6135 = vld [vmem:[%s10 + $0x4c] sm:$0xf]
    %v6136 = vld [vmem:[%s10 + $0x50] sm:$0xf]
    %v6137 = vld [vmem:[%s10 + $0x54] sm:$0xf]
    %v6138 = vld [vmem:[%s10 + $0x58] sm:$0xf]
    %v6139 = vld [vmem:[%s10 + $0x5c] sm:$0xf]
    %v6140 = vld [vmem:[%s10 + $0x60] sm:$0xf]
    %v6141 = vld [vmem:[%s10 + $0x64] sm:$0xf]
    %v6142 = vld [vmem:[%s10 + $0x68] sm:$0xf]
    %v6143 = vld [vmem:[%s10 + $0x6c] sm:$0xf]
    %v6144 = vld [vmem:[%s10 + $0x70] sm:$0xf]
    %v6145 = vld [vmem:[%s10 + $0x74] sm:$0xf]
    %v6146 = vld [vmem:[%s10 + $0x78] sm:$0xf]
    %v6147 = vld [vmem:[%s10 + $0x7c] sm:$0xf]
    %v6148 = vld [vmem:[#allocation17] sm:$0x1]
    %v6150 = vlaneseq
    %v6151 = vshrl.u32 %v6150, 7
    %v6152 = vsub.s32 0, %v6151
    %v6153 = vrot.slane %v6148, %v6152
    %v6187 = vunpack.c.l.b16 %v6116
    %v6188 = vunpack.c.l.b16 %v6117
    %v6189 = vunpack.c.l.b16 %v6118
    %v6190 = vunpack.c.l.b16 %v6119
    %v6191 = vunpack.c.l.b16 %v6120
    %v6192 = vunpack.c.l.b16 %v6121
    %v6193 = vunpack.c.l.b16 %v6122
    %v6194 = vunpack.c.l.b16 %v6123
    %v6195 = vunpack.c.l.b16 %v6124
    %v6196 = vunpack.c.l.b16 %v6125
    %v6197 = vunpack.c.l.b16 %v6126
    %v6198 = vunpack.c.l.b16 %v6127
    %v6199 = vunpack.c.l.b16 %v6128
    %v6200 = vunpack.c.l.b16 %v6129
    %v6201 = vunpack.c.l.b16 %v6130
    %v6202 = vunpack.c.l.b16 %v6131
    %v6203 = vunpack.c.l.b16 %v6132
    %v6204 = vunpack.c.l.b16 %v6133
    %v6205 = vunpack.c.l.b16 %v6134
    %v6206 = vunpack.c.l.b16 %v6135
    %v6207 = vunpack.c.l.b16 %v6136
    %v6208 = vunpack.c.l.b16 %v6137
    %v6209 = vunpack.c.l.b16 %v6138
    %v6210 = vunpack.c.l.b16 %v6139
    %v6211 = vunpack.c.l.b16 %v6140
    %v6212 = vunpack.c.l.b16 %v6141
    %v6213 = vunpack.c.l.b16 %v6142
    %v6214 = vunpack.c.l.b16 %v6143
    %v6215 = vunpack.c.l.b16 %v6144
    %v6216 = vunpack.c.l.b16 %v6145
    %v6217 = vunpack.c.l.b16 %v6146
    %v6218 = vunpack.c.l.b16 %v6147
    %v6219 = vpack.c.b16 %v6188, %v6187
    %v6220 = vpack.c.b16 %v6190, %v6189
    %v6221 = vpack.c.b16 %v6192, %v6191
    %v6222 = vpack.c.b16 %v6194, %v6193
    %v6223 = vpack.c.b16 %v6196, %v6195
    %v6224 = vpack.c.b16 %v6198, %v6197
    %v6225 = vpack.c.b16 %v6200, %v6199
    %v6226 = vpack.c.b16 %v6202, %v6201
    %v6227 = vpack.c.b16 %v6204, %v6203
    %v6228 = vpack.c.b16 %v6206, %v6205
    %v6229 = vpack.c.b16 %v6208, %v6207
    %v6230 = vpack.c.b16 %v6210, %v6209
    %v6231 = vpack.c.b16 %v6212, %v6211
    %v6232 = vpack.c.b16 %v6214, %v6213
    %v6233 = vpack.c.b16 %v6216, %v6215
    %v6234 = vpack.c.b16 %v6218, %v6217
    %6251 = vmatprep.subr.bf16.mxu0 0
    %6252 = vmatpush1.bf16.msra.mxu0 %v6226
    %6253 = vmatprep.subr.bf16.mxu0 0
    %6254 = vmatpush1.bf16.msra.mxu0 %v6225
    %6255 = vmatprep.subr.bf16.mxu0 0
    %6256 = vmatpush1.bf16.msra.mxu0 %v6224
    %6257 = vmatprep.subr.bf16.mxu0 0
    %6258 = vmatpush1.bf16.msra.mxu0 %v6223
    %6259 = vmatprep.subr.bf16.mxu0 0
    %6260 = vmatpush1.bf16.msra.mxu0 %v6222
    %6261 = vmatprep.subr.bf16.mxu0 0
    %6262 = vmatpush1.bf16.msra.mxu0 %v6221
    %6263 = vmatprep.subr.bf16.mxu0 0
    %6264 = vmatpush1.bf16.msra.mxu0 %v6220
    %6265 = vmatprep.subr.bf16.mxu0 0
    %6266 = vmatpush1.bf16.msra.mxu0 %v6219
    %6267 = vmatprep.subr.bf16.mxu0 0
    %6268 = vmatpush2.bf16.msra.mxu0 %v6234
    %6269 = vmatprep.subr.bf16.mxu0 0
    %6270 = vmatpush2.bf16.msra.mxu0 %v6233
    %6271 = vmatprep.subr.bf16.mxu0 0
    %6272 = vmatpush2.bf16.msra.mxu0 %v6232
    %6273 = vmatprep.subr.bf16.mxu0 0
    %6274 = vmatpush2.bf16.msra.mxu0 %v6231
    %6275 = vmatprep.subr.bf16.mxu0 0
    %6276 = vmatpush2.bf16.msra.mxu0 %v6230
    %6277 = vmatprep.subr.bf16.mxu0 0
    %6278 = vmatpush2.bf16.msra.mxu0 %v6229
    %6279 = vmatprep.subr.bf16.mxu0 0
    %6280 = vmatpush2.bf16.msra.mxu0 %v6228
    %6281 = vmatprep.subr.bf16.mxu0 0
    %6282 = vmatpush2.bf16.msra.mxu0 %v6227
    %6283 = vmatprep.mubr.bf16.mxu0 %v6115
    %6284 = vmatmul.mubr.bf16.gmra.mxu0 %v6114
    %v6285 = vpop.f32.mrf.mxu0
    %v6286 = vadd.f32 %v6153, %v6285
    %v6287 = vpop.f32.mrf.mxu0
    %v6288 = vpop.f32.mrf.mxu0
    %v6289 = vpop.f32.mrf.mxu0
    %6290 = vdwg.mxu0
    %vm6291 = vcmask 58368
    %v6292 = vsel %vm6291, %v6286, -inf
    %6293 = vmax.xlane.f32.xlu0 %v6292
    %v6294 = vpop.xlane.xlu0 %6293
    %v6295 = vsub.f32 %v6286, %v6294
    %v6296 = vmul.f32 %v6295, 1.442695
    %v6297 = vpow.pop %v6296
    %v6298 = vsel %vm6291, %v6297, 0.0
    %6299 = vadd.xlane.f32.xlu0 %v6298
    %v6300 = vpop.xlane.xlu0 %6299
    %v6301 = vrcp.pop %v6300
    %v6302 = vmul.f32 %v6297, %v6301
    %6303 = vst.msk [vmem:[#allocation19] sm:$0x3] %vm6291, %v6302
    // Predicated region
    $region90: #{inverse_model_forward.1} parent=1 // pred_check
      _
    $region91: #{inverse_model_forward.1} parent=1 // pred_check_branch
      %6305 = sbr.rel (0) target = $region93
    $region92: #{inverse_model_forward.1} parent=1 // pred_region
      %s6307 = ssub.s32 32, 32
      %6308 = vsyncadd [#allocation4], %s6307
      %s6310 = sshll.u32 [#allocation19], 4
      %s6311 = int_to_ptr.vmem [resolvable:$true] %s6310
      %6313 = dma.vmem_to_hbm [thread:$0]  %s6311, 32, %s12, [#allocation4]
    $region93: #{inverse_model_forward.1} parent=1 // pred_fallthru
      _
    // Predicated region
    $region94: #{inverse_model_forward.1} parent=1 // pred_check
      _
    $region95: #{inverse_model_forward.1} parent=1 // pred_check_branch
      %6315 = sbr.rel (0) target = $region97
    $region96: #{inverse_model_forward.1} parent=1 // pred_region
      %6316 = dma.done [#allocation4], 32
    $region97: #{inverse_model_forward.1} parent=1 // pred_fallthru
      _
    %6317 = vsyncpa [#allocation3], 1
    %6318 = vsyncpa [#allocation6], 1
    %6319 = vsyncpa [#allocation9], 1
    %6320 = vsyncpa [#allocation12], 1
    %6321 = vsyncpa [#allocation15], 1
    %6322 = vsyncpa [#allocation18], 1
    %6323 = vsyncpa [#allocation4], 1

</llo_original>
